<compile_context>
chip_gen: v6e
topology: v6e:2x2x1
jax: 0.10.0
libtpu: 0.0.40
codegen_flags: <defaults>
</compile_context>

<pallas_src>
import functools

import jax
import jax.numpy as jnp
from jax.experimental import pallas as pl

# ---- small config, consistent with the torch module's __init__ ----
BATCH = 4              # config['batch_size']
INPUT_LEN = 8          # config['input_len']          == attn_length == n_step_encoder
N_HIDDEN_DEC = 32      # config['n_hidden_decoder']   == attn_size == attention_vec_size
N_INPUT_DEC = 4        # config['n_input_decoder']
N_EXTERNAL = 3         # len(config['external_features'])
OUTPUT_SIZE = 16       # output_size
N_STEPS_DEC = 5        # len(decoder_inputs) == len(external_inputs)
EXTERNAL_FLAG = True


def _select_tanh_dtype():
    """bf16 tanh path on v6e/v7x (bf16 EUP/VPU), f32 on v5e / unknown chips."""
    try:
        kind = jax.devices()[0].device_kind.lower()
    except Exception:
        return jnp.float32
    if "v6" in kind or "v7" in kind:
        return jnp.bfloat16
    return jnp.float32


TANH_DTYPE = _select_tanh_dtype()

# Tolerance vs. the pure-f32 reference:
#  * f32 tanh path: 1e-2 covers MXU bf16-input default precision on the
#    in-kernel contractions (notably the a . hidden_T context dot, which the
#    reference computes in full f32) plus the approximate softmax reciprocal.
#  * bf16 tanh path (v6e/v7x): 5e-2 additionally covers bf16 rounding of the
#    1024-term tanh stream that feeds the softmax logits.
_TOL = 1e-2 if TANH_DTYPE == jnp.float32 else 5e-2


def _fused_kernel(xcat_ref, hidT_ref,
                  wcat_ref, bcat_ref,            # fused linear_concat
                  wcell_ref, bcell_ref,          # tanh RNN "cell"
                  wconv_rep_ref, bconv_rep_ref,  # 1x1 conv, column-repeated
                  wattn_rep_ref, battn_rep_ref,  # linear_attention, column-tiled
                  v_rep_ref,                     # v, column-tiled
                  wout_cell_ref, wout_attn_ref, bout_ref,   # linear_output halves
                  out_ref, *, tanh_dtype):
    BT = xcat_ref.shape[0]
    B, L, A = hidT_ref.shape
    T = BT // B
    K = wconv_rep_ref.shape[1]                  # = A*A, lane-dense (o, j) pair axis
    OUT = bout_ref.shape[1]
    lanes = out_ref.shape[1]
    bf16 = jnp.bfloat16

    hidT = hidT_ref[...]                                                  # [B, L, A] bf16

    # loop-invariant 1x1 conv (w_conv), column-repeated, on the MXU:
    #   hf_rep[b, l, o*A + j] = (hidden_T @ w_conv + b_conv)[b, l, o]
    hf_rep = (jnp.dot(hidT.reshape(B * L, A), wconv_rep_ref[...],
                      preferred_element_type=jnp.float32)
              + bconv_rep_ref[...]).reshape(B, L, K)                      # [B, L, K] f32

    # x = linear_concat(cat([inp, ext, attn0], dim=1))   (pre-concatenated weight)
    x = (jnp.dot(xcat_ref[...], wcat_ref[...],
                 preferred_element_type=jnp.float32) + bcat_ref[...])     # [B*T, n_in]

    # cell(x): tanh RNN cell, zero initial hidden -> (cell_output, state) = (h, h)
    state = jnp.tanh(jnp.dot(x.astype(bf16), wcell_ref[...],
                             preferred_element_type=jnp.float32)
                     + bcell_ref[...])                                    # [B*T, A] f32
    cell_output = state

    # y column-tiled over the conv-channel axis: y_rep[r, o*A + j] = y[r, j]
    y_rep = (jnp.dot(state.astype(bf16), wattn_rep_ref[...],
                     preferred_element_type=jnp.float32)
             + battn_rep_ref[...])                                        # [B*T, K]

    # s[b,t,l] = sum_{o,j} v[j] * tanh(hf[b,l,o] + y[b,t,j]); (o,j) flat on lanes.
    arg = (hf_rep[:, None, :, :].astype(tanh_dtype)
           + y_rep.reshape(B, T, 1, K).astype(tanh_dtype))                # [B,T,L,K]
    tan = jnp.tanh(arg)                                                   # EUP hot loop
    # 1024-term reduction kept in f32 on the VPU/XLU (accuracy of softmax logits).
    s = jnp.sum(tan.astype(jnp.float32) * v_rep_ref[...], axis=-1)        # [B,T,L] f32

    # a = softmax(s, over L); reciprocal on the EUP slot (approx, ~2^-12 rel).
    m = jnp.max(s, axis=-1, keepdims=True)
    e = jnp.exp(s - m)
    a = e * pl.reciprocal(jnp.sum(e, axis=-1, keepdims=True), approx=True)

    # d[b,t,:] = sum_l a[b,t,l] * hidden_T[b,l,:]   (batched MXU contraction)
    d = jnp.einsum('btl,bla->bta', a.astype(bf16), hidT,
                   preferred_element_type=jnp.float32)                    # [B,T,A] f32

    # output = linear_output(cat([cell_output, d], dim=1)) as two fused dots.
    out = (jnp.dot(cell_output.astype(bf16), wout_cell_ref[...],
                   preferred_element_type=jnp.float32)
           + jnp.dot(d.reshape(BT, A).astype(bf16), wout_attn_ref[...],
                     preferred_element_type=jnp.float32)
           + bout_ref[...])                                               # [B*T, OUT]

    # one lane-dense output slab: [:, :OUT] = outputs, [:, OUT:OUT+A] = per-row state
    pieces = [out, state]
    pad = lanes - OUT - A
    if pad:
        pieces.append(jnp.zeros((BT, pad), jnp.float32))
    out_ref[...] = jnp.concatenate(pieces, axis=1)


def prepare_params(params):
    """One-time parameter preprocessing, hoisted out of the per-call path.

    All weight concats / tiles / repeats and bf16 casts happen exactly once;
    the per-call wrapper just forwards these arrays to the kernel.
    """
    A = params["v"].shape[1]
    bf16 = jnp.bfloat16
    return {
        # fused linear_concat weight for cat([inp, ext, attn0], dim=1)
        "w_concat": jnp.concatenate([params["w_concat_inp"],
                                     params["w_concat_ext"],
                                     params["w_concat_attn"]], axis=0).astype(bf16),
        "b_concat": params["b_concat"],
        "w_cell": params["w_cell"].astype(bf16),
        "b_cell": params["b_cell"],
        # column-repeated 1x1-conv weight: w_conv_rep[c, o*A + j] = w_conv[c, o]
        "w_conv_rep": jnp.repeat(params["w_conv"], A, axis=1).astype(bf16),
        "b_conv_rep": jnp.repeat(params["b_conv"], A, axis=1),
        # column-tiled linear_attention / v: [.., o*A + j] = [.., j]
        "w_attn_rep": jnp.tile(params["w_attn"], (1, A)).astype(bf16),
        "b_attn_rep": jnp.tile(params["b_attn"], (1, A)),
        "v_rep": jnp.tile(params["v"], (1, A)),
        "w_out_cell": params["w_out_cell"].astype(bf16),
        "w_out_attn": params["w_out_attn"].astype(bf16),
        "b_out": params["b_out"],
    }


@jax.jit
def temporal_attention_forward(decoder_inputs, external_inputs, attn_rand,
                               attention_states, prepped):
    T, B, _ = decoder_inputs.shape
    L = attention_states.shape[1]
    A = prepped["w_cell"].shape[1]
    OUT = prepped["b_out"].shape[1]
    BT = B * T
    slab_lanes = max(128, ((OUT + A + 127) // 128) * 128)

    # torch's .view(-1, attn_size, attn_length, 1) is a raw row-major reshape;
    # transpose so the channel axis is lane-contiguous for the in-kernel conv.
    hidden = attention_states.reshape(B, A, L)
    hidden_T = jnp.transpose(hidden, (0, 2, 1)).astype(jnp.bfloat16)      # [B, L, A]

    # fold the independent decoder steps onto rows, batch-major: row = b*T + t
    xcat = jnp.transpose(
        jnp.concatenate([decoder_inputs, external_inputs, attn_rand], axis=2),
        (1, 0, 2)).reshape(BT, -1).astype(jnp.bfloat16)                   # [B*T, F]

    kernel = functools.partial(_fused_kernel, tanh_dtype=TANH_DTYPE)
    slab = pl.pallas_call(
        kernel,
        out_shape=jax.ShapeDtypeStruct((BT, slab_lanes), jnp.float32),
    )(xcat, hidden_T,
      prepped["w_concat"], prepped["b_concat"],
      prepped["w_cell"], prepped["b_cell"],
      prepped["w_conv_rep"], prepped["b_conv_rep"],
      prepped["w_attn_rep"], prepped["b_attn_rep"],
      prepped["v_rep"],
      prepped["w_out_cell"], prepped["w_out_attn"], prepped["b_out"])

    outputs = jnp.transpose(slab[:, :OUT].reshape(B, T, OUT), (1, 0, 2))  # [T, B, OUT]
    final_state = slab[T - 1::T, OUT:OUT + A]                             # last step, [B, A]
    return outputs, final_state


def reference_forward(decoder_inputs, external_inputs, attn_rand,
                      attention_states, params):
    """Pure-JAX reference mirroring the PyTorch semantics exactly (f32)."""
    T, B, _ = decoder_inputs.shape
    A = params["v"].shape[1]
    L = attention_states.shape[1]
    hidden = attention_states.reshape(B, A, L)     # torch .view(-1, A, L, 1)
    v = params["v"][0]
    outputs, state = [], None
    for t in range(T):
        inp, ext, attn0 = decoder_inputs[t], external_inputs[t], attn_rand[t]
        x = (inp @ params["w_concat_inp"] + ext @ params["w_concat_ext"]
             + attn0 @ params["w_concat_attn"] + params["b_concat"][0])
        state = jnp.tanh(x @ params["w_cell"] + params["b_cell"][0])
        cell_output = state
        hf = (jnp.einsum("bcl,cv->bvl", hidden, params["w_conv"])
              + params["b_conv"][0][None, :, None])                 # [B, V, L]
        y = state @ params["w_attn"] + params["b_attn"][0]          # [B, V]
        s = jnp.sum(v * jnp.tanh(hf[:, :, :, None] + y[:, None, None, :]),
                    axis=(1, 3))                                     # [B, L]
        a = jax.nn.softmax(s, axis=1)
        d = jnp.sum(a[:, None, :] * hidden, axis=2)                  # [B, A]
        out = (cell_output @ params["w_out_cell"] + d @ params["w_out_attn"]
               + params["b_out"][0])
        outputs.append(out)
    return jnp.stack(outputs, axis=0), state


def _bf16_round(x):
    # round through bf16 so MXU matmuls are numerically near-identical in the
    # kernel and the pure-JAX reference regardless of matmul precision pass count
    return x.astype(jnp.bfloat16).astype(jnp.float32)


def init_params(key):
    A = N_HIDDEN_DEC
    ks = jax.random.split(key, 14)

    def nrm(k, shape, scale=0.1):
        return _bf16_round(scale * jax.random.normal(k, shape, jnp.float32))

    return {
        "w_concat_inp":  nrm(ks[0], (N_INPUT_DEC, N_INPUT_DEC)),
        "w_concat_ext":  nrm(ks[1], (N_EXTERNAL, N_INPUT_DEC)),
        "w_concat_attn": nrm(ks[2], (A, N_INPUT_DEC)),
        "b_concat":      nrm(ks[3], (1, N_INPUT_DEC)),
        "w_cell":        nrm(ks[4], (N_INPUT_DEC, A)),
        "b_cell":        nrm(ks[5], (1, A)),
        "w_conv":        nrm(ks[6], (A, A)),       # Conv2d(attn_size, vec_size, 1x1) as [in_c, out_c]
        "b_conv":        nrm(ks[7], (1, A)),
        "w_attn":        nrm(ks[8], (A, A)),
        "b_attn":        nrm(ks[9], (1, A)),
        "v":             nrm(ks[10], (1, A), scale=1.0),   # init.normal_(self.v)
        "w_out_cell":    nrm(ks[11], (A, OUTPUT_SIZE)),
        "w_out_attn":    nrm(ks[12], (A, OUTPUT_SIZE)),
        "b_out":         nrm(ks[13], (1, OUTPUT_SIZE)),
    }


if __name__ == "__main__":
    key = jax.random.PRNGKey(0)
    kp, kd, ke, ka, kst = jax.random.split(key, 5)

    params = init_params(kp)
    prepped = prepare_params(params)        # one-time, outside the per-call path

    decoder_inputs = _bf16_round(
        jax.random.normal(kd, (N_STEPS_DEC, BATCH, N_INPUT_DEC), jnp.float32))
    external_inputs = _bf16_round(
        jax.random.normal(ke, (N_STEPS_DEC, BATCH, N_EXTERNAL), jnp.float32))
    attention_states = _bf16_round(
        jax.random.normal(kst, (BATCH, INPUT_LEN, N_HIDDEN_DEC), jnp.float32))
    # per-step xavier_uniform_ "attn" parameter of the torch forward
    bound = (6.0 / (BATCH + N_HIDDEN_DEC)) ** 0.5
    attn_rand = _bf16_round(
        jax.random.uniform(ka, (N_STEPS_DEC, BATCH, N_HIDDEN_DEC), jnp.float32,
                           -bound, bound))

    outputs, final_state = temporal_attention_forward(
        decoder_inputs, external_inputs, attn_rand, attention_states, prepped)
    outputs = jax.block_until_ready(outputs)
    final_state = jax.block_until_ready(final_state)

    ref_outputs, ref_state = reference_forward(
        decoder_inputs, external_inputs, attn_rand, attention_states, params)

    assert outputs.shape == (N_STEPS_DEC, BATCH, OUTPUT_SIZE)
    assert final_state.shape == (BATCH, N_HIDDEN_DEC)
    assert jnp.allclose(outputs, ref_outputs, atol=_TOL, rtol=_TOL), \
        float(jnp.max(jnp.abs(outputs - ref_outputs)))
    assert jnp.allclose(final_state, ref_state, atol=_TOL, rtol=_TOL), \
        float(jnp.max(jnp.abs(final_state - ref_state)))

    print("KERNEL_OK")
</pallas_src>

<mosaic_0001>
module attributes {stable_mosaic.version = 11 : i64} {
  func.func @_fused_kernel(%arg0: memref<20x39xbf16, #tpu.memory_space<vmem>>, %arg1: memref<4x8x32xbf16, #tpu.memory_space<vmem>>, %arg2: memref<39x4xbf16, #tpu.memory_space<vmem>>, %arg3: memref<1x4xf32, #tpu.memory_space<vmem>>, %arg4: memref<4x32xbf16, #tpu.memory_space<vmem>>, %arg5: memref<1x32xf32, #tpu.memory_space<vmem>>, %arg6: memref<32x1024xbf16, #tpu.memory_space<vmem>>, %arg7: memref<1x1024xf32, #tpu.memory_space<vmem>>, %arg8: memref<32x1024xbf16, #tpu.memory_space<vmem>>, %arg9: memref<1x1024xf32, #tpu.memory_space<vmem>>, %arg10: memref<1x1024xf32, #tpu.memory_space<vmem>>, %arg11: memref<32x16xbf16, #tpu.memory_space<vmem>>, %arg12: memref<32x16xbf16, #tpu.memory_space<vmem>>, %arg13: memref<1x16xf32, #tpu.memory_space<vmem>>, %arg14: memref<20x128xf32, #tpu.memory_space<vmem>>) attributes {dimension_semantics = [], scalar_prefetch = 0 : i64, scratch_operands = 0 : i64, tpu.core_type = #tpu.core_type<tc>} {
    %c0 = arith.constant 0 : index
    %c0_0 = arith.constant 0 : index
    %c0_1 = arith.constant 0 : index
    %0 = vector.load %arg1[%c0, %c0_0, %c0_1] : memref<4x8x32xbf16, #tpu.memory_space<vmem>>, vector<4x8x32xbf16>
    %1 = vector.shape_cast %0 : vector<4x8x32xbf16> to vector<32x32xbf16>
    %c0_2 = arith.constant 0 : index
    %c0_3 = arith.constant 0 : index
    %2 = vector.load %arg6[%c0_2, %c0_3] : memref<32x1024xbf16, #tpu.memory_space<vmem>>, vector<32x1024xbf16>
    %cst = arith.constant dense<0.000000e+00> : vector<32x1024xf32>
    %3 = tpu.matmul %1, %2, %cst {dimension_numbers = #tpu.dot_dimension_numbers<[1], [0], [0], [1], [0, 0, 1, 1], [], []>} : vector<32x32xbf16>, vector<32x1024xbf16>, vector<32x1024xf32> -> vector<32x1024xf32>
    %c0_4 = arith.constant 0 : index
    %c0_5 = arith.constant 0 : index
    %4 = vector.load %arg7[%c0_4, %c0_5] : memref<1x1024xf32, #tpu.memory_space<vmem>>, vector<1x1024xf32>
    %5 = vector.broadcast %4 : vector<1x1024xf32> to vector<32x1024xf32>
    %6 = arith.addf %3, %5 : vector<32x1024xf32>
    %7 = vector.shape_cast %6 : vector<32x1024xf32> to vector<4x8x1024xf32>
    %c0_6 = arith.constant 0 : index
    %c0_7 = arith.constant 0 : index
    %8 = vector.load %arg0[%c0_6, %c0_7] : memref<20x39xbf16, #tpu.memory_space<vmem>>, vector<20x39xbf16>
    %c0_8 = arith.constant 0 : index
    %c0_9 = arith.constant 0 : index
    %9 = vector.load %arg2[%c0_8, %c0_9] : memref<39x4xbf16, #tpu.memory_space<vmem>>, vector<39x4xbf16>
    %cst_10 = arith.constant dense<0.000000e+00> : vector<20x4xf32>
    %10 = tpu.matmul %8, %9, %cst_10 {dimension_numbers = #tpu.dot_dimension_numbers<[1], [0], [0], [1], [0, 0, 1, 1], [], []>} : vector<20x39xbf16>, vector<39x4xbf16>, vector<20x4xf32> -> vector<20x4xf32>
    %c0_11 = arith.constant 0 : index
    %c0_12 = arith.constant 0 : index
    %11 = vector.load %arg3[%c0_11, %c0_12] : memref<1x4xf32, #tpu.memory_space<vmem>>, vector<1x4xf32>
    %12 = vector.broadcast %11 : vector<1x4xf32> to vector<20x4xf32>
    %13 = arith.addf %10, %12 : vector<20x4xf32>
    %14 = arith.truncf %13 : vector<20x4xf32> to vector<20x4xbf16>
    %c0_13 = arith.constant 0 : index
    %c0_14 = arith.constant 0 : index
    %15 = vector.load %arg4[%c0_13, %c0_14] : memref<4x32xbf16, #tpu.memory_space<vmem>>, vector<4x32xbf16>
    %cst_15 = arith.constant dense<0.000000e+00> : vector<20x32xf32>
    %16 = tpu.matmul %14, %15, %cst_15 {dimension_numbers = #tpu.dot_dimension_numbers<[1], [0], [0], [1], [0, 0, 1, 1], [], []>} : vector<20x4xbf16>, vector<4x32xbf16>, vector<20x32xf32> -> vector<20x32xf32>
    %c0_16 = arith.constant 0 : index
    %c0_17 = arith.constant 0 : index
    %17 = vector.load %arg5[%c0_16, %c0_17] : memref<1x32xf32, #tpu.memory_space<vmem>>, vector<1x32xf32>
    %18 = vector.broadcast %17 : vector<1x32xf32> to vector<20x32xf32>
    %19 = arith.addf %16, %18 : vector<20x32xf32>
    %20 = math.tanh %19 : vector<20x32xf32>
    %21 = arith.truncf %20 : vector<20x32xf32> to vector<20x32xbf16>
    %c0_18 = arith.constant 0 : index
    %c0_19 = arith.constant 0 : index
    %22 = vector.load %arg8[%c0_18, %c0_19] : memref<32x1024xbf16, #tpu.memory_space<vmem>>, vector<32x1024xbf16>
    %cst_20 = arith.constant dense<0.000000e+00> : vector<20x1024xf32>
    %23 = tpu.matmul %21, %22, %cst_20 {dimension_numbers = #tpu.dot_dimension_numbers<[1], [0], [0], [1], [0, 0, 1, 1], [], []>} : vector<20x32xbf16>, vector<32x1024xbf16>, vector<20x1024xf32> -> vector<20x1024xf32>
    %c0_21 = arith.constant 0 : index
    %c0_22 = arith.constant 0 : index
    %24 = vector.load %arg9[%c0_21, %c0_22] : memref<1x1024xf32, #tpu.memory_space<vmem>>, vector<1x1024xf32>
    %25 = vector.broadcast %24 : vector<1x1024xf32> to vector<20x1024xf32>
    %26 = arith.addf %23, %25 : vector<20x1024xf32>
    %27 = vector.shape_cast %7 : vector<4x8x1024xf32> to vector<4x1x8x1024xf32>
    %28 = vector.shape_cast %26 : vector<20x1024xf32> to vector<4x5x1x1024xf32>
    %29 = vector.broadcast %27 : vector<4x1x8x1024xf32> to vector<4x5x8x1024xf32>
    %30 = vector.broadcast %28 : vector<4x5x1x1024xf32> to vector<4x5x8x1024xf32>
    %31 = arith.addf %29, %30 : vector<4x5x8x1024xf32>
    %32 = math.tanh %31 : vector<4x5x8x1024xf32>
    %c0_23 = arith.constant 0 : index
    %c0_24 = arith.constant 0 : index
    %33 = vector.load %arg10[%c0_23, %c0_24] : memref<1x1024xf32, #tpu.memory_space<vmem>>, vector<1x1024xf32>
    %34 = vector.shape_cast %33 : vector<1x1024xf32> to vector<1x1x1x1024xf32>
    %35 = vector.broadcast %34 : vector<1x1x1x1024xf32> to vector<4x5x8x1024xf32>
    %36 = arith.mulf %32, %35 : vector<4x5x8x1024xf32>
    %cst_25 = arith.constant dense<0.000000e+00> : vector<4x5x8xf32>
    %37 = vector.multi_reduction <add>, %36, %cst_25 [3] : vector<4x5x8x1024xf32> to vector<4x5x8xf32>
    %cst_26 = arith.constant dense<0xFF800000> : vector<4x5xf32>
    %38 = vector.multi_reduction <maximumf>, %37, %cst_26 [2] : vector<4x5x8xf32> to vector<4x5xf32>
    %39 = vector.shape_cast %38 : vector<4x5xf32> to vector<4x5x1xf32>
    %40 = vector.broadcast %39 : vector<4x5x1xf32> to vector<4x5x8xf32>
    %41 = arith.subf %37, %40 : vector<4x5x8xf32>
    %42 = math.exp %41 : vector<4x5x8xf32>
    %cst_27 = arith.constant dense<0.000000e+00> : vector<4x5xf32>
    %43 = vector.multi_reduction <add>, %42, %cst_27 [2] : vector<4x5x8xf32> to vector<4x5xf32>
    %44 = vector.shape_cast %43 : vector<4x5xf32> to vector<4x5x1xf32>
    %45 = tpu.reciprocal %44 {approx = true} : vector<4x5x1xf32> -> vector<4x5x1xf32>
    %46 = vector.broadcast %45 : vector<4x5x1xf32> to vector<4x5x8xf32>
    %47 = arith.mulf %42, %46 : vector<4x5x8xf32>
    %48 = arith.truncf %47 : vector<4x5x8xf32> to vector<4x5x8xbf16>
    "tpu.trace_start"() <{level = 10 : i32, message = "btl,bla->bta"}> : () -> ()
    %cst_28 = arith.constant dense<0.000000e+00> : vector<4x5x32xf32>
    %49 = tpu.matmul %48, %0, %cst_28 {dimension_numbers = #tpu.dot_dimension_numbers<[2], [1], [1], [2], [0, 0, 0, 1, 1, 2], [0], [0]>} : vector<4x5x8xbf16>, vector<4x8x32xbf16>, vector<4x5x32xf32> -> vector<4x5x32xf32>
    "tpu.trace_stop"() : () -> ()
    %50 = arith.truncf %20 : vector<20x32xf32> to vector<20x32xbf16>
    %c0_29 = arith.constant 0 : index
    %c0_30 = arith.constant 0 : index
    %51 = vector.load %arg11[%c0_29, %c0_30] : memref<32x16xbf16, #tpu.memory_space<vmem>>, vector<32x16xbf16>
    %cst_31 = arith.constant dense<0.000000e+00> : vector<20x16xf32>
    %52 = tpu.matmul %50, %51, %cst_31 {dimension_numbers = #tpu.dot_dimension_numbers<[1], [0], [0], [1], [0, 0, 1, 1], [], []>} : vector<20x32xbf16>, vector<32x16xbf16>, vector<20x16xf32> -> vector<20x16xf32>
    %53 = vector.shape_cast %49 : vector<4x5x32xf32> to vector<20x32xf32>
    %54 = arith.truncf %53 : vector<20x32xf32> to vector<20x32xbf16>
    %c0_32 = arith.constant 0 : index
    %c0_33 = arith.constant 0 : index
    %55 = vector.load %arg12[%c0_32, %c0_33] : memref<32x16xbf16, #tpu.memory_space<vmem>>, vector<32x16xbf16>
    %cst_34 = arith.constant dense<0.000000e+00> : vector<20x16xf32>
    %56 = tpu.matmul %54, %55, %cst_34 {dimension_numbers = #tpu.dot_dimension_numbers<[1], [0], [0], [1], [0, 0, 1, 1], [], []>} : vector<20x32xbf16>, vector<32x16xbf16>, vector<20x16xf32> -> vector<20x16xf32>
    %57 = arith.addf %52, %56 : vector<20x16xf32>
    %c0_35 = arith.constant 0 : index
    %c0_36 = arith.constant 0 : index
    %58 = vector.load %arg13[%c0_35, %c0_36] : memref<1x16xf32, #tpu.memory_space<vmem>>, vector<1x16xf32>
    %59 = vector.broadcast %58 : vector<1x16xf32> to vector<20x16xf32>
    %60 = arith.addf %57, %59 : vector<20x16xf32>
    %cst_37 = arith.constant 0.000000e+00 : f32
    %61 = vector.broadcast %cst_37 : f32 to vector<20x80xf32>
    %62 = tpu.concatenate %60, %20, %61 in 1 : vector<20x16xf32>, vector<20x32xf32>, vector<20x80xf32> -> vector<20x128xf32>
    %c0_38 = arith.constant 0 : index
    %c0_39 = arith.constant 0 : index
    %63 = vector.load %arg14[%c0_38, %c0_39] : memref<20x128xf32, #tpu.memory_space<vmem>>, vector<20x128xf32>
    tpu.vector_store %arg14[%c0_38, %c0_39], %62 {strides = array<i32>} : memref<20x128xf32, #tpu.memory_space<vmem>>, vector<20x128xf32>,
    return
  }
}

</mosaic_0001>

<llo_original>
// kernel: temporal_attention_forward.1
$region0: #{temporal_attention_forward.1}
  #allocation0 [shape = 'u32[]', space=smem, size = 0x4, offset = 0x4, fixed_abs, tag = 'smem constant byte address 0x4 - core index']
  #allocation1 [shape = 'u32[144,128]{1,0:T(1,128)}', space=vmem, size = 0x12000, scoped, tag = 'internal scratch']
  %s0 = inlined_call_operand.vmem [shape: bf16[20,39], index: 0, kind: input, shape index: {}]
  %s1 = inlined_call_operand.vmem [shape: bf16[4,8,32], index: 1, kind: input, shape index: {}]
  %s2 = inlined_call_operand.vmem [shape: bf16[39,4], index: 2, kind: input, shape index: {}]
  %s3 = inlined_call_operand.vmem [shape: f32[1,4], index: 3, kind: input, shape index: {}]
  %s4 = inlined_call_operand.vmem [shape: bf16[4,32], index: 4, kind: input, shape index: {}]
  %s5 = inlined_call_operand.vmem [shape: f32[1,32], index: 5, kind: input, shape index: {}]
  %s6 = inlined_call_operand.vmem [shape: bf16[32,1024], index: 6, kind: input, shape index: {}]
  %s7 = inlined_call_operand.vmem [shape: f32[1,1024], index: 7, kind: input, shape index: {}]
  %s8 = inlined_call_operand.vmem [shape: bf16[32,1024], index: 8, kind: input, shape index: {}]
  %s9 = inlined_call_operand.vmem [shape: f32[1,1024], index: 9, kind: input, shape index: {}]
  %s10 = inlined_call_operand.vmem [shape: f32[1,1024], index: 10, kind: input, shape index: {}]
  %s11 = inlined_call_operand.vmem [shape: bf16[32,16], index: 11, kind: input, shape index: {}]
  %s12 = inlined_call_operand.vmem [shape: bf16[32,16], index: 12, kind: input, shape index: {}]
  %s13 = inlined_call_operand.vmem [shape: f32[1,16], index: 13, kind: input, shape index: {}]
  %s14 = inlined_call_operand.vmem [shape: f32[20,128], index: 14, kind: output, shape index: {}]
  %s15 = sld [smem:[#allocation0]]
  $region66: #{temporal_attention_forward.1} parent=0
    _
  %s17 = ssub.s32 1, %s15
  %s18 = scalar_select 0, %s17, %s15
  // Predicated region
  $region2: #{temporal_attention_forward.1} parent=0 // pred_check
    _
  $region3: #{temporal_attention_forward.1} parent=0 // pred_check_branch
    %20 = sbr.rel (0) target = $region5
  $region4: #{temporal_attention_forward.1} parent=0 // pred_region
    _
  $region5: #{temporal_attention_forward.1} parent=0 // pred_fallthru
    _
  // Predicated region
  $region6: #{temporal_attention_forward.1} parent=0 // pred_check
    _
  $region7: #{temporal_attention_forward.1} parent=0 // pred_check_branch
    %22 = sbr.rel (0) target = $region9
  $region8: #{temporal_attention_forward.1} parent=0 // pred_region
    _
  $region9: #{temporal_attention_forward.1} parent=0 // pred_fallthru
    _
  // Predicated region
  $region10: #{temporal_attention_forward.1} parent=0 // pred_check
    _
  $region11: #{temporal_attention_forward.1} parent=0 // pred_check_branch
    %24 = sbr.rel (0) target = $region13
  $region12: #{temporal_attention_forward.1} parent=0 // pred_region
    _
  $region13: #{temporal_attention_forward.1} parent=0 // pred_fallthru
    _
  // Predicated region
  $region14: #{temporal_attention_forward.1} parent=0 // pred_check
    _
  $region15: #{temporal_attention_forward.1} parent=0 // pred_check_branch
    %26 = sbr.rel (0) target = $region17
  $region16: #{temporal_attention_forward.1} parent=0 // pred_region
    _
  $region17: #{temporal_attention_forward.1} parent=0 // pred_fallthru
    _
  // Predicated region
  $region18: #{temporal_attention_forward.1} parent=0 // pred_check
    _
  $region19: #{temporal_attention_forward.1} parent=0 // pred_check_branch
    %28 = sbr.rel (0) target = $region21
  $region20: #{temporal_attention_forward.1} parent=0 // pred_region
    _
  $region21: #{temporal_attention_forward.1} parent=0 // pred_fallthru
    _
  // Predicated region
  $region22: #{temporal_attention_forward.1} parent=0 // pred_check
    _
  $region23: #{temporal_attention_forward.1} parent=0 // pred_check_branch
    %30 = sbr.rel (0) target = $region25
  $region24: #{temporal_attention_forward.1} parent=0 // pred_region
    _
  $region25: #{temporal_attention_forward.1} parent=0 // pred_fallthru
    _
  // Predicated region
  $region26: #{temporal_attention_forward.1} parent=0 // pred_check
    _
  $region27: #{temporal_attention_forward.1} parent=0 // pred_check_branch
    %32 = sbr.rel (0) target = $region29
  $region28: #{temporal_attention_forward.1} parent=0 // pred_region
    _
  $region29: #{temporal_attention_forward.1} parent=0 // pred_fallthru
    _
  // Predicated region
  $region30: #{temporal_attention_forward.1} parent=0 // pred_check
    _
  $region31: #{temporal_attention_forward.1} parent=0 // pred_check_branch
    %34 = sbr.rel (0) target = $region33
  $region32: #{temporal_attention_forward.1} parent=0 // pred_region
    _
  $region33: #{temporal_attention_forward.1} parent=0 // pred_fallthru
    _
  // Predicated region
  $region34: #{temporal_attention_forward.1} parent=0 // pred_check
    _
  $region35: #{temporal_attention_forward.1} parent=0 // pred_check_branch
    %36 = sbr.rel (0) target = $region37
  $region36: #{temporal_attention_forward.1} parent=0 // pred_region
    _
  $region37: #{temporal_attention_forward.1} parent=0 // pred_fallthru
    _
  // Predicated region
  $region38: #{temporal_attention_forward.1} parent=0 // pred_check
    _
  $region39: #{temporal_attention_forward.1} parent=0 // pred_check_branch
    %38 = sbr.rel (0) target = $region41
  $region40: #{temporal_attention_forward.1} parent=0 // pred_region
    _
  $region41: #{temporal_attention_forward.1} parent=0 // pred_fallthru
    _
  // Predicated region
  $region42: #{temporal_attention_forward.1} parent=0 // pred_check
    _
  $region43: #{temporal_attention_forward.1} parent=0 // pred_check_branch
    %40 = sbr.rel (0) target = $region45
  $region44: #{temporal_attention_forward.1} parent=0 // pred_region
    _
  $region45: #{temporal_attention_forward.1} parent=0 // pred_fallthru
    _
  // Predicated region
  $region46: #{temporal_attention_forward.1} parent=0 // pred_check
    _
  $region47: #{temporal_attention_forward.1} parent=0 // pred_check_branch
    %42 = sbr.rel (0) target = $region49
  $region48: #{temporal_attention_forward.1} parent=0 // pred_region
    _
  $region49: #{temporal_attention_forward.1} parent=0 // pred_fallthru
    _
  // Predicated region
  $region50: #{temporal_attention_forward.1} parent=0 // pred_check
    _
  $region51: #{temporal_attention_forward.1} parent=0 // pred_check_branch
    %44 = sbr.rel (0) target = $region53
  $region52: #{temporal_attention_forward.1} parent=0 // pred_region
    _
  $region53: #{temporal_attention_forward.1} parent=0 // pred_fallthru
    _
  // Predicated region
  $region54: #{temporal_attention_forward.1} parent=0 // pred_check
    _
  $region55: #{temporal_attention_forward.1} parent=0 // pred_check_branch
    %46 = sbr.rel (0) target = $region57
  $region56: #{temporal_attention_forward.1} parent=0 // pred_region
    _
  $region57: #{temporal_attention_forward.1} parent=0 // pred_fallthru
    _
  %v48 = vld [vmem:[%s1] sm:$0xf]
  %v49 = vld [vmem:[%s1 + $0x4] sm:$0xf]
  %v50 = vld [vmem:[%s1 + $0x8] sm:$0xf]
  %v51 = vld [vmem:[%s1 + $0xc] sm:$0xf]
  %v52 = vld [vmem:[%s6] sm:$0xff]
  %v53 = vld [vmem:[%s6 + $0x8] sm:$0xff]
  %v54 = vld [vmem:[%s6 + $0x10] sm:$0xff]
  %v55 = vld [vmem:[%s6 + $0x18] sm:$0xff]
  %v56 = vld [vmem:[%s6 + $0x20] sm:$0xff]
  %v57 = vld [vmem:[%s6 + $0x28] sm:$0xff]
  %v58 = vld [vmem:[%s6 + $0x30] sm:$0xff]
  %v59 = vld [vmem:[%s6 + $0x38] sm:$0xff]
  %v60 = vld [vmem:[%s6 + $0x40] sm:$0xff]
  %v61 = vld [vmem:[%s6 + $0x48] sm:$0xff]
  %v62 = vld [vmem:[%s6 + $0x50] sm:$0xff]
  %v63 = vld [vmem:[%s6 + $0x58] sm:$0xff]
  %v64 = vld [vmem:[%s6 + $0x60] sm:$0xff]
  %v65 = vld [vmem:[%s6 + $0x68] sm:$0xff]
  %v66 = vld [vmem:[%s6 + $0x70] sm:$0xff]
  %v67 = vld [vmem:[%s6 + $0x78] sm:$0xff]
  %v68 = vld [vmem:[%s7] sm:$0xff]
  %v70 = vlaneseq
  %v71 = vshrl.u32 %v70, 7
  %v72 = vsub.s32 0, %v71
  %v73 = vrot.slane %v68, %v72
  %v74 = vlaneseq
  %v75 = vshrl.u32 %v74, 7
  %v76 = vsub.s32 1, %v75
  %v77 = vrot.slane %v68, %v76
  %v78 = vlaneseq
  %v79 = vshrl.u32 %v78, 7
  %v80 = vsub.s32 2, %v79
  %v81 = vrot.slane %v68, %v80
  %v82 = vlaneseq
  %v83 = vshrl.u32 %v82, 7
  %v84 = vsub.s32 3, %v83
  %v85 = vrot.slane %v68, %v84
  %v86 = vlaneseq
  %v87 = vshrl.u32 %v86, 7
  %v88 = vsub.s32 4, %v87
  %v89 = vrot.slane %v68, %v88
  %v90 = vlaneseq
  %v91 = vshrl.u32 %v90, 7
  %v92 = vsub.s32 5, %v91
  %v93 = vrot.slane %v68, %v92
  %v94 = vlaneseq
  %v95 = vshrl.u32 %v94, 7
  %v96 = vsub.s32 6, %v95
  %v97 = vrot.slane %v68, %v96
  %v98 = vlaneseq
  %v99 = vshrl.u32 %v98, 7
  %v100 = vsub.s32 7, %v99
  %v101 = vrot.slane %v68, %v100
  %v114 = vunpack.c.l.b16 %v48
  %v115 = vunpack.c.l.b16 %v49
  %v116 = vunpack.c.l.b16 %v50
  %v117 = vunpack.c.l.b16 %v51
  %v118 = vpack.c.b16 %v115, %v114
  %v119 = vpack.c.b16 %v117, %v116
  %v136 = vunpack.c.l.b16 %v52
  %v137 = vunpack.c.h.b16 %v52
  %v138 = vunpack.c.l.b16 %v53
  %v139 = vunpack.c.h.b16 %v53
  %v140 = vunpack.c.l.b16 %v54
  %v141 = vunpack.c.h.b16 %v54
  %v142 = vunpack.c.l.b16 %v55
  %v143 = vunpack.c.h.b16 %v55
  %v144 = vunpack.c.l.b16 %v56
  %v145 = vunpack.c.h.b16 %v56
  %v146 = vunpack.c.l.b16 %v57
  %v147 = vunpack.c.h.b16 %v57
  %v148 = vunpack.c.l.b16 %v58
  %v149 = vunpack.c.h.b16 %v58
  %v150 = vunpack.c.l.b16 %v59
  %v151 = vunpack.c.h.b16 %v59
  %v152 = vunpack.c.l.b16 %v60
  %v153 = vunpack.c.h.b16 %v60
  %v154 = vunpack.c.l.b16 %v61
  %v155 = vunpack.c.h.b16 %v61
  %v156 = vunpack.c.l.b16 %v62
  %v157 = vunpack.c.h.b16 %v62
  %v158 = vunpack.c.l.b16 %v63
  %v159 = vunpack.c.h.b16 %v63
  %v160 = vunpack.c.l.b16 %v64
  %v161 = vunpack.c.h.b16 %v64
  %v162 = vunpack.c.l.b16 %v65
  %v163 = vunpack.c.h.b16 %v65
  %v164 = vunpack.c.l.b16 %v66
  %v165 = vunpack.c.h.b16 %v66
  %v166 = vunpack.c.l.b16 %v67
  %v167 = vunpack.c.h.b16 %v67
  %v168 = vpack.c.b16 %v144, %v136
  %v169 = vpack.c.b16 %v145, %v137
  %v170 = vpack.c.b16 %v146, %v138
  %v171 = vpack.c.b16 %v147, %v139
  %v172 = vpack.c.b16 %v148, %v140
  %v173 = vpack.c.b16 %v149, %v141
  %v174 = vpack.c.b16 %v150, %v142
  %v175 = vpack.c.b16 %v151, %v143
  %v176 = vpack.c.b16 %v160, %v152
  %v177 = vpack.c.b16 %v161, %v153
  %v178 = vpack.c.b16 %v162, %v154
  %v179 = vpack.c.b16 %v163, %v155
  %v180 = vpack.c.b16 %v164, %v156
  %v181 = vpack.c.b16 %v165, %v157
  %v182 = vpack.c.b16 %v166, %v158
  %v183 = vpack.c.b16 %v167, %v159
  %vm200 = vcmask 261120
  %v202 = vsel %vm200, %v118, 0
  %v205 = vsel %vm200, %v119, 0
  %207 = vmatprep.subr.bf16.mxu0 0
  %208 = vmatpush1.bf16.msra.mxu0 0
  %209 = vmatprep.subr.bf16.mxu0 0
  %210 = vmatpush1.bf16.msra.mxu0 0
  %211 = vmatprep.subr.bf16.mxu0 0
  %212 = vmatpush1.bf16.msra.mxu0 0
  %213 = vmatprep.subr.bf16.mxu0 0
  %214 = vmatpush1.bf16.msra.mxu0 0
  %215 = vmatprep.subr.bf16.mxu0 0
  %216 = vmatpush1.bf16.msra.mxu0 0
  %217 = vmatprep.subr.bf16.mxu0 0
  %218 = vmatpush1.bf16.msra.mxu0 0
  %219 = vmatprep.subr.bf16.mxu0 %v177
  %220 = vmatpush1.bf16.msra.mxu0 %v176
  %221 = vmatprep.subr.bf16.mxu0 %v169
  %222 = vmatpush1.bf16.msra.mxu0 %v168
  %223 = vmatprep.subr.bf16.mxu0 0
  %224 = vmatpush2.bf16.msra.mxu0 0
  %225 = vmatprep.subr.bf16.mxu0 0
  %226 = vmatpush2.bf16.msra.mxu0 0
  %227 = vmatprep.subr.bf16.mxu0 0
  %228 = vmatpush2.bf16.msra.mxu0 0
  %229 = vmatprep.subr.bf16.mxu0 0
  %230 = vmatpush2.bf16.msra.mxu0 0
  %231 = vmatprep.subr.bf16.mxu0 0
  %232 = vmatpush2.bf16.msra.mxu0 0
  %233 = vmatprep.subr.bf16.mxu0 0
  %234 = vmatpush2.bf16.msra.mxu0 0
  %235 = vmatprep.subr.bf16.mxu0 0
  %236 = vmatpush2.bf16.msra.mxu0 0
  %237 = vmatprep.subr.bf16.mxu0 0
  %238 = vmatpush2.bf16.msra.mxu0 0
  %239 = vmatprep.mubr.bf16.mxu0 0
  %240 = vmatmul.mubr.bf16.gmra.mxu0 %v202
  %v241 = vpop.f32.mrf.mxu0
  %v242 = vadd.f32 %v73, %v241
  %v243 = vpop.f32.mrf.mxu0
  %v244 = vadd.f32 %v77, %v243
  %v245 = vpop.f32.mrf.mxu0
  %v246 = vadd.f32 %v73, %v245
  %v247 = vpop.f32.mrf.mxu0
  %v248 = vadd.f32 %v77, %v247
  %249 = vmatprep.mubr.bf16.mxu0 0
  %250 = vmatmul.mubr.bf16.gmra.mxu0 %v205
  %v251 = vpop.f32.mrf.mxu0
  %v252 = vadd.f32 %v73, %v251
  %v253 = vpop.f32.mrf.mxu0
  %v254 = vadd.f32 %v77, %v253
  %v255 = vpop.f32.mrf.mxu0
  %v256 = vadd.f32 %v73, %v255
  %v257 = vpop.f32.mrf.mxu0
  %v258 = vadd.f32 %v77, %v257
  %259 = vdwg.mxu0
  %260 = vmatprep.subr.bf16.mxu0 0
  %261 = vmatpush1.bf16.msra.mxu0 0
  %262 = vmatprep.subr.bf16.mxu0 0
  %263 = vmatpush1.bf16.msra.mxu0 0
  %264 = vmatprep.subr.bf16.mxu0 0
  %265 = vmatpush1.bf16.msra.mxu0 0
  %266 = vmatprep.subr.bf16.mxu0 0
  %267 = vmatpush1.bf16.msra.mxu0 0
  %268 = vmatprep.subr.bf16.mxu0 0
  %269 = vmatpush1.bf16.msra.mxu0 0
  %270 = vmatprep.subr.bf16.mxu0 0
  %271 = vmatpush1.bf16.msra.mxu0 0
  %272 = vmatprep.subr.bf16.mxu0 %v179
  %273 = vmatpush1.bf16.msra.mxu0 %v178
  %274 = vmatprep.subr.bf16.mxu0 %v171
  %275 = vmatpush1.bf16.msra.mxu0 %v170
  %276 = vmatprep.subr.bf16.mxu0 0
  %277 = vmatpush2.bf16.msra.mxu0 0
  %278 = vmatprep.subr.bf16.mxu0 0
  %279 = vmatpush2.bf16.msra.mxu0 0
  %280 = vmatprep.subr.bf16.mxu0 0
  %281 = vmatpush2.bf16.msra.mxu0 0
  %282 = vmatprep.subr.bf16.mxu0 0
  %283 = vmatpush2.bf16.msra.mxu0 0
  %284 = vmatprep.subr.bf16.mxu0 0
  %285 = vmatpush2.bf16.msra.mxu0 0
  %286 = vmatprep.subr.bf16.mxu0 0
  %287 = vmatpush2.bf16.msra.mxu0 0
  %288 = vmatprep.subr.bf16.mxu0 0
  %289 = vmatpush2.bf16.msra.mxu0 0
  %290 = vmatprep.subr.bf16.mxu0 0
  %291 = vmatpush2.bf16.msra.mxu0 0
  %292 = vmatprep.mubr.bf16.mxu0 0
  %293 = vmatmul.mubr.bf16.gmra.mxu0 %v202
  %v294 = vpop.f32.mrf.mxu0
  %v295 = vadd.f32 %v81, %v294
  %v296 = vpop.f32.mrf.mxu0
  %v297 = vadd.f32 %v85, %v296
  %v298 = vpop.f32.mrf.mxu0
  %v299 = vadd.f32 %v81, %v298
  %v300 = vpop.f32.mrf.mxu0
  %v301 = vadd.f32 %v85, %v300
  %302 = vmatprep.mubr.bf16.mxu0 0
  %303 = vmatmul.mubr.bf16.gmra.mxu0 %v205
  %v304 = vpop.f32.mrf.mxu0
  %v305 = vadd.f32 %v81, %v304
  %v306 = vpop.f32.mrf.mxu0
  %v307 = vadd.f32 %v85, %v306
  %v308 = vpop.f32.mrf.mxu0
  %v309 = vadd.f32 %v81, %v308
  %v310 = vpop.f32.mrf.mxu0
  %v311 = vadd.f32 %v85, %v310
  %312 = vdwg.mxu0
  %313 = vmatprep.subr.bf16.mxu0 0
  %314 = vmatpush1.bf16.msra.mxu0 0
  %315 = vmatprep.subr.bf16.mxu0 0
  %316 = vmatpush1.bf16.msra.mxu0 0
  %317 = vmatprep.subr.bf16.mxu0 0
  %318 = vmatpush1.bf16.msra.mxu0 0
  %319 = vmatprep.subr.bf16.mxu0 0
  %320 = vmatpush1.bf16.msra.mxu0 0
  %321 = vmatprep.subr.bf16.mxu0 0
  %322 = vmatpush1.bf16.msra.mxu0 0
  %323 = vmatprep.subr.bf16.mxu0 0
  %324 = vmatpush1.bf16.msra.mxu0 0
  %325 = vmatprep.subr.bf16.mxu0 %v181
  %326 = vmatpush1.bf16.msra.mxu0 %v180
  %327 = vmatprep.subr.bf16.mxu0 %v173
  %328 = vmatpush1.bf16.msra.mxu0 %v172
  %329 = vmatprep.subr.bf16.mxu0 0
  %330 = vmatpush2.bf16.msra.mxu0 0
  %331 = vmatprep.subr.bf16.mxu0 0
  %332 = vmatpush2.bf16.msra.mxu0 0
  %333 = vmatprep.subr.bf16.mxu0 0
  %334 = vmatpush2.bf16.msra.mxu0 0
  %335 = vmatprep.subr.bf16.mxu0 0
  %336 = vmatpush2.bf16.msra.mxu0 0
  %337 = vmatprep.subr.bf16.mxu0 0
  %338 = vmatpush2.bf16.msra.mxu0 0
  %339 = vmatprep.subr.bf16.mxu0 0
  %340 = vmatpush2.bf16.msra.mxu0 0
  %341 = vmatprep.subr.bf16.mxu0 0
  %342 = vmatpush2.bf16.msra.mxu0 0
  %343 = vmatprep.subr.bf16.mxu0 0
  %344 = vmatpush2.bf16.msra.mxu0 0
  %345 = vmatprep.mubr.bf16.mxu0 0
  %346 = vmatmul.mubr.bf16.gmra.mxu0 %v202
  %v347 = vpop.f32.mrf.mxu0
  %v348 = vadd.f32 %v89, %v347
  %v349 = vpop.f32.mrf.mxu0
  %v350 = vadd.f32 %v93, %v349
  %v351 = vpop.f32.mrf.mxu0
  %v352 = vadd.f32 %v89, %v351
  %v353 = vpop.f32.mrf.mxu0
  %v354 = vadd.f32 %v93, %v353
  %355 = vmatprep.mubr.bf16.mxu0 0
  %356 = vmatmul.mubr.bf16.gmra.mxu0 %v205
  %v357 = vpop.f32.mrf.mxu0
  %v358 = vadd.f32 %v89, %v357
  %v359 = vpop.f32.mrf.mxu0
  %v360 = vadd.f32 %v93, %v359
  %v361 = vpop.f32.mrf.mxu0
  %v362 = vadd.f32 %v89, %v361
  %v363 = vpop.f32.mrf.mxu0
  %v364 = vadd.f32 %v93, %v363
  %365 = vdwg.mxu0
  %366 = vmatprep.subr.bf16.mxu0 0
  %367 = vmatpush1.bf16.msra.mxu0 0
  %368 = vmatprep.subr.bf16.mxu0 0
  %369 = vmatpush1.bf16.msra.mxu0 0
  %370 = vmatprep.subr.bf16.mxu0 0
  %371 = vmatpush1.bf16.msra.mxu0 0
  %372 = vmatprep.subr.bf16.mxu0 0
  %373 = vmatpush1.bf16.msra.mxu0 0
  %374 = vmatprep.subr.bf16.mxu0 0
  %375 = vmatpush1.bf16.msra.mxu0 0
  %376 = vmatprep.subr.bf16.mxu0 0
  %377 = vmatpush1.bf16.msra.mxu0 0
  %378 = vmatprep.subr.bf16.mxu0 %v183
  %379 = vmatpush1.bf16.msra.mxu0 %v182
  %380 = vmatprep.subr.bf16.mxu0 %v175
  %381 = vmatpush1.bf16.msra.mxu0 %v174
  %382 = vmatprep.subr.bf16.mxu0 0
  %383 = vmatpush2.bf16.msra.mxu0 0
  %384 = vmatprep.subr.bf16.mxu0 0
  %385 = vmatpush2.bf16.msra.mxu0 0
  %386 = vmatprep.subr.bf16.mxu0 0
  %387 = vmatpush2.bf16.msra.mxu0 0
  %388 = vmatprep.subr.bf16.mxu0 0
  %389 = vmatpush2.bf16.msra.mxu0 0
  %390 = vmatprep.subr.bf16.mxu0 0
  %391 = vmatpush2.bf16.msra.mxu0 0
  %392 = vmatprep.subr.bf16.mxu0 0
  %393 = vmatpush2.bf16.msra.mxu0 0
  %394 = vmatprep.subr.bf16.mxu0 0
  %395 = vmatpush2.bf16.msra.mxu0 0
  %396 = vmatprep.subr.bf16.mxu0 0
  %397 = vmatpush2.bf16.msra.mxu0 0
  %398 = vmatprep.mubr.bf16.mxu0 0
  %399 = vmatmul.mubr.bf16.gmra.mxu0 %v202
  %v400 = vpop.f32.mrf.mxu0
  %v401 = vadd.f32 %v97, %v400
  %v402 = vpop.f32.mrf.mxu0
  %v403 = vadd.f32 %v101, %v402
  %v404 = vpop.f32.mrf.mxu0
  %v405 = vadd.f32 %v97, %v404
  %v406 = vpop.f32.mrf.mxu0
  %v407 = vadd.f32 %v101, %v406
  %408 = vmatprep.mubr.bf16.mxu0 0
  %409 = vmatmul.mubr.bf16.gmra.mxu0 %v205
  %v410 = vpop.f32.mrf.mxu0
  %v411 = vadd.f32 %v97, %v410
  %v412 = vpop.f32.mrf.mxu0
  %v413 = vadd.f32 %v101, %v412
  %v414 = vpop.f32.mrf.mxu0
  %v415 = vadd.f32 %v97, %v414
  %v416 = vpop.f32.mrf.mxu0
  %v417 = vadd.f32 %v101, %v416
  %418 = vdwg.mxu0
  %v419 = vld [vmem:[%s0] sm:$0xf]
  %v420 = vld [vmem:[%s0 + $0x4] sm:$0xf]
  %v421 = vld [vmem:[%s0 + $0x8] sm:$0x3]
  %v422 = vld [vmem:[%s2] sm:$0xf]
  %v423 = vld [vmem:[%s2 + $0x4] sm:$0xf]
  %v424 = vld [vmem:[%s2 + $0x8] sm:$0xf]
  %v425 = vld [vmem:[%s2 + $0xc] sm:$0xf]
  %v426 = vld [vmem:[%s2 + $0x10] sm:$0xf]
  %v427 = vld [vmem:[%s3] sm:$0x1]
  %v429 = vlaneseq
  %v430 = vshrl.u32 %v429, 7
  %v431 = vsub.s32 0, %v430
  %v432 = vrot.slane %v427, %v431
  %v437 = vunpack.c.l.b16 %v419
  %v438 = vunpack.c.l.b16 %v420
  %v439 = vunpack.c.l.b16 %v421
  %v440 = vpack.c.b16 %v438, %v437
  %v441 = vpack.c.b16 %v439, %v439
  %v447 = vunpack.c.l.b16 %v422
  %v448 = vunpack.c.l.b16 %v423
  %v449 = vunpack.c.l.b16 %v424
  %v450 = vunpack.c.l.b16 %v425
  %v451 = vunpack.c.l.b16 %v426
  %v452 = vpack.c.b16 %v448, %v447
  %v453 = vpack.c.b16 %v450, %v449
  %v454 = vpack.c.b16 %v451, %v451
  %vm457 = vcmask 318464
  %v459 = vsel %vm457, %v440, 0
  %v462 = vsel %vm457, %v441, 0
  %vm464 = vcmask 1042432
  %vm465 = vcmask 1043456
  %v466 = vsel %vm464, 4294967295, 65535
  %v467 = vsel %vm465, %v466, 0
  %v469 = vand.u32 %v454, %v467
  %471 = vmatprep.subr.bf16.mxu0 0
  %472 = vmatpush1.bf16.msra.mxu0 0
  %473 = vmatprep.subr.bf16.mxu0 0
  %474 = vmatpush1.bf16.msra.mxu0 0
  %475 = vmatprep.subr.bf16.mxu0 0
  %476 = vmatpush1.bf16.msra.mxu0 0
  %477 = vmatprep.subr.bf16.mxu0 0
  %478 = vmatpush1.bf16.msra.mxu0 0
  %479 = vmatprep.subr.bf16.mxu0 0
  %480 = vmatpush1.bf16.msra.mxu0 0
  %481 = vmatprep.subr.bf16.mxu0 0
  %482 = vmatpush1.bf16.msra.mxu0 %v469
  %483 = vmatprep.subr.bf16.mxu0 0
  %484 = vmatpush1.bf16.msra.mxu0 %v453
  %485 = vmatprep.subr.bf16.mxu0 0
  %486 = vmatpush1.bf16.msra.mxu0 %v452
  %487 = vmatprep.subr.bf16.mxu0 0
  %488 = vmatpush2.bf16.msra.mxu0 0
  %489 = vmatprep.subr.bf16.mxu0 0
  %490 = vmatpush2.bf16.msra.mxu0 0
  %491 = vmatprep.subr.bf16.mxu0 0
  %492 = vmatpush2.bf16.msra.mxu0 0
  %493 = vmatprep.subr.bf16.mxu0 0
  %494 = vmatpush2.bf16.msra.mxu0 0
  %495 = vmatprep.subr.bf16.mxu0 0
  %496 = vmatpush2.bf16.msra.mxu0 0
  %497 = vmatprep.subr.bf16.mxu0 0
  %498 = vmatpush2.bf16.msra.mxu0 0
  %499 = vmatprep.subr.bf16.mxu0 0
  %500 = vmatpush2.bf16.msra.mxu0 0
  %501 = vmatprep.subr.bf16.mxu0 0
  %502 = vmatpush2.bf16.msra.mxu0 0
  %503 = vmatprep.mubr.bf16.mxu0 0
  %504 = vmatmul.mubr.bf16.gmra.mxu0 %v459
  %v505 = vpop.f32.mrf.mxu0
  %v506 = vadd.f32 %v432, %v505
  %v507 = vpop.f32.mrf.mxu0
  %v508 = vpop.f32.mrf.mxu0
  %v509 = vadd.f32 %v432, %v508
  %v510 = vpop.f32.mrf.mxu0
  %511 = vmatprep.mubr.bf16.mxu0 0
  %512 = vmatmul.mubr.bf16.gmra.mxu0 %v462
  %v513 = vpop.f32.mrf.mxu0
  %v514 = vadd.f32 %v432, %v513
  %v515 = vpop.f32.mrf.mxu0
  %v516 = vpop.f32.mrf.mxu0
  %v517 = vpop.f32.mrf.mxu0
  %518 = vdwg.mxu0
  %v519 = vpack.c.bf16 %v509, %v506
  %v520 = vpack.c.bf16 %v514, %v514
  %v521 = vld [vmem:[%s4] sm:$0x3]
  %v522 = vld [vmem:[%s5] sm:$0x1]
  %v524 = vlaneseq
  %v525 = vshrl.u32 %v524, 7
  %v526 = vsub.s32 0, %v525
  %v527 = vrot.slane %v522, %v526
  %vm529 = vcmask 31744
  %v531 = vsel %vm529, %v519, 0
  %v534 = vsel %vm529, %v520, 0
  %vm536 = vcmask 1041408
  %v538 = vsel %vm536, %v521, 0
  %540 = vmatprep.subr.bf16.mxu0 0
  %541 = vmatpush1.bf16.msra.mxu0 0
  %542 = vmatprep.subr.bf16.mxu0 0
  %543 = vmatpush1.bf16.msra.mxu0 0
  %544 = vmatprep.subr.bf16.mxu0 0
  %545 = vmatpush1.bf16.msra.mxu0 0
  %546 = vmatprep.subr.bf16.mxu0 0
  %547 = vmatpush1.bf16.msra.mxu0 0
  %548 = vmatprep.subr.bf16.mxu0 0
  %549 = vmatpush1.bf16.msra.mxu0 0
  %550 = vmatprep.subr.bf16.mxu0 0
  %551 = vmatpush1.bf16.msra.mxu0 0
  %552 = vmatprep.subr.bf16.mxu0 0
  %553 = vmatpush1.bf16.msra.mxu0 0
  %554 = vmatprep.subr.bf16.mxu0 0
  %555 = vmatpush1.bf16.msra.mxu0 %v538
  %556 = vmatprep.subr.bf16.mxu0 0
  %557 = vmatpush2.bf16.msra.mxu0 0
  %558 = vmatprep.subr.bf16.mxu0 0
  %559 = vmatpush2.bf16.msra.mxu0 0
  %560 = vmatprep.subr.bf16.mxu0 0
  %561 = vmatpush2.bf16.msra.mxu0 0
  %562 = vmatprep.subr.bf16.mxu0 0
  %563 = vmatpush2.bf16.msra.mxu0 0
  %564 = vmatprep.subr.bf16.mxu0 0
  %565 = vmatpush2.bf16.msra.mxu0 0
  %566 = vmatprep.subr.bf16.mxu0 0
  %567 = vmatpush2.bf16.msra.mxu0 0
  %568 = vmatprep.subr.bf16.mxu0 0
  %569 = vmatpush2.bf16.msra.mxu0 0
  %570 = vmatprep.subr.bf16.mxu0 0
  %571 = vmatpush2.bf16.msra.mxu0 0
  %572 = vmatprep.mubr.bf16.mxu0 0
  %573 = vmatmul.mubr.bf16.gmra.mxu0 %v531
  %v574 = vpop.f32.mrf.mxu0
  %v575 = vadd.f32 %v527, %v574
  %v576 = vpop.f32.mrf.mxu0
  %v577 = vpop.f32.mrf.mxu0
  %v578 = vadd.f32 %v527, %v577
  %v579 = vpop.f32.mrf.mxu0
  %580 = vmatprep.mubr.bf16.mxu0 0
  %581 = vmatmul.mubr.bf16.gmra.mxu0 %v534
  %v582 = vpop.f32.mrf.mxu0
  %v583 = vadd.f32 %v527, %v582
  %v584 = vpop.f32.mrf.mxu0
  %v585 = vpop.f32.mrf.mxu0
  %v586 = vpop.f32.mrf.mxu0
  %587 = vdwg.mxu0
  %v588 = vtanh.pop %v575
  %v589 = vtanh.pop %v578
  %v590 = vtanh.pop %v583
  %v591 = vpack.c.bf16 %v589, %v588
  %v592 = vpack.c.bf16 %v590, %v590
  %v593 = vld [vmem:[%s8] sm:$0xff]
  %v594 = vld [vmem:[%s8 + $0x8] sm:$0xff]
  %v595 = vld [vmem:[%s8 + $0x10] sm:$0xff]
  %v596 = vld [vmem:[%s8 + $0x18] sm:$0xff]
  %v597 = vld [vmem:[%s8 + $0x20] sm:$0xff]
  %v598 = vld [vmem:[%s8 + $0x28] sm:$0xff]
  %v599 = vld [vmem:[%s8 + $0x30] sm:$0xff]
  %v600 = vld [vmem:[%s8 + $0x38] sm:$0xff]
  %v601 = vld [vmem:[%s8 + $0x40] sm:$0xff]
  %v602 = vld [vmem:[%s8 + $0x48] sm:$0xff]
  %v603 = vld [vmem:[%s8 + $0x50] sm:$0xff]
  %v604 = vld [vmem:[%s8 + $0x58] sm:$0xff]
  %v605 = vld [vmem:[%s8 + $0x60] sm:$0xff]
  %v606 = vld [vmem:[%s8 + $0x68] sm:$0xff]
  %v607 = vld [vmem:[%s8 + $0x70] sm:$0xff]
  %v608 = vld [vmem:[%s8 + $0x78] sm:$0xff]
  %v609 = vld [vmem:[%s9] sm:$0xff]
  %v611 = vlaneseq
  %v612 = vshrl.u32 %v611, 7
  %v613 = vsub.s32 0, %v612
  %v614 = vrot.slane %v609, %v613
  %v615 = vlaneseq
  %v616 = vshrl.u32 %v615, 7
  %v617 = vsub.s32 1, %v616
  %v618 = vrot.slane %v609, %v617
  %v619 = vlaneseq
  %v620 = vshrl.u32 %v619, 7
  %v621 = vsub.s32 2, %v620
  %v622 = vrot.slane %v609, %v621
  %v623 = vlaneseq
  %v624 = vshrl.u32 %v623, 7
  %v625 = vsub.s32 3, %v624
  %v626 = vrot.slane %v609, %v625
  %v627 = vlaneseq
  %v628 = vshrl.u32 %v627, 7
  %v629 = vsub.s32 4, %v628
  %v630 = vrot.slane %v609, %v629
  %v631 = vlaneseq
  %v632 = vshrl.u32 %v631, 7
  %v633 = vsub.s32 5, %v632
  %v634 = vrot.slane %v609, %v633
  %v635 = vlaneseq
  %v636 = vshrl.u32 %v635, 7
  %v637 = vsub.s32 6, %v636
  %v638 = vrot.slane %v609, %v637
  %v639 = vlaneseq
  %v640 = vshrl.u32 %v639, 7
  %v641 = vsub.s32 7, %v640
  %v642 = vrot.slane %v609, %v641
  %v667 = vunpack.c.l.b16 %v593
  %v668 = vunpack.c.h.b16 %v593
  %v669 = vunpack.c.l.b16 %v594
  %v670 = vunpack.c.h.b16 %v594
  %v671 = vunpack.c.l.b16 %v595
  %v672 = vunpack.c.h.b16 %v595
  %v673 = vunpack.c.l.b16 %v596
  %v674 = vunpack.c.h.b16 %v596
  %v675 = vunpack.c.l.b16 %v597
  %v676 = vunpack.c.h.b16 %v597
  %v677 = vunpack.c.l.b16 %v598
  %v678 = vunpack.c.h.b16 %v598
  %v679 = vunpack.c.l.b16 %v599
  %v680 = vunpack.c.h.b16 %v599
  %v681 = vunpack.c.l.b16 %v600
  %v682 = vunpack.c.h.b16 %v600
  %v683 = vunpack.c.l.b16 %v601
  %v684 = vunpack.c.h.b16 %v601
  %v685 = vunpack.c.l.b16 %v602
  %v686 = vunpack.c.h.b16 %v602
  %v687 = vunpack.c.l.b16 %v603
  %v688 = vunpack.c.h.b16 %v603
  %v689 = vunpack.c.l.b16 %v604
  %v690 = vunpack.c.h.b16 %v604
  %v691 = vunpack.c.l.b16 %v605
  %v692 = vunpack.c.h.b16 %v605
  %v693 = vunpack.c.l.b16 %v606
  %v694 = vunpack.c.h.b16 %v606
  %v695 = vunpack.c.l.b16 %v607
  %v696 = vunpack.c.h.b16 %v607
  %v697 = vunpack.c.l.b16 %v608
  %v698 = vunpack.c.h.b16 %v608
  %v699 = vpack.c.b16 %v675, %v667
  %v700 = vpack.c.b16 %v676, %v668
  %v701 = vpack.c.b16 %v677, %v669
  %v702 = vpack.c.b16 %v678, %v670
  %v703 = vpack.c.b16 %v679, %v671
  %v704 = vpack.c.b16 %v680, %v672
  %v705 = vpack.c.b16 %v681, %v673
  %v706 = vpack.c.b16 %v682, %v674
  %v707 = vpack.c.b16 %v691, %v683
  %v708 = vpack.c.b16 %v692, %v684
  %v709 = vpack.c.b16 %v693, %v685
  %v710 = vpack.c.b16 %v694, %v686
  %v711 = vpack.c.b16 %v695, %v687
  %v712 = vpack.c.b16 %v696, %v688
  %v713 = vpack.c.b16 %v697, %v689
  %v714 = vpack.c.b16 %v698, %v690
  %v732 = vsel %vm200, %v591, 0
  %v735 = vsel %vm200, %v592, 0
  %737 = vmatprep.subr.bf16.mxu0 0
  %738 = vmatpush1.bf16.msra.mxu0 0
  %739 = vmatprep.subr.bf16.mxu0 0
  %740 = vmatpush1.bf16.msra.mxu0 0
  %741 = vmatprep.subr.bf16.mxu0 0
  %742 = vmatpush1.bf16.msra.mxu0 0
  %743 = vmatprep.subr.bf16.mxu0 0
  %744 = vmatpush1.bf16.msra.mxu0 0
  %745 = vmatprep.subr.bf16.mxu0 0
  %746 = vmatpush1.bf16.msra.mxu0 0
  %747 = vmatprep.subr.bf16.mxu0 0
  %748 = vmatpush1.bf16.msra.mxu0 0
  %749 = vmatprep.subr.bf16.mxu0 %v708
  %750 = vmatpush1.bf16.msra.mxu0 %v707
  %751 = vmatprep.subr.bf16.mxu0 %v700
  %752 = vmatpush1.bf16.msra.mxu0 %v699
  %753 = vmatprep.subr.bf16.mxu0 0
  %754 = vmatpush2.bf16.msra.mxu0 0
  %755 = vmatprep.subr.bf16.mxu0 0
  %756 = vmatpush2.bf16.msra.mxu0 0
  %757 = vmatprep.subr.bf16.mxu0 0
  %758 = vmatpush2.bf16.msra.mxu0 0
  %759 = vmatprep.subr.bf16.mxu0 0
  %760 = vmatpush2.bf16.msra.mxu0 0
  %761 = vmatprep.subr.bf16.mxu0 0
  %762 = vmatpush2.bf16.msra.mxu0 0
  %763 = vmatprep.subr.bf16.mxu0 0
  %764 = vmatpush2.bf16.msra.mxu0 0
  %765 = vmatprep.subr.bf16.mxu0 0
  %766 = vmatpush2.bf16.msra.mxu0 0
  %767 = vmatprep.subr.bf16.mxu0 0
  %768 = vmatpush2.bf16.msra.mxu0 0
  %769 = vmatprep.mubr.bf16.mxu0 0
  %770 = vmatmul.mubr.bf16.gmra.mxu0 %v732
  %v771 = vpop.f32.mrf.mxu0
  %v772 = vadd.f32 %v614, %v771
  %v773 = vpop.f32.mrf.mxu0
  %v774 = vadd.f32 %v618, %v773
  %v775 = vpop.f32.mrf.mxu0
  %v776 = vadd.f32 %v614, %v775
  %v777 = vpop.f32.mrf.mxu0
  %v778 = vadd.f32 %v618, %v777
  %779 = vmatprep.mubr.bf16.mxu0 0
  %780 = vmatmul.mubr.bf16.gmra.mxu0 %v735
  %v781 = vpop.f32.mrf.mxu0
  %v782 = vadd.f32 %v614, %v781
  %v783 = vpop.f32.mrf.mxu0
  %v784 = vadd.f32 %v618, %v783
  %v785 = vpop.f32.mrf.mxu0
  %v786 = vpop.f32.mrf.mxu0
  %787 = vdwg.mxu0
  %788 = vmatprep.subr.bf16.mxu0 0
  %789 = vmatpush1.bf16.msra.mxu0 0
  %790 = vmatprep.subr.bf16.mxu0 0
  %791 = vmatpush1.bf16.msra.mxu0 0
  %792 = vmatprep.subr.bf16.mxu0 0
  %793 = vmatpush1.bf16.msra.mxu0 0
  %794 = vmatprep.subr.bf16.mxu0 0
  %795 = vmatpush1.bf16.msra.mxu0 0
  %796 = vmatprep.subr.bf16.mxu0 0
  %797 = vmatpush1.bf16.msra.mxu0 0
  %798 = vmatprep.subr.bf16.mxu0 0
  %799 = vmatpush1.bf16.msra.mxu0 0
  %800 = vmatprep.subr.bf16.mxu0 %v710
  %801 = vmatpush1.bf16.msra.mxu0 %v709
  %802 = vmatprep.subr.bf16.mxu0 %v702
  %803 = vmatpush1.bf16.msra.mxu0 %v701
  %804 = vmatprep.subr.bf16.mxu0 0
  %805 = vmatpush2.bf16.msra.mxu0 0
  %806 = vmatprep.subr.bf16.mxu0 0
  %807 = vmatpush2.bf16.msra.mxu0 0
  %808 = vmatprep.subr.bf16.mxu0 0
  %809 = vmatpush2.bf16.msra.mxu0 0
  %810 = vmatprep.subr.bf16.mxu0 0
  %811 = vmatpush2.bf16.msra.mxu0 0
  %812 = vmatprep.subr.bf16.mxu0 0
  %813 = vmatpush2.bf16.msra.mxu0 0
  %814 = vmatprep.subr.bf16.mxu0 0
  %815 = vmatpush2.bf16.msra.mxu0 0
  %816 = vmatprep.subr.bf16.mxu0 0
  %817 = vmatpush2.bf16.msra.mxu0 0
  %818 = vmatprep.subr.bf16.mxu0 0
  %819 = vmatpush2.bf16.msra.mxu0 0
  %820 = vmatprep.mubr.bf16.mxu0 0
  %821 = vmatmul.mubr.bf16.gmra.mxu0 %v732
  %v822 = vpop.f32.mrf.mxu0
  %v823 = vadd.f32 %v622, %v822
  %v824 = vpop.f32.mrf.mxu0
  %v825 = vadd.f32 %v626, %v824
  %v826 = vpop.f32.mrf.mxu0
  %v827 = vadd.f32 %v622, %v826
  %v828 = vpop.f32.mrf.mxu0
  %v829 = vadd.f32 %v626, %v828
  %830 = vmatprep.mubr.bf16.mxu0 0
  %831 = vmatmul.mubr.bf16.gmra.mxu0 %v735
  %v832 = vpop.f32.mrf.mxu0
  %v833 = vadd.f32 %v622, %v832
  %v834 = vpop.f32.mrf.mxu0
  %v835 = vadd.f32 %v626, %v834
  %v836 = vpop.f32.mrf.mxu0
  %v837 = vpop.f32.mrf.mxu0
  %838 = vdwg.mxu0
  %839 = vmatprep.subr.bf16.mxu0 0
  %840 = vmatpush1.bf16.msra.mxu0 0
  %841 = vmatprep.subr.bf16.mxu0 0
  %842 = vmatpush1.bf16.msra.mxu0 0
  %843 = vmatprep.subr.bf16.mxu0 0
  %844 = vmatpush1.bf16.msra.mxu0 0
  %845 = vmatprep.subr.bf16.mxu0 0
  %846 = vmatpush1.bf16.msra.mxu0 0
  %847 = vmatprep.subr.bf16.mxu0 0
  %848 = vmatpush1.bf16.msra.mxu0 0
  %849 = vmatprep.subr.bf16.mxu0 0
  %850 = vmatpush1.bf16.msra.mxu0 0
  %851 = vmatprep.subr.bf16.mxu0 %v712
  %852 = vmatpush1.bf16.msra.mxu0 %v711
  %853 = vmatprep.subr.bf16.mxu0 %v704
  %854 = vmatpush1.bf16.msra.mxu0 %v703
  %855 = vmatprep.subr.bf16.mxu0 0
  %856 = vmatpush2.bf16.msra.mxu0 0
  %857 = vmatprep.subr.bf16.mxu0 0
  %858 = vmatpush2.bf16.msra.mxu0 0
  %859 = vmatprep.subr.bf16.mxu0 0
  %860 = vmatpush2.bf16.msra.mxu0 0
  %861 = vmatprep.subr.bf16.mxu0 0
  %862 = vmatpush2.bf16.msra.mxu0 0
  %863 = vmatprep.subr.bf16.mxu0 0
  %864 = vmatpush2.bf16.msra.mxu0 0
  %865 = vmatprep.subr.bf16.mxu0 0
  %866 = vmatpush2.bf16.msra.mxu0 0
  %867 = vmatprep.subr.bf16.mxu0 0
  %868 = vmatpush2.bf16.msra.mxu0 0
  %869 = vmatprep.subr.bf16.mxu0 0
  %870 = vmatpush2.bf16.msra.mxu0 0
  %871 = vmatprep.mubr.bf16.mxu0 0
  %872 = vmatmul.mubr.bf16.gmra.mxu0 %v732
  %v873 = vpop.f32.mrf.mxu0
  %v874 = vadd.f32 %v630, %v873
  %v875 = vpop.f32.mrf.mxu0
  %v876 = vadd.f32 %v634, %v875
  %v877 = vpop.f32.mrf.mxu0
  %v878 = vadd.f32 %v630, %v877
  %v879 = vpop.f32.mrf.mxu0
  %v880 = vadd.f32 %v634, %v879
  %881 = vmatprep.mubr.bf16.mxu0 0
  %882 = vmatmul.mubr.bf16.gmra.mxu0 %v735
  %v883 = vpop.f32.mrf.mxu0
  %v884 = vadd.f32 %v630, %v883
  %v885 = vpop.f32.mrf.mxu0
  %v886 = vadd.f32 %v634, %v885
  %v887 = vpop.f32.mrf.mxu0
  %v888 = vpop.f32.mrf.mxu0
  %889 = vdwg.mxu0
  %890 = vmatprep.subr.bf16.mxu0 0
  %891 = vmatpush1.bf16.msra.mxu0 0
  %892 = vmatprep.subr.bf16.mxu0 0
  %893 = vmatpush1.bf16.msra.mxu0 0
  %894 = vmatprep.subr.bf16.mxu0 0
  %895 = vmatpush1.bf16.msra.mxu0 0
  %896 = vmatprep.subr.bf16.mxu0 0
  %897 = vmatpush1.bf16.msra.mxu0 0
  %898 = vmatprep.subr.bf16.mxu0 0
  %899 = vmatpush1.bf16.msra.mxu0 0
  %900 = vmatprep.subr.bf16.mxu0 0
  %901 = vmatpush1.bf16.msra.mxu0 0
  %902 = vmatprep.subr.bf16.mxu0 %v714
  %903 = vmatpush1.bf16.msra.mxu0 %v713
  %904 = vmatprep.subr.bf16.mxu0 %v706
  %905 = vmatpush1.bf16.msra.mxu0 %v705
  %906 = vmatprep.subr.bf16.mxu0 0
  %907 = vmatpush2.bf16.msra.mxu0 0
  %908 = vmatprep.subr.bf16.mxu0 0
  %909 = vmatpush2.bf16.msra.mxu0 0
  %910 = vmatprep.subr.bf16.mxu0 0
  %911 = vmatpush2.bf16.msra.mxu0 0
  %912 = vmatprep.subr.bf16.mxu0 0
  %913 = vmatpush2.bf16.msra.mxu0 0
  %914 = vmatprep.subr.bf16.mxu0 0
  %915 = vmatpush2.bf16.msra.mxu0 0
  %916 = vmatprep.subr.bf16.mxu0 0
  %917 = vmatpush2.bf16.msra.mxu0 0
  %918 = vmatprep.subr.bf16.mxu0 0
  %919 = vmatpush2.bf16.msra.mxu0 0
  %920 = vmatprep.subr.bf16.mxu0 0
  %921 = vmatpush2.bf16.msra.mxu0 0
  %922 = vmatprep.mubr.bf16.mxu0 0
  %923 = vmatmul.mubr.bf16.gmra.mxu0 %v732
  %v924 = vpop.f32.mrf.mxu0
  %v925 = vadd.f32 %v638, %v924
  %v926 = vpop.f32.mrf.mxu0
  %v927 = vadd.f32 %v642, %v926
  %v928 = vpop.f32.mrf.mxu0
  %v929 = vadd.f32 %v638, %v928
  %v930 = vpop.f32.mrf.mxu0
  %v931 = vadd.f32 %v642, %v930
  %932 = vmatprep.mubr.bf16.mxu0 0
  %933 = vmatmul.mubr.bf16.gmra.mxu0 %v735
  %v934 = vpop.f32.mrf.mxu0
  %v935 = vadd.f32 %v638, %v934
  %v936 = vpop.f32.mrf.mxu0
  %v937 = vadd.f32 %v642, %v936
  %v938 = vpop.f32.mrf.mxu0
  %v939 = vpop.f32.mrf.mxu0
  %940 = vdwg.mxu0
  %v965 = vcombine.low %v772, %v774
  %v966 = vcombine.high %v772, %v774
  %v967 = vcombine.low %v823, %v825
  %v968 = vcombine.high %v823, %v825
  %v969 = vcombine.low %v874, %v876
  %v970 = vcombine.high %v874, %v876
  %v971 = vcombine.low %v925, %v927
  %v972 = vcombine.high %v925, %v927
  %v974 = vunpack.c.l.s4 1966171168
  %v975 = vunpack.c.0.s8 %v974
  %v976 = vlaneseq
  %v977 = vshrl.u32 %v976, 7
  %v978 = vsub.s32 %v975, %v977
  %v979 = vrot.slane %v965, %v978
  %v981 = vunpack.c.l.s4 1966171168
  %v982 = vunpack.c.0.s8 %v981
  %v983 = vlaneseq
  %v984 = vshrl.u32 %v983, 7
  %v985 = vsub.s32 %v982, %v984
  %v986 = vrot.slane %v966, %v985
  %v988 = vunpack.c.l.s4 1966171168
  %v989 = vunpack.c.0.s8 %v988
  %v990 = vlaneseq
  %v991 = vshrl.u32 %v990, 7
  %v992 = vsub.s32 %v989, %v991
  %v993 = vrot.slane %v967, %v992
  %v995 = vunpack.c.l.s4 1966171168
  %v996 = vunpack.c.0.s8 %v995
  %v997 = vlaneseq
  %v998 = vshrl.u32 %v997, 7
  %v999 = vsub.s32 %v996, %v998
  %v1000 = vrot.slane %v968, %v999
  %v1002 = vunpack.c.l.s4 1966171168
  %v1003 = vunpack.c.0.s8 %v1002
  %v1004 = vlaneseq
  %v1005 = vshrl.u32 %v1004, 7
  %v1006 = vsub.s32 %v1003, %v1005
  %v1007 = vrot.slane %v969, %v1006
  %v1009 = vunpack.c.l.s4 1966171168
  %v1010 = vunpack.c.0.s8 %v1009
  %v1011 = vlaneseq
  %v1012 = vshrl.u32 %v1011, 7
  %v1013 = vsub.s32 %v1010, %v1012
  %v1014 = vrot.slane %v970, %v1013
  %v1016 = vunpack.c.l.s4 1966171168
  %v1017 = vunpack.c.0.s8 %v1016
  %v1018 = vlaneseq
  %v1019 = vshrl.u32 %v1018, 7
  %v1020 = vsub.s32 %v1017, %v1019
  %v1021 = vrot.slane %v971, %v1020
  %v1023 = vunpack.c.l.s4 1966171168
  %v1024 = vunpack.c.0.s8 %v1023
  %v1025 = vlaneseq
  %v1026 = vshrl.u32 %v1025, 7
  %v1027 = vsub.s32 %v1024, %v1026
  %v1028 = vrot.slane %v972, %v1027
  %v1029 = vcombine.low %v979, %v993
  %v1030 = vcombine.high %v979, %v993
  %v1031 = vcombine.low %v986, %v1000
  %v1032 = vcombine.high %v986, %v1000
  %v1033 = vcombine.low %v1007, %v1021
  %v1034 = vcombine.high %v1007, %v1021
  %v1035 = vcombine.low %v1014, %v1028
  %v1036 = vcombine.high %v1014, %v1028
  %v1038 = vunpack.c.l.s4 1966171168
  %v1039 = vunpack.c.0.s8 %v1038
  %v1040 = vlaneseq
  %v1041 = vshrl.u32 %v1040, 7
  %v1042 = vsub.s32 %v1039, %v1041
  %v1043 = vrot.slane %v1029, %v1042
  %v1045 = vunpack.c.l.s4 1966171168
  %v1046 = vunpack.c.0.s8 %v1045
  %v1047 = vlaneseq
  %v1048 = vshrl.u32 %v1047, 7
  %v1049 = vsub.s32 %v1046, %v1048
  %v1050 = vrot.slane %v1031, %v1049
  %v1052 = vunpack.c.l.s4 1966171168
  %v1053 = vunpack.c.0.s8 %v1052
  %v1054 = vlaneseq
  %v1055 = vshrl.u32 %v1054, 7
  %v1056 = vsub.s32 %v1053, %v1055
  %v1057 = vrot.slane %v1030, %v1056
  %v1059 = vunpack.c.l.s4 1966171168
  %v1060 = vunpack.c.0.s8 %v1059
  %v1061 = vlaneseq
  %v1062 = vshrl.u32 %v1061, 7
  %v1063 = vsub.s32 %v1060, %v1062
  %v1064 = vrot.slane %v1032, %v1063
  %v1066 = vunpack.c.l.s4 1966171168
  %v1067 = vunpack.c.0.s8 %v1066
  %v1068 = vlaneseq
  %v1069 = vshrl.u32 %v1068, 7
  %v1070 = vsub.s32 %v1067, %v1069
  %v1071 = vrot.slane %v1033, %v1070
  %v1073 = vunpack.c.l.s4 1966171168
  %v1074 = vunpack.c.0.s8 %v1073
  %v1075 = vlaneseq
  %v1076 = vshrl.u32 %v1075, 7
  %v1077 = vsub.s32 %v1074, %v1076
  %v1078 = vrot.slane %v1035, %v1077
  %v1080 = vunpack.c.l.s4 1966171168
  %v1081 = vunpack.c.0.s8 %v1080
  %v1082 = vlaneseq
  %v1083 = vshrl.u32 %v1082, 7
  %v1084 = vsub.s32 %v1081, %v1083
  %v1085 = vrot.slane %v1034, %v1084
  %v1087 = vunpack.c.l.s4 1966171168
  %v1088 = vunpack.c.0.s8 %v1087
  %v1089 = vlaneseq
  %v1090 = vshrl.u32 %v1089, 7
  %v1091 = vsub.s32 %v1088, %v1090
  %v1092 = vrot.slane %v1036, %v1091
  %v1093 = vcombine.low %v1043, %v1071
  %v1094 = vcombine.high %v1043, %v1071
  %v1095 = vcombine.low %v1050, %v1078
  %v1096 = vcombine.high %v1050, %v1078
  %v1097 = vcombine.low %v1057, %v1085
  %v1098 = vcombine.high %v1057, %v1085
  %v1099 = vcombine.low %v1064, %v1092
  %v1100 = vcombine.high %v1064, %v1092
  %v1101 = vcombine.low %v776, %v778
  %v1102 = vcombine.high %v776, %v778
  %v1103 = vcombine.low %v827, %v829
  %v1104 = vcombine.high %v827, %v829
  %v1105 = vcombine.low %v878, %v880
  %v1106 = vcombine.high %v878, %v880
  %v1107 = vcombine.low %v929, %v931
  %v1108 = vcombine.high %v929, %v931
  %v1110 = vunpack.c.l.s4 1966171168
  %v1111 = vunpack.c.0.s8 %v1110
  %v1112 = vlaneseq
  %v1113 = vshrl.u32 %v1112, 7
  %v1114 = vsub.s32 %v1111, %v1113
  %v1115 = vrot.slane %v1101, %v1114
  %v1117 = vunpack.c.l.s4 1966171168
  %v1118 = vunpack.c.0.s8 %v1117
  %v1119 = vlaneseq
  %v1120 = vshrl.u32 %v1119, 7
  %v1121 = vsub.s32 %v1118, %v1120
  %v1122 = vrot.slane %v1102, %v1121
  %v1124 = vunpack.c.l.s4 1966171168
  %v1125 = vunpack.c.0.s8 %v1124
  %v1126 = vlaneseq
  %v1127 = vshrl.u32 %v1126, 7
  %v1128 = vsub.s32 %v1125, %v1127
  %v1129 = vrot.slane %v1103, %v1128
  %v1131 = vunpack.c.l.s4 1966171168
  %v1132 = vunpack.c.0.s8 %v1131
  %v1133 = vlaneseq
  %v1134 = vshrl.u32 %v1133, 7
  %v1135 = vsub.s32 %v1132, %v1134
  %v1136 = vrot.slane %v1104, %v1135
  %v1138 = vunpack.c.l.s4 1966171168
  %v1139 = vunpack.c.0.s8 %v1138
  %v1140 = vlaneseq
  %v1141 = vshrl.u32 %v1140, 7
  %v1142 = vsub.s32 %v1139, %v1141
  %v1143 = vrot.slane %v1105, %v1142
  %v1145 = vunpack.c.l.s4 1966171168
  %v1146 = vunpack.c.0.s8 %v1145
  %v1147 = vlaneseq
  %v1148 = vshrl.u32 %v1147, 7
  %v1149 = vsub.s32 %v1146, %v1148
  %v1150 = vrot.slane %v1106, %v1149
  %v1152 = vunpack.c.l.s4 1966171168
  %v1153 = vunpack.c.0.s8 %v1152
  %v1154 = vlaneseq
  %v1155 = vshrl.u32 %v1154, 7
  %v1156 = vsub.s32 %v1153, %v1155
  %v1157 = vrot.slane %v1107, %v1156
  %v1159 = vunpack.c.l.s4 1966171168
  %v1160 = vunpack.c.0.s8 %v1159
  %v1161 = vlaneseq
  %v1162 = vshrl.u32 %v1161, 7
  %v1163 = vsub.s32 %v1160, %v1162
  %v1164 = vrot.slane %v1108, %v1163
  %v1165 = vcombine.low %v1115, %v1129
  %v1166 = vcombine.high %v1115, %v1129
  %v1167 = vcombine.low %v1122, %v1136
  %v1168 = vcombine.high %v1122, %v1136
  %v1169 = vcombine.low %v1143, %v1157
  %v1170 = vcombine.high %v1143, %v1157
  %v1171 = vcombine.low %v1150, %v1164
  %v1172 = vcombine.high %v1150, %v1164
  %v1174 = vunpack.c.l.s4 1966171168
  %v1175 = vunpack.c.0.s8 %v1174
  %v1176 = vlaneseq
  %v1177 = vshrl.u32 %v1176, 7
  %v1178 = vsub.s32 %v1175, %v1177
  %v1179 = vrot.slane %v1165, %v1178
  %v1181 = vunpack.c.l.s4 1966171168
  %v1182 = vunpack.c.0.s8 %v1181
  %v1183 = vlaneseq
  %v1184 = vshrl.u32 %v1183, 7
  %v1185 = vsub.s32 %v1182, %v1184
  %v1186 = vrot.slane %v1167, %v1185
  %v1188 = vunpack.c.l.s4 1966171168
  %v1189 = vunpack.c.0.s8 %v1188
  %v1190 = vlaneseq
  %v1191 = vshrl.u32 %v1190, 7
  %v1192 = vsub.s32 %v1189, %v1191
  %v1193 = vrot.slane %v1166, %v1192
  %v1195 = vunpack.c.l.s4 1966171168
  %v1196 = vunpack.c.0.s8 %v1195
  %v1197 = vlaneseq
  %v1198 = vshrl.u32 %v1197, 7
  %v1199 = vsub.s32 %v1196, %v1198
  %v1200 = vrot.slane %v1168, %v1199
  %v1202 = vunpack.c.l.s4 1966171168
  %v1203 = vunpack.c.0.s8 %v1202
  %v1204 = vlaneseq
  %v1205 = vshrl.u32 %v1204, 7
  %v1206 = vsub.s32 %v1203, %v1205
  %v1207 = vrot.slane %v1169, %v1206
  %v1209 = vunpack.c.l.s4 1966171168
  %v1210 = vunpack.c.0.s8 %v1209
  %v1211 = vlaneseq
  %v1212 = vshrl.u32 %v1211, 7
  %v1213 = vsub.s32 %v1210, %v1212
  %v1214 = vrot.slane %v1171, %v1213
  %v1216 = vunpack.c.l.s4 1966171168
  %v1217 = vunpack.c.0.s8 %v1216
  %v1218 = vlaneseq
  %v1219 = vshrl.u32 %v1218, 7
  %v1220 = vsub.s32 %v1217, %v1219
  %v1221 = vrot.slane %v1170, %v1220
  %v1223 = vunpack.c.l.s4 1966171168
  %v1224 = vunpack.c.0.s8 %v1223
  %v1225 = vlaneseq
  %v1226 = vshrl.u32 %v1225, 7
  %v1227 = vsub.s32 %v1224, %v1226
  %v1228 = vrot.slane %v1172, %v1227
  %v1229 = vcombine.low %v1179, %v1207
  %v1230 = vcombine.high %v1179, %v1207
  %v1231 = vcombine.low %v1186, %v1214
  %v1232 = vcombine.high %v1186, %v1214
  %v1233 = vcombine.low %v1193, %v1221
  %v1234 = vcombine.high %v1193, %v1221
  %v1235 = vcombine.low %v1200, %v1228
  %v1236 = vcombine.high %v1200, %v1228
  %v1237 = vcombine.low %v782, %v784
  %v1238 = vcombine.low %v833, %v835
  %v1239 = vcombine.low %v884, %v886
  %v1240 = vcombine.low %v935, %v937
  %v1242 = vunpack.c.l.s4 1966171168
  %v1243 = vunpack.c.0.s8 %v1242
  %v1244 = vlaneseq
  %v1245 = vshrl.u32 %v1244, 7
  %v1246 = vsub.s32 %v1243, %v1245
  %v1247 = vrot.slane %v1237, %v1246
  %v1249 = vunpack.c.l.s4 1966171168
  %v1250 = vunpack.c.0.s8 %v1249
  %v1251 = vlaneseq
  %v1252 = vshrl.u32 %v1251, 7
  %v1253 = vsub.s32 %v1250, %v1252
  %v1254 = vrot.slane %v1238, %v1253
  %v1256 = vunpack.c.l.s4 1966171168
  %v1257 = vunpack.c.0.s8 %v1256
  %v1258 = vlaneseq
  %v1259 = vshrl.u32 %v1258, 7
  %v1260 = vsub.s32 %v1257, %v1259
  %v1261 = vrot.slane %v1239, %v1260
  %v1263 = vunpack.c.l.s4 1966171168
  %v1264 = vunpack.c.0.s8 %v1263
  %v1265 = vlaneseq
  %v1266 = vshrl.u32 %v1265, 7
  %v1267 = vsub.s32 %v1264, %v1266
  %v1268 = vrot.slane %v1240, %v1267
  %v1269 = vcombine.low %v1247, %v1254
  %v1270 = vcombine.high %v1247, %v1254
  %v1271 = vcombine.low %v1261, %v1268
  %v1272 = vcombine.high %v1261, %v1268
  %v1274 = vunpack.c.l.s4 1966171168
  %v1275 = vunpack.c.0.s8 %v1274
  %v1276 = vlaneseq
  %v1277 = vshrl.u32 %v1276, 7
  %v1278 = vsub.s32 %v1275, %v1277
  %v1279 = vrot.slane %v1269, %v1278
  %v1281 = vunpack.c.l.s4 1966171168
  %v1282 = vunpack.c.0.s8 %v1281
  %v1283 = vlaneseq
  %v1284 = vshrl.u32 %v1283, 7
  %v1285 = vsub.s32 %v1282, %v1284
  %v1286 = vrot.slane %v1270, %v1285
  %v1288 = vunpack.c.l.s4 1966171168
  %v1289 = vunpack.c.0.s8 %v1288
  %v1290 = vlaneseq
  %v1291 = vshrl.u32 %v1290, 7
  %v1292 = vsub.s32 %v1289, %v1291
  %v1293 = vrot.slane %v1271, %v1292
  %v1295 = vunpack.c.l.s4 1966171168
  %v1296 = vunpack.c.0.s8 %v1295
  %v1297 = vlaneseq
  %v1298 = vshrl.u32 %v1297, 7
  %v1299 = vsub.s32 %v1296, %v1298
  %v1300 = vrot.slane %v1272, %v1299
  %v1301 = vcombine.low %v1279, %v1293
  %v1302 = vcombine.high %v1279, %v1293
  %v1303 = vcombine.low %v1286, %v1300
  %v1304 = vcombine.high %v1286, %v1300
  %v1305 = vlaneseq
  %v1306 = vshrl.u32 %v1305, 7
  %v1307 = vsub.s32 0, %v1306
  %v1308 = vrot.slane %v1093, %v1307
  %v1309 = vlaneseq
  %v1310 = vshrl.u32 %v1309, 7
  %v1311 = vsub.s32 1, %v1310
  %v1312 = vrot.slane %v1093, %v1311
  %v1313 = vlaneseq
  %v1314 = vshrl.u32 %v1313, 7
  %v1315 = vsub.s32 2, %v1314
  %v1316 = vrot.slane %v1093, %v1315
  %v1317 = vlaneseq
  %v1318 = vshrl.u32 %v1317, 7
  %v1319 = vsub.s32 3, %v1318
  %v1320 = vrot.slane %v1093, %v1319
  %v1321 = vlaneseq
  %v1322 = vshrl.u32 %v1321, 7
  %v1323 = vsub.s32 4, %v1322
  %v1324 = vrot.slane %v1093, %v1323
  %v1325 = vlaneseq
  %v1326 = vshrl.u32 %v1325, 7
  %v1327 = vsub.s32 5, %v1326
  %v1328 = vrot.slane %v1093, %v1327
  %v1329 = vlaneseq
  %v1330 = vshrl.u32 %v1329, 7
  %v1331 = vsub.s32 6, %v1330
  %v1332 = vrot.slane %v1093, %v1331
  %v1333 = vlaneseq
  %v1334 = vshrl.u32 %v1333, 7
  %v1335 = vsub.s32 7, %v1334
  %v1336 = vrot.slane %v1093, %v1335
  %v1337 = vlaneseq
  %v1338 = vshrl.u32 %v1337, 7
  %v1339 = vsub.s32 0, %v1338
  %v1340 = vrot.slane %v1097, %v1339
  %v1341 = vlaneseq
  %v1342 = vshrl.u32 %v1341, 7
  %v1343 = vsub.s32 1, %v1342
  %v1344 = vrot.slane %v1097, %v1343
  %v1345 = vlaneseq
  %v1346 = vshrl.u32 %v1345, 7
  %v1347 = vsub.s32 2, %v1346
  %v1348 = vrot.slane %v1097, %v1347
  %v1349 = vlaneseq
  %v1350 = vshrl.u32 %v1349, 7
  %v1351 = vsub.s32 3, %v1350
  %v1352 = vrot.slane %v1097, %v1351
  %v1353 = vlaneseq
  %v1354 = vshrl.u32 %v1353, 7
  %v1355 = vsub.s32 4, %v1354
  %v1356 = vrot.slane %v1097, %v1355
  %v1357 = vlaneseq
  %v1358 = vshrl.u32 %v1357, 7
  %v1359 = vsub.s32 5, %v1358
  %v1360 = vrot.slane %v1097, %v1359
  %v1361 = vlaneseq
  %v1362 = vshrl.u32 %v1361, 7
  %v1363 = vsub.s32 6, %v1362
  %v1364 = vrot.slane %v1097, %v1363
  %v1365 = vlaneseq
  %v1366 = vshrl.u32 %v1365, 7
  %v1367 = vsub.s32 7, %v1366
  %v1368 = vrot.slane %v1097, %v1367
  %v1369 = vlaneseq
  %v1370 = vshrl.u32 %v1369, 7
  %v1371 = vsub.s32 0, %v1370
  %v1372 = vrot.slane %v1094, %v1371
  %v1373 = vlaneseq
  %v1374 = vshrl.u32 %v1373, 7
  %v1375 = vsub.s32 1, %v1374
  %v1376 = vrot.slane %v1094, %v1375
  %v1377 = vlaneseq
  %v1378 = vshrl.u32 %v1377, 7
  %v1379 = vsub.s32 2, %v1378
  %v1380 = vrot.slane %v1094, %v1379
  %v1381 = vlaneseq
  %v1382 = vshrl.u32 %v1381, 7
  %v1383 = vsub.s32 3, %v1382
  %v1384 = vrot.slane %v1094, %v1383
  %v1385 = vlaneseq
  %v1386 = vshrl.u32 %v1385, 7
  %v1387 = vsub.s32 4, %v1386
  %v1388 = vrot.slane %v1094, %v1387
  %v1389 = vlaneseq
  %v1390 = vshrl.u32 %v1389, 7
  %v1391 = vsub.s32 5, %v1390
  %v1392 = vrot.slane %v1094, %v1391
  %v1393 = vlaneseq
  %v1394 = vshrl.u32 %v1393, 7
  %v1395 = vsub.s32 6, %v1394
  %v1396 = vrot.slane %v1094, %v1395
  %v1397 = vlaneseq
  %v1398 = vshrl.u32 %v1397, 7
  %v1399 = vsub.s32 7, %v1398
  %v1400 = vrot.slane %v1094, %v1399
  %v1401 = vlaneseq
  %v1402 = vshrl.u32 %v1401, 7
  %v1403 = vsub.s32 0, %v1402
  %v1404 = vrot.slane %v1098, %v1403
  %v1405 = vlaneseq
  %v1406 = vshrl.u32 %v1405, 7
  %v1407 = vsub.s32 1, %v1406
  %v1408 = vrot.slane %v1098, %v1407
  %v1409 = vlaneseq
  %v1410 = vshrl.u32 %v1409, 7
  %v1411 = vsub.s32 2, %v1410
  %v1412 = vrot.slane %v1098, %v1411
  %v1413 = vlaneseq
  %v1414 = vshrl.u32 %v1413, 7
  %v1415 = vsub.s32 3, %v1414
  %v1416 = vrot.slane %v1098, %v1415
  %v1417 = vlaneseq
  %v1418 = vshrl.u32 %v1417, 7
  %v1419 = vsub.s32 4, %v1418
  %v1420 = vrot.slane %v1098, %v1419
  %v1421 = vlaneseq
  %v1422 = vshrl.u32 %v1421, 7
  %v1423 = vsub.s32 5, %v1422
  %v1424 = vrot.slane %v1098, %v1423
  %v1425 = vlaneseq
  %v1426 = vshrl.u32 %v1425, 7
  %v1427 = vsub.s32 6, %v1426
  %v1428 = vrot.slane %v1098, %v1427
  %v1429 = vlaneseq
  %v1430 = vshrl.u32 %v1429, 7
  %v1431 = vsub.s32 7, %v1430
  %v1432 = vrot.slane %v1098, %v1431
  %v1433 = vlaneseq
  %v1434 = vshrl.u32 %v1433, 7
  %v1435 = vsub.s32 0, %v1434
  %v1436 = vrot.slane %v1095, %v1435
  %v1437 = vlaneseq
  %v1438 = vshrl.u32 %v1437, 7
  %v1439 = vsub.s32 1, %v1438
  %v1440 = vrot.slane %v1095, %v1439
  %v1441 = vlaneseq
  %v1442 = vshrl.u32 %v1441, 7
  %v1443 = vsub.s32 2, %v1442
  %v1444 = vrot.slane %v1095, %v1443
  %v1445 = vlaneseq
  %v1446 = vshrl.u32 %v1445, 7
  %v1447 = vsub.s32 3, %v1446
  %v1448 = vrot.slane %v1095, %v1447
  %v1449 = vlaneseq
  %v1450 = vshrl.u32 %v1449, 7
  %v1451 = vsub.s32 4, %v1450
  %v1452 = vrot.slane %v1095, %v1451
  %v1453 = vlaneseq
  %v1454 = vshrl.u32 %v1453, 7
  %v1455 = vsub.s32 5, %v1454
  %v1456 = vrot.slane %v1095, %v1455
  %v1457 = vlaneseq
  %v1458 = vshrl.u32 %v1457, 7
  %v1459 = vsub.s32 6, %v1458
  %v1460 = vrot.slane %v1095, %v1459
  %v1461 = vlaneseq
  %v1462 = vshrl.u32 %v1461, 7
  %v1463 = vsub.s32 7, %v1462
  %v1464 = vrot.slane %v1095, %v1463
  %v1465 = vlaneseq
  %v1466 = vshrl.u32 %v1465, 7
  %v1467 = vsub.s32 0, %v1466
  %v1468 = vrot.slane %v1099, %v1467
  %v1469 = vlaneseq
  %v1470 = vshrl.u32 %v1469, 7
  %v1471 = vsub.s32 1, %v1470
  %v1472 = vrot.slane %v1099, %v1471
  %v1473 = vlaneseq
  %v1474 = vshrl.u32 %v1473, 7
  %v1475 = vsub.s32 2, %v1474
  %v1476 = vrot.slane %v1099, %v1475
  %v1477 = vlaneseq
  %v1478 = vshrl.u32 %v1477, 7
  %v1479 = vsub.s32 3, %v1478
  %v1480 = vrot.slane %v1099, %v1479
  %v1481 = vlaneseq
  %v1482 = vshrl.u32 %v1481, 7
  %v1483 = vsub.s32 4, %v1482
  %v1484 = vrot.slane %v1099, %v1483
  %v1485 = vlaneseq
  %v1486 = vshrl.u32 %v1485, 7
  %v1487 = vsub.s32 5, %v1486
  %v1488 = vrot.slane %v1099, %v1487
  %v1489 = vlaneseq
  %v1490 = vshrl.u32 %v1489, 7
  %v1491 = vsub.s32 6, %v1490
  %v1492 = vrot.slane %v1099, %v1491
  %v1493 = vlaneseq
  %v1494 = vshrl.u32 %v1493, 7
  %v1495 = vsub.s32 7, %v1494
  %v1496 = vrot.slane %v1099, %v1495
  %v1497 = vlaneseq
  %v1498 = vshrl.u32 %v1497, 7
  %v1499 = vsub.s32 0, %v1498
  %v1500 = vrot.slane %v1096, %v1499
  %v1501 = vlaneseq
  %v1502 = vshrl.u32 %v1501, 7
  %v1503 = vsub.s32 1, %v1502
  %v1504 = vrot.slane %v1096, %v1503
  %v1505 = vlaneseq
  %v1506 = vshrl.u32 %v1505, 7
  %v1507 = vsub.s32 2, %v1506
  %v1508 = vrot.slane %v1096, %v1507
  %v1509 = vlaneseq
  %v1510 = vshrl.u32 %v1509, 7
  %v1511 = vsub.s32 3, %v1510
  %v1512 = vrot.slane %v1096, %v1511
  %v1513 = vlaneseq
  %v1514 = vshrl.u32 %v1513, 7
  %v1515 = vsub.s32 4, %v1514
  %v1516 = vrot.slane %v1096, %v1515
  %v1517 = vlaneseq
  %v1518 = vshrl.u32 %v1517, 7
  %v1519 = vsub.s32 5, %v1518
  %v1520 = vrot.slane %v1096, %v1519
  %v1521 = vlaneseq
  %v1522 = vshrl.u32 %v1521, 7
  %v1523 = vsub.s32 6, %v1522
  %v1524 = vrot.slane %v1096, %v1523
  %v1525 = vlaneseq
  %v1526 = vshrl.u32 %v1525, 7
  %v1527 = vsub.s32 7, %v1526
  %v1528 = vrot.slane %v1096, %v1527
  %v1529 = vlaneseq
  %v1530 = vshrl.u32 %v1529, 7
  %v1531 = vsub.s32 0, %v1530
  %v1532 = vrot.slane %v1100, %v1531
  %v1533 = vlaneseq
  %v1534 = vshrl.u32 %v1533, 7
  %v1535 = vsub.s32 1, %v1534
  %v1536 = vrot.slane %v1100, %v1535
  %v1537 = vlaneseq
  %v1538 = vshrl.u32 %v1537, 7
  %v1539 = vsub.s32 2, %v1538
  %v1540 = vrot.slane %v1100, %v1539
  %v1541 = vlaneseq
  %v1542 = vshrl.u32 %v1541, 7
  %v1543 = vsub.s32 3, %v1542
  %v1544 = vrot.slane %v1100, %v1543
  %v1545 = vlaneseq
  %v1546 = vshrl.u32 %v1545, 7
  %v1547 = vsub.s32 4, %v1546
  %v1548 = vrot.slane %v1100, %v1547
  %v1549 = vlaneseq
  %v1550 = vshrl.u32 %v1549, 7
  %v1551 = vsub.s32 5, %v1550
  %v1552 = vrot.slane %v1100, %v1551
  %v1553 = vlaneseq
  %v1554 = vshrl.u32 %v1553, 7
  %v1555 = vsub.s32 6, %v1554
  %v1556 = vrot.slane %v1100, %v1555
  %v1557 = vlaneseq
  %v1558 = vshrl.u32 %v1557, 7
  %v1559 = vsub.s32 7, %v1558
  %v1560 = vrot.slane %v1100, %v1559
  %v1561 = vlaneseq
  %v1562 = vshrl.u32 %v1561, 7
  %v1563 = vsub.s32 0, %v1562
  %v1564 = vrot.slane %v1229, %v1563
  %v1565 = vlaneseq
  %v1566 = vshrl.u32 %v1565, 7
  %v1567 = vsub.s32 1, %v1566
  %v1568 = vrot.slane %v1229, %v1567
  %v1569 = vlaneseq
  %v1570 = vshrl.u32 %v1569, 7
  %v1571 = vsub.s32 2, %v1570
  %v1572 = vrot.slane %v1229, %v1571
  %v1573 = vlaneseq
  %v1574 = vshrl.u32 %v1573, 7
  %v1575 = vsub.s32 3, %v1574
  %v1576 = vrot.slane %v1229, %v1575
  %v1577 = vlaneseq
  %v1578 = vshrl.u32 %v1577, 7
  %v1579 = vsub.s32 4, %v1578
  %v1580 = vrot.slane %v1229, %v1579
  %v1581 = vlaneseq
  %v1582 = vshrl.u32 %v1581, 7
  %v1583 = vsub.s32 5, %v1582
  %v1584 = vrot.slane %v1229, %v1583
  %v1585 = vlaneseq
  %v1586 = vshrl.u32 %v1585, 7
  %v1587 = vsub.s32 6, %v1586
  %v1588 = vrot.slane %v1229, %v1587
  %v1589 = vlaneseq
  %v1590 = vshrl.u32 %v1589, 7
  %v1591 = vsub.s32 7, %v1590
  %v1592 = vrot.slane %v1229, %v1591
  %v1593 = vlaneseq
  %v1594 = vshrl.u32 %v1593, 7
  %v1595 = vsub.s32 0, %v1594
  %v1596 = vrot.slane %v1233, %v1595
  %v1597 = vlaneseq
  %v1598 = vshrl.u32 %v1597, 7
  %v1599 = vsub.s32 1, %v1598
  %v1600 = vrot.slane %v1233, %v1599
  %v1601 = vlaneseq
  %v1602 = vshrl.u32 %v1601, 7
  %v1603 = vsub.s32 2, %v1602
  %v1604 = vrot.slane %v1233, %v1603
  %v1605 = vlaneseq
  %v1606 = vshrl.u32 %v1605, 7
  %v1607 = vsub.s32 3, %v1606
  %v1608 = vrot.slane %v1233, %v1607
  %v1609 = vlaneseq
  %v1610 = vshrl.u32 %v1609, 7
  %v1611 = vsub.s32 4, %v1610
  %v1612 = vrot.slane %v1233, %v1611
  %v1613 = vlaneseq
  %v1614 = vshrl.u32 %v1613, 7
  %v1615 = vsub.s32 5, %v1614
  %v1616 = vrot.slane %v1233, %v1615
  %v1617 = vlaneseq
  %v1618 = vshrl.u32 %v1617, 7
  %v1619 = vsub.s32 6, %v1618
  %v1620 = vrot.slane %v1233, %v1619
  %v1621 = vlaneseq
  %v1622 = vshrl.u32 %v1621, 7
  %v1623 = vsub.s32 7, %v1622
  %v1624 = vrot.slane %v1233, %v1623
  %v1625 = vlaneseq
  %v1626 = vshrl.u32 %v1625, 7
  %v1627 = vsub.s32 0, %v1626
  %v1628 = vrot.slane %v1230, %v1627
  %v1629 = vlaneseq
  %v1630 = vshrl.u32 %v1629, 7
  %v1631 = vsub.s32 1, %v1630
  %v1632 = vrot.slane %v1230, %v1631
  %v1633 = vlaneseq
  %v1634 = vshrl.u32 %v1633, 7
  %v1635 = vsub.s32 2, %v1634
  %v1636 = vrot.slane %v1230, %v1635
  %v1637 = vlaneseq
  %v1638 = vshrl.u32 %v1637, 7
  %v1639 = vsub.s32 3, %v1638
  %v1640 = vrot.slane %v1230, %v1639
  %v1641 = vlaneseq
  %v1642 = vshrl.u32 %v1641, 7
  %v1643 = vsub.s32 4, %v1642
  %v1644 = vrot.slane %v1230, %v1643
  %v1645 = vlaneseq
  %v1646 = vshrl.u32 %v1645, 7
  %v1647 = vsub.s32 5, %v1646
  %v1648 = vrot.slane %v1230, %v1647
  %v1649 = vlaneseq
  %v1650 = vshrl.u32 %v1649, 7
  %v1651 = vsub.s32 6, %v1650
  %v1652 = vrot.slane %v1230, %v1651
  %v1653 = vlaneseq
  %v1654 = vshrl.u32 %v1653, 7
  %v1655 = vsub.s32 7, %v1654
  %v1656 = vrot.slane %v1230, %v1655
  %v1657 = vlaneseq
  %v1658 = vshrl.u32 %v1657, 7
  %v1659 = vsub.s32 0, %v1658
  %v1660 = vrot.slane %v1234, %v1659
  %v1661 = vlaneseq
  %v1662 = vshrl.u32 %v1661, 7
  %v1663 = vsub.s32 1, %v1662
  %v1664 = vrot.slane %v1234, %v1663
  %v1665 = vlaneseq
  %v1666 = vshrl.u32 %v1665, 7
  %v1667 = vsub.s32 2, %v1666
  %v1668 = vrot.slane %v1234, %v1667
  %v1669 = vlaneseq
  %v1670 = vshrl.u32 %v1669, 7
  %v1671 = vsub.s32 3, %v1670
  %v1672 = vrot.slane %v1234, %v1671
  %v1673 = vlaneseq
  %v1674 = vshrl.u32 %v1673, 7
  %v1675 = vsub.s32 4, %v1674
  %v1676 = vrot.slane %v1234, %v1675
  %v1677 = vlaneseq
  %v1678 = vshrl.u32 %v1677, 7
  %v1679 = vsub.s32 5, %v1678
  %v1680 = vrot.slane %v1234, %v1679
  %v1681 = vlaneseq
  %v1682 = vshrl.u32 %v1681, 7
  %v1683 = vsub.s32 6, %v1682
  %v1684 = vrot.slane %v1234, %v1683
  %v1685 = vlaneseq
  %v1686 = vshrl.u32 %v1685, 7
  %v1687 = vsub.s32 7, %v1686
  %v1688 = vrot.slane %v1234, %v1687
  %v1689 = vlaneseq
  %v1690 = vshrl.u32 %v1689, 7
  %v1691 = vsub.s32 0, %v1690
  %v1692 = vrot.slane %v1231, %v1691
  %v1693 = vlaneseq
  %v1694 = vshrl.u32 %v1693, 7
  %v1695 = vsub.s32 1, %v1694
  %v1696 = vrot.slane %v1231, %v1695
  %v1697 = vlaneseq
  %v1698 = vshrl.u32 %v1697, 7
  %v1699 = vsub.s32 2, %v1698
  %v1700 = vrot.slane %v1231, %v1699
  %v1701 = vlaneseq
  %v1702 = vshrl.u32 %v1701, 7
  %v1703 = vsub.s32 3, %v1702
  %v1704 = vrot.slane %v1231, %v1703
  %v1705 = vlaneseq
  %v1706 = vshrl.u32 %v1705, 7
  %v1707 = vsub.s32 4, %v1706
  %v1708 = vrot.slane %v1231, %v1707
  %v1709 = vlaneseq
  %v1710 = vshrl.u32 %v1709, 7
  %v1711 = vsub.s32 5, %v1710
  %v1712 = vrot.slane %v1231, %v1711
  %v1713 = vlaneseq
  %v1714 = vshrl.u32 %v1713, 7
  %v1715 = vsub.s32 6, %v1714
  %v1716 = vrot.slane %v1231, %v1715
  %v1717 = vlaneseq
  %v1718 = vshrl.u32 %v1717, 7
  %v1719 = vsub.s32 7, %v1718
  %v1720 = vrot.slane %v1231, %v1719
  %v1721 = vlaneseq
  %v1722 = vshrl.u32 %v1721, 7
  %v1723 = vsub.s32 0, %v1722
  %v1724 = vrot.slane %v1235, %v1723
  %v1725 = vlaneseq
  %v1726 = vshrl.u32 %v1725, 7
  %v1727 = vsub.s32 1, %v1726
  %v1728 = vrot.slane %v1235, %v1727
  %v1729 = vlaneseq
  %v1730 = vshrl.u32 %v1729, 7
  %v1731 = vsub.s32 2, %v1730
  %v1732 = vrot.slane %v1235, %v1731
  %v1733 = vlaneseq
  %v1734 = vshrl.u32 %v1733, 7
  %v1735 = vsub.s32 3, %v1734
  %v1736 = vrot.slane %v1235, %v1735
  %v1737 = vlaneseq
  %v1738 = vshrl.u32 %v1737, 7
  %v1739 = vsub.s32 4, %v1738
  %v1740 = vrot.slane %v1235, %v1739
  %v1741 = vlaneseq
  %v1742 = vshrl.u32 %v1741, 7
  %v1743 = vsub.s32 5, %v1742
  %v1744 = vrot.slane %v1235, %v1743
  %v1745 = vlaneseq
  %v1746 = vshrl.u32 %v1745, 7
  %v1747 = vsub.s32 6, %v1746
  %v1748 = vrot.slane %v1235, %v1747
  %v1749 = vlaneseq
  %v1750 = vshrl.u32 %v1749, 7
  %v1751 = vsub.s32 7, %v1750
  %v1752 = vrot.slane %v1235, %v1751
  %v1753 = vlaneseq
  %v1754 = vshrl.u32 %v1753, 7
  %v1755 = vsub.s32 0, %v1754
  %v1756 = vrot.slane %v1232, %v1755
  %v1757 = vlaneseq
  %v1758 = vshrl.u32 %v1757, 7
  %v1759 = vsub.s32 1, %v1758
  %v1760 = vrot.slane %v1232, %v1759
  %v1761 = vlaneseq
  %v1762 = vshrl.u32 %v1761, 7
  %v1763 = vsub.s32 2, %v1762
  %v1764 = vrot.slane %v1232, %v1763
  %v1765 = vlaneseq
  %v1766 = vshrl.u32 %v1765, 7
  %v1767 = vsub.s32 3, %v1766
  %v1768 = vrot.slane %v1232, %v1767
  %v1769 = vlaneseq
  %v1770 = vshrl.u32 %v1769, 7
  %v1771 = vsub.s32 4, %v1770
  %v1772 = vrot.slane %v1232, %v1771
  %v1773 = vlaneseq
  %v1774 = vshrl.u32 %v1773, 7
  %v1775 = vsub.s32 5, %v1774
  %v1776 = vrot.slane %v1232, %v1775
  %v1777 = vlaneseq
  %v1778 = vshrl.u32 %v1777, 7
  %v1779 = vsub.s32 6, %v1778
  %v1780 = vrot.slane %v1232, %v1779
  %v1781 = vlaneseq
  %v1782 = vshrl.u32 %v1781, 7
  %v1783 = vsub.s32 7, %v1782
  %v1784 = vrot.slane %v1232, %v1783
  %v1785 = vlaneseq
  %v1786 = vshrl.u32 %v1785, 7
  %v1787 = vsub.s32 0, %v1786
  %v1788 = vrot.slane %v1236, %v1787
  %v1789 = vlaneseq
  %v1790 = vshrl.u32 %v1789, 7
  %v1791 = vsub.s32 1, %v1790
  %v1792 = vrot.slane %v1236, %v1791
  %v1793 = vlaneseq
  %v1794 = vshrl.u32 %v1793, 7
  %v1795 = vsub.s32 2, %v1794
  %v1796 = vrot.slane %v1236, %v1795
  %v1797 = vlaneseq
  %v1798 = vshrl.u32 %v1797, 7
  %v1799 = vsub.s32 3, %v1798
  %v1800 = vrot.slane %v1236, %v1799
  %v1801 = vlaneseq
  %v1802 = vshrl.u32 %v1801, 7
  %v1803 = vsub.s32 4, %v1802
  %v1804 = vrot.slane %v1236, %v1803
  %v1805 = vlaneseq
  %v1806 = vshrl.u32 %v1805, 7
  %v1807 = vsub.s32 5, %v1806
  %v1808 = vrot.slane %v1236, %v1807
  %v1809 = vlaneseq
  %v1810 = vshrl.u32 %v1809, 7
  %v1811 = vsub.s32 6, %v1810
  %v1812 = vrot.slane %v1236, %v1811
  %v1813 = vlaneseq
  %v1814 = vshrl.u32 %v1813, 7
  %v1815 = vsub.s32 7, %v1814
  %v1816 = vrot.slane %v1236, %v1815
  %v1817 = vlaneseq
  %v1818 = vshrl.u32 %v1817, 7
  %v1819 = vsub.s32 0, %v1818
  %v1820 = vrot.slane %v1301, %v1819
  %v1821 = vlaneseq
  %v1822 = vshrl.u32 %v1821, 7
  %v1823 = vsub.s32 1, %v1822
  %v1824 = vrot.slane %v1301, %v1823
  %v1825 = vlaneseq
  %v1826 = vshrl.u32 %v1825, 7
  %v1827 = vsub.s32 2, %v1826
  %v1828 = vrot.slane %v1301, %v1827
  %v1829 = vlaneseq
  %v1830 = vshrl.u32 %v1829, 7
  %v1831 = vsub.s32 3, %v1830
  %v1832 = vrot.slane %v1301, %v1831
  %v1833 = vlaneseq
  %v1834 = vshrl.u32 %v1833, 7
  %v1835 = vsub.s32 4, %v1834
  %v1836 = vrot.slane %v1301, %v1835
  %v1837 = vlaneseq
  %v1838 = vshrl.u32 %v1837, 7
  %v1839 = vsub.s32 5, %v1838
  %v1840 = vrot.slane %v1301, %v1839
  %v1841 = vlaneseq
  %v1842 = vshrl.u32 %v1841, 7
  %v1843 = vsub.s32 6, %v1842
  %v1844 = vrot.slane %v1301, %v1843
  %v1845 = vlaneseq
  %v1846 = vshrl.u32 %v1845, 7
  %v1847 = vsub.s32 7, %v1846
  %v1848 = vrot.slane %v1301, %v1847
  %v1849 = vlaneseq
  %v1850 = vshrl.u32 %v1849, 7
  %v1851 = vsub.s32 0, %v1850
  %v1852 = vrot.slane %v1303, %v1851
  %v1853 = vlaneseq
  %v1854 = vshrl.u32 %v1853, 7
  %v1855 = vsub.s32 1, %v1854
  %v1856 = vrot.slane %v1303, %v1855
  %v1857 = vlaneseq
  %v1858 = vshrl.u32 %v1857, 7
  %v1859 = vsub.s32 2, %v1858
  %v1860 = vrot.slane %v1303, %v1859
  %v1861 = vlaneseq
  %v1862 = vshrl.u32 %v1861, 7
  %v1863 = vsub.s32 3, %v1862
  %v1864 = vrot.slane %v1303, %v1863
  %v1865 = vlaneseq
  %v1866 = vshrl.u32 %v1865, 7
  %v1867 = vsub.s32 4, %v1866
  %v1868 = vrot.slane %v1303, %v1867
  %v1869 = vlaneseq
  %v1870 = vshrl.u32 %v1869, 7
  %v1871 = vsub.s32 5, %v1870
  %v1872 = vrot.slane %v1303, %v1871
  %v1873 = vlaneseq
  %v1874 = vshrl.u32 %v1873, 7
  %v1875 = vsub.s32 6, %v1874
  %v1876 = vrot.slane %v1303, %v1875
  %v1877 = vlaneseq
  %v1878 = vshrl.u32 %v1877, 7
  %v1879 = vsub.s32 7, %v1878
  %v1880 = vrot.slane %v1303, %v1879
  %v1881 = vlaneseq
  %v1882 = vshrl.u32 %v1881, 7
  %v1883 = vsub.s32 0, %v1882
  %v1884 = vrot.slane %v1302, %v1883
  %v1885 = vlaneseq
  %v1886 = vshrl.u32 %v1885, 7
  %v1887 = vsub.s32 1, %v1886
  %v1888 = vrot.slane %v1302, %v1887
  %v1889 = vlaneseq
  %v1890 = vshrl.u32 %v1889, 7
  %v1891 = vsub.s32 2, %v1890
  %v1892 = vrot.slane %v1302, %v1891
  %v1893 = vlaneseq
  %v1894 = vshrl.u32 %v1893, 7
  %v1895 = vsub.s32 3, %v1894
  %v1896 = vrot.slane %v1302, %v1895
  %v1897 = vlaneseq
  %v1898 = vshrl.u32 %v1897, 7
  %v1899 = vsub.s32 4, %v1898
  %v1900 = vrot.slane %v1302, %v1899
  %v1901 = vlaneseq
  %v1902 = vshrl.u32 %v1901, 7
  %v1903 = vsub.s32 5, %v1902
  %v1904 = vrot.slane %v1302, %v1903
  %v1905 = vlaneseq
  %v1906 = vshrl.u32 %v1905, 7
  %v1907 = vsub.s32 6, %v1906
  %v1908 = vrot.slane %v1302, %v1907
  %v1909 = vlaneseq
  %v1910 = vshrl.u32 %v1909, 7
  %v1911 = vsub.s32 7, %v1910
  %v1912 = vrot.slane %v1302, %v1911
  %v1913 = vlaneseq
  %v1914 = vshrl.u32 %v1913, 7
  %v1915 = vsub.s32 0, %v1914
  %v1916 = vrot.slane %v1304, %v1915
  %v1917 = vlaneseq
  %v1918 = vshrl.u32 %v1917, 7
  %v1919 = vsub.s32 1, %v1918
  %v1920 = vrot.slane %v1304, %v1919
  %v1921 = vlaneseq
  %v1922 = vshrl.u32 %v1921, 7
  %v1923 = vsub.s32 2, %v1922
  %v1924 = vrot.slane %v1304, %v1923
  %v1925 = vlaneseq
  %v1926 = vshrl.u32 %v1925, 7
  %v1927 = vsub.s32 3, %v1926
  %v1928 = vrot.slane %v1304, %v1927
  %v1929 = vlaneseq
  %v1930 = vshrl.u32 %v1929, 7
  %v1931 = vsub.s32 4, %v1930
  %v1932 = vrot.slane %v1304, %v1931
  %v1933 = vlaneseq
  %v1934 = vshrl.u32 %v1933, 7
  %v1935 = vsub.s32 5, %v1934
  %v1936 = vrot.slane %v1304, %v1935
  %v1937 = vlaneseq
  %v1938 = vshrl.u32 %v1937, 7
  %v1939 = vsub.s32 6, %v1938
  %v1940 = vrot.slane %v1304, %v1939
  %v1941 = vlaneseq
  %v1942 = vshrl.u32 %v1941, 7
  %v1943 = vsub.s32 7, %v1942
  %v1944 = vrot.slane %v1304, %v1943
  %v2105 = vadd.f32 %v242, %v1308
  %v2106 = vadd.f32 %v244, %v1312
  %v2107 = vadd.f32 %v295, %v1316
  %v2108 = vadd.f32 %v297, %v1320
  %v2109 = vadd.f32 %v348, %v1324
  %v2110 = vadd.f32 %v350, %v1328
  %v2111 = vadd.f32 %v401, %v1332
  %v2112 = vadd.f32 %v403, %v1336
  %v2113 = vadd.f32 %v242, %v1340
  %v2114 = vadd.f32 %v244, %v1344
  %v2115 = vadd.f32 %v295, %v1348
  %v2116 = vadd.f32 %v297, %v1352
  %v2117 = vadd.f32 %v348, %v1356
  %v2118 = vadd.f32 %v350, %v1360
  %v2119 = vadd.f32 %v401, %v1364
  %v2120 = vadd.f32 %v403, %v1368
  %v2121 = vadd.f32 %v242, %v1372
  %v2122 = vadd.f32 %v244, %v1376
  %v2123 = vadd.f32 %v295, %v1380
  %v2124 = vadd.f32 %v297, %v1384
  %v2125 = vadd.f32 %v348, %v1388
  %v2126 = vadd.f32 %v350, %v1392
  %v2127 = vadd.f32 %v401, %v1396
  %v2128 = vadd.f32 %v403, %v1400
  %v2129 = vadd.f32 %v242, %v1404
  %v2130 = vadd.f32 %v244, %v1408
  %v2131 = vadd.f32 %v295, %v1412
  %v2132 = vadd.f32 %v297, %v1416
  %v2133 = vadd.f32 %v348, %v1420
  %v2134 = vadd.f32 %v350, %v1424
  %v2135 = vadd.f32 %v401, %v1428
  %v2136 = vadd.f32 %v403, %v1432
  %v2137 = vadd.f32 %v242, %v1436
  %v2138 = vadd.f32 %v244, %v1440
  %v2139 = vadd.f32 %v295, %v1444
  %v2140 = vadd.f32 %v297, %v1448
  %v2141 = vadd.f32 %v348, %v1452
  %v2142 = vadd.f32 %v350, %v1456
  %v2143 = vadd.f32 %v401, %v1460
  %v2144 = vadd.f32 %v403, %v1464
  %v2145 = vadd.f32 %v246, %v1468
  %v2146 = vadd.f32 %v248, %v1472
  %v2147 = vadd.f32 %v299, %v1476
  %v2148 = vadd.f32 %v301, %v1480
  %v2149 = vadd.f32 %v352, %v1484
  %v2150 = vadd.f32 %v354, %v1488
  %v2151 = vadd.f32 %v405, %v1492
  %v2152 = vadd.f32 %v407, %v1496
  %v2153 = vadd.f32 %v246, %v1500
  %v2154 = vadd.f32 %v248, %v1504
  %v2155 = vadd.f32 %v299, %v1508
  %v2156 = vadd.f32 %v301, %v1512
  %v2157 = vadd.f32 %v352, %v1516
  %v2158 = vadd.f32 %v354, %v1520
  %v2159 = vadd.f32 %v405, %v1524
  %v2160 = vadd.f32 %v407, %v1528
  %v2161 = vadd.f32 %v246, %v1532
  %v2162 = vadd.f32 %v248, %v1536
  %v2163 = vadd.f32 %v299, %v1540
  %v2164 = vadd.f32 %v301, %v1544
  %v2165 = vadd.f32 %v352, %v1548
  %v2166 = vadd.f32 %v354, %v1552
  %v2167 = vadd.f32 %v405, %v1556
  %v2168 = vadd.f32 %v407, %v1560
  %v2169 = vadd.f32 %v246, %v1564
  %v2170 = vadd.f32 %v248, %v1568
  %v2171 = vadd.f32 %v299, %v1572
  %v2172 = vadd.f32 %v301, %v1576
  %v2173 = vadd.f32 %v352, %v1580
  %v2174 = vadd.f32 %v354, %v1584
  %v2175 = vadd.f32 %v405, %v1588
  %v2176 = vadd.f32 %v407, %v1592
  %v2177 = vadd.f32 %v246, %v1596
  %v2178 = vadd.f32 %v248, %v1600
  %v2179 = vadd.f32 %v299, %v1604
  %v2180 = vadd.f32 %v301, %v1608
  %v2181 = vadd.f32 %v352, %v1612
  %v2182 = vadd.f32 %v354, %v1616
  %v2183 = vadd.f32 %v405, %v1620
  %v2184 = vadd.f32 %v407, %v1624
  %v2185 = vadd.f32 %v252, %v1628
  %v2186 = vadd.f32 %v254, %v1632
  %v2187 = vadd.f32 %v305, %v1636
  %v2188 = vadd.f32 %v307, %v1640
  %v2189 = vadd.f32 %v358, %v1644
  %v2190 = vadd.f32 %v360, %v1648
  %v2191 = vadd.f32 %v411, %v1652
  %v2192 = vadd.f32 %v413, %v1656
  %v2193 = vadd.f32 %v252, %v1660
  %v2194 = vadd.f32 %v254, %v1664
  %v2195 = vadd.f32 %v305, %v1668
  %v2196 = vadd.f32 %v307, %v1672
  %v2197 = vadd.f32 %v358, %v1676
  %v2198 = vadd.f32 %v360, %v1680
  %v2199 = vadd.f32 %v411, %v1684
  %v2200 = vadd.f32 %v413, %v1688
  %v2201 = vadd.f32 %v252, %v1692
  %v2202 = vadd.f32 %v254, %v1696
  %v2203 = vadd.f32 %v305, %v1700
  %v2204 = vadd.f32 %v307, %v1704
  %v2205 = vadd.f32 %v358, %v1708
  %v2206 = vadd.f32 %v360, %v1712
  %v2207 = vadd.f32 %v411, %v1716
  %v2208 = vadd.f32 %v413, %v1720
  %v2209 = vadd.f32 %v252, %v1724
  %v2210 = vadd.f32 %v254, %v1728
  %v2211 = vadd.f32 %v305, %v1732
  %v2212 = vadd.f32 %v307, %v1736
  %v2213 = vadd.f32 %v358, %v1740
  %v2214 = vadd.f32 %v360, %v1744
  %v2215 = vadd.f32 %v411, %v1748
  %v2216 = vadd.f32 %v413, %v1752
  %v2217 = vadd.f32 %v252, %v1756
  %v2218 = vadd.f32 %v254, %v1760
  %v2219 = vadd.f32 %v305, %v1764
  %v2220 = vadd.f32 %v307, %v1768
  %v2221 = vadd.f32 %v358, %v1772
  %v2222 = vadd.f32 %v360, %v1776
  %v2223 = vadd.f32 %v411, %v1780
  %v2224 = vadd.f32 %v413, %v1784
  %v2225 = vadd.f32 %v256, %v1788
  %v2226 = vadd.f32 %v258, %v1792
  %v2227 = vadd.f32 %v309, %v1796
  %v2228 = vadd.f32 %v311, %v1800
  %v2229 = vadd.f32 %v362, %v1804
  %v2230 = vadd.f32 %v364, %v1808
  %v2231 = vadd.f32 %v415, %v1812
  %v2232 = vadd.f32 %v417, %v1816
  %v2233 = vadd.f32 %v256, %v1820
  %v2234 = vadd.f32 %v258, %v1824
  %v2235 = vadd.f32 %v309, %v1828
  %v2236 = vadd.f32 %v311, %v1832
  %v2237 = vadd.f32 %v362, %v1836
  %v2238 = vadd.f32 %v364, %v1840
  %v2239 = vadd.f32 %v415, %v1844
  %v2240 = vadd.f32 %v417, %v1848
  %v2241 = vadd.f32 %v256, %v1852
  %v2242 = vadd.f32 %v258, %v1856
  %v2243 = vadd.f32 %v309, %v1860
  %v2244 = vadd.f32 %v311, %v1864
  %v2245 = vadd.f32 %v362, %v1868
  %v2246 = vadd.f32 %v364, %v1872
  %v2247 = vadd.f32 %v415, %v1876
  %v2248 = vadd.f32 %v417, %v1880
  %v2249 = vadd.f32 %v256, %v1884
  %v2250 = vadd.f32 %v258, %v1888
  %v2251 = vadd.f32 %v309, %v1892
  %v2252 = vadd.f32 %v311, %v1896
  %v2253 = vadd.f32 %v362, %v1900
  %v2254 = vadd.f32 %v364, %v1904
  %v2255 = vadd.f32 %v415, %v1908
  %v2256 = vadd.f32 %v417, %v1912
  %v2257 = vadd.f32 %v256, %v1916
  %v2258 = vadd.f32 %v258, %v1920
  %v2259 = vadd.f32 %v309, %v1924
  %v2260 = vadd.f32 %v311, %v1928
  %v2261 = vadd.f32 %v362, %v1932
  %v2262 = vadd.f32 %v364, %v1936
  %v2263 = vadd.f32 %v415, %v1940
  %v2264 = vadd.f32 %v417, %v1944
  %v2265 = vtanh.pop %v2105
  %v2266 = vtanh.pop %v2106
  %v2267 = vtanh.pop %v2107
  %v2268 = vtanh.pop %v2108
  %v2269 = vtanh.pop %v2109
  %v2270 = vtanh.pop %v2110
  %v2271 = vtanh.pop %v2111
  %v2272 = vtanh.pop %v2112
  %v2273 = vtanh.pop %v2113
  %v2274 = vtanh.pop %v2114
  %v2275 = vtanh.pop %v2115
  %v2276 = vtanh.pop %v2116
  %v2277 = vtanh.pop %v2117
  %v2278 = vtanh.pop %v2118
  %v2279 = vtanh.pop %v2119
  %v2280 = vtanh.pop %v2120
  %v2281 = vtanh.pop %v2121
  %v2282 = vtanh.pop %v2122
  %v2283 = vtanh.pop %v2123
  %v2284 = vtanh.pop %v2124
  %v2285 = vtanh.pop %v2125
  %v2286 = vtanh.pop %v2126
  %v2287 = vtanh.pop %v2127
  %v2288 = vtanh.pop %v2128
  %v2289 = vtanh.pop %v2129
  %v2290 = vtanh.pop %v2130
  %v2291 = vtanh.pop %v2131
  %v2292 = vtanh.pop %v2132
  %v2293 = vtanh.pop %v2133
  %v2294 = vtanh.pop %v2134
  %v2295 = vtanh.pop %v2135
  %v2296 = vtanh.pop %v2136
  %v2297 = vtanh.pop %v2137
  %v2298 = vtanh.pop %v2138
  %v2299 = vtanh.pop %v2139
  %v2300 = vtanh.pop %v2140
  %v2301 = vtanh.pop %v2141
  %v2302 = vtanh.pop %v2142
  %v2303 = vtanh.pop %v2143
  %v2304 = vtanh.pop %v2144
  %v2305 = vtanh.pop %v2145
  %v2306 = vtanh.pop %v2146
  %v2307 = vtanh.pop %v2147
  %v2308 = vtanh.pop %v2148
  %v2309 = vtanh.pop %v2149
  %v2310 = vtanh.pop %v2150
  %v2311 = vtanh.pop %v2151
  %v2312 = vtanh.pop %v2152
  %v2313 = vtanh.pop %v2153
  %v2314 = vtanh.pop %v2154
  %v2315 = vtanh.pop %v2155
  %v2316 = vtanh.pop %v2156
  %v2317 = vtanh.pop %v2157
  %v2318 = vtanh.pop %v2158
  %v2319 = vtanh.pop %v2159
  %v2320 = vtanh.pop %v2160
  %v2321 = vtanh.pop %v2161
  %v2322 = vtanh.pop %v2162
  %v2323 = vtanh.pop %v2163
  %v2324 = vtanh.pop %v2164
  %v2325 = vtanh.pop %v2165
  %v2326 = vtanh.pop %v2166
  %v2327 = vtanh.pop %v2167
  %v2328 = vtanh.pop %v2168
  %v2329 = vtanh.pop %v2169
  %v2330 = vtanh.pop %v2170
  %v2331 = vtanh.pop %v2171
  %v2332 = vtanh.pop %v2172
  %v2333 = vtanh.pop %v2173
  %v2334 = vtanh.pop %v2174
  %v2335 = vtanh.pop %v2175
  %v2336 = vtanh.pop %v2176
  %v2337 = vtanh.pop %v2177
  %v2338 = vtanh.pop %v2178
  %v2339 = vtanh.pop %v2179
  %v2340 = vtanh.pop %v2180
  %v2341 = vtanh.pop %v2181
  %v2342 = vtanh.pop %v2182
  %v2343 = vtanh.pop %v2183
  %v2344 = vtanh.pop %v2184
  %v2345 = vtanh.pop %v2185
  %v2346 = vtanh.pop %v2186
  %v2347 = vtanh.pop %v2187
  %v2348 = vtanh.pop %v2188
  %v2349 = vtanh.pop %v2189
  %v2350 = vtanh.pop %v2190
  %v2351 = vtanh.pop %v2191
  %v2352 = vtanh.pop %v2192
  %v2353 = vtanh.pop %v2193
  %v2354 = vtanh.pop %v2194
  %v2355 = vtanh.pop %v2195
  %v2356 = vtanh.pop %v2196
  %v2357 = vtanh.pop %v2197
  %v2358 = vtanh.pop %v2198
  %v2359 = vtanh.pop %v2199
  %v2360 = vtanh.pop %v2200
  %v2361 = vtanh.pop %v2201
  %v2362 = vtanh.pop %v2202
  %v2363 = vtanh.pop %v2203
  %v2364 = vtanh.pop %v2204
  %v2365 = vtanh.pop %v2205
  %v2366 = vtanh.pop %v2206
  %v2367 = vtanh.pop %v2207
  %v2368 = vtanh.pop %v2208
  %v2369 = vtanh.pop %v2209
  %v2370 = vtanh.pop %v2210
  %v2371 = vtanh.pop %v2211
  %v2372 = vtanh.pop %v2212
  %v2373 = vtanh.pop %v2213
  %v2374 = vtanh.pop %v2214
  %v2375 = vtanh.pop %v2215
  %v2376 = vtanh.pop %v2216
  %v2377 = vtanh.pop %v2217
  %v2378 = vtanh.pop %v2218
  %v2379 = vtanh.pop %v2219
  %v2380 = vtanh.pop %v2220
  %v2381 = vtanh.pop %v2221
  %v2382 = vtanh.pop %v2222
  %v2383 = vtanh.pop %v2223
  %v2384 = vtanh.pop %v2224
  %v2385 = vtanh.pop %v2225
  %v2386 = vtanh.pop %v2226
  %v2387 = vtanh.pop %v2227
  %v2388 = vtanh.pop %v2228
  %v2389 = vtanh.pop %v2229
  %v2390 = vtanh.pop %v2230
  %v2391 = vtanh.pop %v2231
  %v2392 = vtanh.pop %v2232
  %v2393 = vtanh.pop %v2233
  %v2394 = vtanh.pop %v2234
  %v2395 = vtanh.pop %v2235
  %v2396 = vtanh.pop %v2236
  %v2397 = vtanh.pop %v2237
  %v2398 = vtanh.pop %v2238
  %v2399 = vtanh.pop %v2239
  %v2400 = vtanh.pop %v2240
  %v2401 = vtanh.pop %v2241
  %v2402 = vtanh.pop %v2242
  %v2403 = vtanh.pop %v2243
  %v2404 = vtanh.pop %v2244
  %v2405 = vtanh.pop %v2245
  %v2406 = vtanh.pop %v2246
  %v2407 = vtanh.pop %v2247
  %v2408 = vtanh.pop %v2248
  %v2409 = vtanh.pop %v2249
  %v2410 = vtanh.pop %v2250
  %v2411 = vtanh.pop %v2251
  %v2412 = vtanh.pop %v2252
  %v2413 = vtanh.pop %v2253
  %v2414 = vtanh.pop %v2254
  %v2415 = vtanh.pop %v2255
  %v2416 = vtanh.pop %v2256
  %v2417 = vtanh.pop %v2257
  %v2418 = vtanh.pop %v2258
  %v2419 = vtanh.pop %v2259
  %v2420 = vtanh.pop %v2260
  %v2421 = vtanh.pop %v2261
  %v2422 = vtanh.pop %v2262
  %v2423 = vtanh.pop %v2263
  %v2424 = vtanh.pop %v2264
  %v2425 = vld [vmem:[%s10] sm:$0xff]
  %v2427 = vlaneseq
  %v2428 = vshrl.u32 %v2427, 7
  %v2429 = vsub.s32 0, %v2428
  %v2430 = vrot.slane %v2425, %v2429
  %v2431 = vlaneseq
  %v2432 = vshrl.u32 %v2431, 7
  %v2433 = vsub.s32 1, %v2432
  %v2434 = vrot.slane %v2425, %v2433
  %v2435 = vlaneseq
  %v2436 = vshrl.u32 %v2435, 7
  %v2437 = vsub.s32 2, %v2436
  %v2438 = vrot.slane %v2425, %v2437
  %v2439 = vlaneseq
  %v2440 = vshrl.u32 %v2439, 7
  %v2441 = vsub.s32 3, %v2440
  %v2442 = vrot.slane %v2425, %v2441
  %v2443 = vlaneseq
  %v2444 = vshrl.u32 %v2443, 7
  %v2445 = vsub.s32 4, %v2444
  %v2446 = vrot.slane %v2425, %v2445
  %v2447 = vlaneseq
  %v2448 = vshrl.u32 %v2447, 7
  %v2449 = vsub.s32 5, %v2448
  %v2450 = vrot.slane %v2425, %v2449
  %v2451 = vlaneseq
  %v2452 = vshrl.u32 %v2451, 7
  %v2453 = vsub.s32 6, %v2452
  %v2454 = vrot.slane %v2425, %v2453
  %v2455 = vlaneseq
  %v2456 = vshrl.u32 %v2455, 7
  %v2457 = vsub.s32 7, %v2456
  %v2458 = vrot.slane %v2425, %v2457
  %v2467 = vmul.f32 %v2265, %v2430
  %v2468 = vmul.f32 %v2266, %v2434
  %v2469 = vmul.f32 %v2267, %v2438
  %v2470 = vmul.f32 %v2268, %v2442
  %v2471 = vmul.f32 %v2269, %v2446
  %v2472 = vmul.f32 %v2270, %v2450
  %v2473 = vmul.f32 %v2271, %v2454
  %v2474 = vmul.f32 %v2272, %v2458
  %v2475 = vmul.f32 %v2273, %v2430
  %v2476 = vmul.f32 %v2274, %v2434
  %v2477 = vmul.f32 %v2275, %v2438
  %v2478 = vmul.f32 %v2276, %v2442
  %v2479 = vmul.f32 %v2277, %v2446
  %v2480 = vmul.f32 %v2278, %v2450
  %v2481 = vmul.f32 %v2279, %v2454
  %v2482 = vmul.f32 %v2280, %v2458
  %v2483 = vmul.f32 %v2281, %v2430
  %v2484 = vmul.f32 %v2282, %v2434
  %v2485 = vmul.f32 %v2283, %v2438
  %v2486 = vmul.f32 %v2284, %v2442
  %v2487 = vmul.f32 %v2285, %v2446
  %v2488 = vmul.f32 %v2286, %v2450
  %v2489 = vmul.f32 %v2287, %v2454
  %v2490 = vmul.f32 %v2288, %v2458
  %v2491 = vmul.f32 %v2289, %v2430
  %v2492 = vmul.f32 %v2290, %v2434
  %v2493 = vmul.f32 %v2291, %v2438
  %v2494 = vmul.f32 %v2292, %v2442
  %v2495 = vmul.f32 %v2293, %v2446
  %v2496 = vmul.f32 %v2294, %v2450
  %v2497 = vmul.f32 %v2295, %v2454
  %v2498 = vmul.f32 %v2296, %v2458
  %v2499 = vmul.f32 %v2297, %v2430
  %v2500 = vmul.f32 %v2298, %v2434
  %v2501 = vmul.f32 %v2299, %v2438
  %v2502 = vmul.f32 %v2300, %v2442
  %v2503 = vmul.f32 %v2301, %v2446
  %v2504 = vmul.f32 %v2302, %v2450
  %v2505 = vmul.f32 %v2303, %v2454
  %v2506 = vmul.f32 %v2304, %v2458
  %v2507 = vmul.f32 %v2305, %v2430
  %v2508 = vmul.f32 %v2306, %v2434
  %v2509 = vmul.f32 %v2307, %v2438
  %v2510 = vmul.f32 %v2308, %v2442
  %v2511 = vmul.f32 %v2309, %v2446
  %v2512 = vmul.f32 %v2310, %v2450
  %v2513 = vmul.f32 %v2311, %v2454
  %v2514 = vmul.f32 %v2312, %v2458
  %v2515 = vmul.f32 %v2313, %v2430
  %v2516 = vmul.f32 %v2314, %v2434
  %v2517 = vmul.f32 %v2315, %v2438
  %v2518 = vmul.f32 %v2316, %v2442
  %v2519 = vmul.f32 %v2317, %v2446
  %v2520 = vmul.f32 %v2318, %v2450
  %v2521 = vmul.f32 %v2319, %v2454
  %v2522 = vmul.f32 %v2320, %v2458
  %v2523 = vmul.f32 %v2321, %v2430
  %v2524 = vmul.f32 %v2322, %v2434
  %v2525 = vmul.f32 %v2323, %v2438
  %v2526 = vmul.f32 %v2324, %v2442
  %v2527 = vmul.f32 %v2325, %v2446
  %v2528 = vmul.f32 %v2326, %v2450
  %v2529 = vmul.f32 %v2327, %v2454
  %v2530 = vmul.f32 %v2328, %v2458
  %v2531 = vmul.f32 %v2329, %v2430
  %v2532 = vmul.f32 %v2330, %v2434
  %v2533 = vmul.f32 %v2331, %v2438
  %v2534 = vmul.f32 %v2332, %v2442
  %v2535 = vmul.f32 %v2333, %v2446
  %v2536 = vmul.f32 %v2334, %v2450
  %v2537 = vmul.f32 %v2335, %v2454
  %v2538 = vmul.f32 %v2336, %v2458
  %v2539 = vmul.f32 %v2337, %v2430
  %v2540 = vmul.f32 %v2338, %v2434
  %v2541 = vmul.f32 %v2339, %v2438
  %v2542 = vmul.f32 %v2340, %v2442
  %v2543 = vmul.f32 %v2341, %v2446
  %v2544 = vmul.f32 %v2342, %v2450
  %v2545 = vmul.f32 %v2343, %v2454
  %v2546 = vmul.f32 %v2344, %v2458
  %v2547 = vmul.f32 %v2345, %v2430
  %v2548 = vmul.f32 %v2346, %v2434
  %v2549 = vmul.f32 %v2347, %v2438
  %v2550 = vmul.f32 %v2348, %v2442
  %v2551 = vmul.f32 %v2349, %v2446
  %v2552 = vmul.f32 %v2350, %v2450
  %v2553 = vmul.f32 %v2351, %v2454
  %v2554 = vmul.f32 %v2352, %v2458
  %v2555 = vmul.f32 %v2353, %v2430
  %v2556 = vmul.f32 %v2354, %v2434
  %v2557 = vmul.f32 %v2355, %v2438
  %v2558 = vmul.f32 %v2356, %v2442
  %v2559 = vmul.f32 %v2357, %v2446
  %v2560 = vmul.f32 %v2358, %v2450
  %v2561 = vmul.f32 %v2359, %v2454
  %v2562 = vmul.f32 %v2360, %v2458
  %v2563 = vmul.f32 %v2361, %v2430
  %v2564 = vmul.f32 %v2362, %v2434
  %v2565 = vmul.f32 %v2363, %v2438
  %v2566 = vmul.f32 %v2364, %v2442
  %v2567 = vmul.f32 %v2365, %v2446
  %v2568 = vmul.f32 %v2366, %v2450
  %v2569 = vmul.f32 %v2367, %v2454
  %v2570 = vmul.f32 %v2368, %v2458
  %v2571 = vmul.f32 %v2369, %v2430
  %v2572 = vmul.f32 %v2370, %v2434
  %v2573 = vmul.f32 %v2371, %v2438
  %v2574 = vmul.f32 %v2372, %v2442
  %v2575 = vmul.f32 %v2373, %v2446
  %v2576 = vmul.f32 %v2374, %v2450
  %v2577 = vmul.f32 %v2375, %v2454
  %v2578 = vmul.f32 %v2376, %v2458
  %v2579 = vmul.f32 %v2377, %v2430
  %v2580 = vmul.f32 %v2378, %v2434
  %v2581 = vmul.f32 %v2379, %v2438
  %v2582 = vmul.f32 %v2380, %v2442
  %v2583 = vmul.f32 %v2381, %v2446
  %v2584 = vmul.f32 %v2382, %v2450
  %v2585 = vmul.f32 %v2383, %v2454
  %v2586 = vmul.f32 %v2384, %v2458
  %v2587 = vmul.f32 %v2385, %v2430
  %v2588 = vmul.f32 %v2386, %v2434
  %v2589 = vmul.f32 %v2387, %v2438
  %v2590 = vmul.f32 %v2388, %v2442
  %v2591 = vmul.f32 %v2389, %v2446
  %v2592 = vmul.f32 %v2390, %v2450
  %v2593 = vmul.f32 %v2391, %v2454
  %v2594 = vmul.f32 %v2392, %v2458
  %v2595 = vmul.f32 %v2393, %v2430
  %v2596 = vmul.f32 %v2394, %v2434
  %v2597 = vmul.f32 %v2395, %v2438
  %v2598 = vmul.f32 %v2396, %v2442
  %v2599 = vmul.f32 %v2397, %v2446
  %v2600 = vmul.f32 %v2398, %v2450
  %v2601 = vmul.f32 %v2399, %v2454
  %v2602 = vmul.f32 %v2400, %v2458
  %v2603 = vmul.f32 %v2401, %v2430
  %v2604 = vmul.f32 %v2402, %v2434
  %v2605 = vmul.f32 %v2403, %v2438
  %v2606 = vmul.f32 %v2404, %v2442
  %v2607 = vmul.f32 %v2405, %v2446
  %v2608 = vmul.f32 %v2406, %v2450
  %v2609 = vmul.f32 %v2407, %v2454
  %v2610 = vmul.f32 %v2408, %v2458
  %v2611 = vmul.f32 %v2409, %v2430
  %v2612 = vmul.f32 %v2410, %v2434
  %v2613 = vmul.f32 %v2411, %v2438
  %v2614 = vmul.f32 %v2412, %v2442
  %v2615 = vmul.f32 %v2413, %v2446
  %v2616 = vmul.f32 %v2414, %v2450
  %v2617 = vmul.f32 %v2415, %v2454
  %v2618 = vmul.f32 %v2416, %v2458
  %v2619 = vmul.f32 %v2417, %v2430
  %v2620 = vmul.f32 %v2418, %v2434
  %v2621 = vmul.f32 %v2419, %v2438
  %v2622 = vmul.f32 %v2420, %v2442
  %v2623 = vmul.f32 %v2421, %v2446
  %v2624 = vmul.f32 %v2422, %v2450
  %v2625 = vmul.f32 %v2423, %v2454
  %v2626 = vmul.f32 %v2424, %v2458
  %v2627 = vadd.f32 %v2467, %v2468
  %v2628 = vadd.f32 %v2627, %v2469
  %v2629 = vadd.f32 %v2628, %v2470
  %v2630 = vadd.f32 %v2629, %v2471
  %v2631 = vadd.f32 %v2630, %v2472
  %v2632 = vadd.f32 %v2631, %v2473
  %v2633 = vadd.f32 %v2632, %v2474
  %2634 = vadd.xlane.f32.xlu0 %v2633
  %v2635 = vpop.xlane.xlu0 %2634
  %v2636 = vadd.f32 %v2475, %v2476
  %v2637 = vadd.f32 %v2636, %v2477
  %v2638 = vadd.f32 %v2637, %v2478
  %v2639 = vadd.f32 %v2638, %v2479
  %v2640 = vadd.f32 %v2639, %v2480
  %v2641 = vadd.f32 %v2640, %v2481
  %v2642 = vadd.f32 %v2641, %v2482
  %2643 = vadd.xlane.f32.xlu0 %v2642
  %v2644 = vpop.xlane.xlu0 %2643
  %v2645 = vadd.f32 %v2483, %v2484
  %v2646 = vadd.f32 %v2645, %v2485
  %v2647 = vadd.f32 %v2646, %v2486
  %v2648 = vadd.f32 %v2647, %v2487
  %v2649 = vadd.f32 %v2648, %v2488
  %v2650 = vadd.f32 %v2649, %v2489
  %v2651 = vadd.f32 %v2650, %v2490
  %2652 = vadd.xlane.f32.xlu0 %v2651
  %v2653 = vpop.xlane.xlu0 %2652
  %v2654 = vadd.f32 %v2491, %v2492
  %v2655 = vadd.f32 %v2654, %v2493
  %v2656 = vadd.f32 %v2655, %v2494
  %v2657 = vadd.f32 %v2656, %v2495
  %v2658 = vadd.f32 %v2657, %v2496
  %v2659 = vadd.f32 %v2658, %v2497
  %v2660 = vadd.f32 %v2659, %v2498
  %2661 = vadd.xlane.f32.xlu0 %v2660
  %v2662 = vpop.xlane.xlu0 %2661
  %v2663 = vadd.f32 %v2499, %v2500
  %v2664 = vadd.f32 %v2663, %v2501
  %v2665 = vadd.f32 %v2664, %v2502
  %v2666 = vadd.f32 %v2665, %v2503
  %v2667 = vadd.f32 %v2666, %v2504
  %v2668 = vadd.f32 %v2667, %v2505
  %v2669 = vadd.f32 %v2668, %v2506
  %2670 = vadd.xlane.f32.xlu0 %v2669
  %v2671 = vpop.xlane.xlu0 %2670
  %v2672 = vadd.f32 %v2507, %v2508
  %v2673 = vadd.f32 %v2672, %v2509
  %v2674 = vadd.f32 %v2673, %v2510
  %v2675 = vadd.f32 %v2674, %v2511
  %v2676 = vadd.f32 %v2675, %v2512
  %v2677 = vadd.f32 %v2676, %v2513
  %v2678 = vadd.f32 %v2677, %v2514
  %2679 = vadd.xlane.f32.xlu0 %v2678
  %v2680 = vpop.xlane.xlu0 %2679
  %v2681 = vadd.f32 %v2515, %v2516
  %v2682 = vadd.f32 %v2681, %v2517
  %v2683 = vadd.f32 %v2682, %v2518
  %v2684 = vadd.f32 %v2683, %v2519
  %v2685 = vadd.f32 %v2684, %v2520
  %v2686 = vadd.f32 %v2685, %v2521
  %v2687 = vadd.f32 %v2686, %v2522
  %2688 = vadd.xlane.f32.xlu0 %v2687
  %v2689 = vpop.xlane.xlu0 %2688
  %v2690 = vadd.f32 %v2523, %v2524
  %v2691 = vadd.f32 %v2690, %v2525
  %v2692 = vadd.f32 %v2691, %v2526
  %v2693 = vadd.f32 %v2692, %v2527
  %v2694 = vadd.f32 %v2693, %v2528
  %v2695 = vadd.f32 %v2694, %v2529
  %v2696 = vadd.f32 %v2695, %v2530
  %2697 = vadd.xlane.f32.xlu0 %v2696
  %v2698 = vpop.xlane.xlu0 %2697
  %v2699 = vadd.f32 %v2531, %v2532
  %v2700 = vadd.f32 %v2699, %v2533
  %v2701 = vadd.f32 %v2700, %v2534
  %v2702 = vadd.f32 %v2701, %v2535
  %v2703 = vadd.f32 %v2702, %v2536
  %v2704 = vadd.f32 %v2703, %v2537
  %v2705 = vadd.f32 %v2704, %v2538
  %2706 = vadd.xlane.f32.xlu0 %v2705
  %v2707 = vpop.xlane.xlu0 %2706
  %v2708 = vadd.f32 %v2539, %v2540
  %v2709 = vadd.f32 %v2708, %v2541
  %v2710 = vadd.f32 %v2709, %v2542
  %v2711 = vadd.f32 %v2710, %v2543
  %v2712 = vadd.f32 %v2711, %v2544
  %v2713 = vadd.f32 %v2712, %v2545
  %v2714 = vadd.f32 %v2713, %v2546
  %2715 = vadd.xlane.f32.xlu0 %v2714
  %v2716 = vpop.xlane.xlu0 %2715
  %v2717 = vadd.f32 %v2547, %v2548
  %v2718 = vadd.f32 %v2717, %v2549
  %v2719 = vadd.f32 %v2718, %v2550
  %v2720 = vadd.f32 %v2719, %v2551
  %v2721 = vadd.f32 %v2720, %v2552
  %v2722 = vadd.f32 %v2721, %v2553
  %v2723 = vadd.f32 %v2722, %v2554
  %2724 = vadd.xlane.f32.xlu0 %v2723
  %v2725 = vpop.xlane.xlu0 %2724
  %v2726 = vadd.f32 %v2555, %v2556
  %v2727 = vadd.f32 %v2726, %v2557
  %v2728 = vadd.f32 %v2727, %v2558
  %v2729 = vadd.f32 %v2728, %v2559
  %v2730 = vadd.f32 %v2729, %v2560
  %v2731 = vadd.f32 %v2730, %v2561
  %v2732 = vadd.f32 %v2731, %v2562
  %2733 = vadd.xlane.f32.xlu0 %v2732
  %v2734 = vpop.xlane.xlu0 %2733
  %v2735 = vadd.f32 %v2563, %v2564
  %v2736 = vadd.f32 %v2735, %v2565
  %v2737 = vadd.f32 %v2736, %v2566
  %v2738 = vadd.f32 %v2737, %v2567
  %v2739 = vadd.f32 %v2738, %v2568
  %v2740 = vadd.f32 %v2739, %v2569
  %v2741 = vadd.f32 %v2740, %v2570
  %2742 = vadd.xlane.f32.xlu0 %v2741
  %v2743 = vpop.xlane.xlu0 %2742
  %v2744 = vadd.f32 %v2571, %v2572
  %v2745 = vadd.f32 %v2744, %v2573
  %v2746 = vadd.f32 %v2745, %v2574
  %v2747 = vadd.f32 %v2746, %v2575
  %v2748 = vadd.f32 %v2747, %v2576
  %v2749 = vadd.f32 %v2748, %v2577
  %v2750 = vadd.f32 %v2749, %v2578
  %2751 = vadd.xlane.f32.xlu0 %v2750
  %v2752 = vpop.xlane.xlu0 %2751
  %v2753 = vadd.f32 %v2579, %v2580
  %v2754 = vadd.f32 %v2753, %v2581
  %v2755 = vadd.f32 %v2754, %v2582
  %v2756 = vadd.f32 %v2755, %v2583
  %v2757 = vadd.f32 %v2756, %v2584
  %v2758 = vadd.f32 %v2757, %v2585
  %v2759 = vadd.f32 %v2758, %v2586
  %2760 = vadd.xlane.f32.xlu0 %v2759
  %v2761 = vpop.xlane.xlu0 %2760
  %v2762 = vadd.f32 %v2587, %v2588
  %v2763 = vadd.f32 %v2762, %v2589
  %v2764 = vadd.f32 %v2763, %v2590
  %v2765 = vadd.f32 %v2764, %v2591
  %v2766 = vadd.f32 %v2765, %v2592
  %v2767 = vadd.f32 %v2766, %v2593
  %v2768 = vadd.f32 %v2767, %v2594
  %2769 = vadd.xlane.f32.xlu0 %v2768
  %v2770 = vpop.xlane.xlu0 %2769
  %v2771 = vadd.f32 %v2595, %v2596
  %v2772 = vadd.f32 %v2771, %v2597
  %v2773 = vadd.f32 %v2772, %v2598
  %v2774 = vadd.f32 %v2773, %v2599
  %v2775 = vadd.f32 %v2774, %v2600
  %v2776 = vadd.f32 %v2775, %v2601
  %v2777 = vadd.f32 %v2776, %v2602
  %2778 = vadd.xlane.f32.xlu0 %v2777
  %v2779 = vpop.xlane.xlu0 %2778
  %v2780 = vadd.f32 %v2603, %v2604
  %v2781 = vadd.f32 %v2780, %v2605
  %v2782 = vadd.f32 %v2781, %v2606
  %v2783 = vadd.f32 %v2782, %v2607
  %v2784 = vadd.f32 %v2783, %v2608
  %v2785 = vadd.f32 %v2784, %v2609
  %v2786 = vadd.f32 %v2785, %v2610
  %2787 = vadd.xlane.f32.xlu0 %v2786
  %v2788 = vpop.xlane.xlu0 %2787
  %v2789 = vadd.f32 %v2611, %v2612
  %v2790 = vadd.f32 %v2789, %v2613
  %v2791 = vadd.f32 %v2790, %v2614
  %v2792 = vadd.f32 %v2791, %v2615
  %v2793 = vadd.f32 %v2792, %v2616
  %v2794 = vadd.f32 %v2793, %v2617
  %v2795 = vadd.f32 %v2794, %v2618
  %2796 = vadd.xlane.f32.xlu0 %v2795
  %v2797 = vpop.xlane.xlu0 %2796
  %v2798 = vadd.f32 %v2619, %v2620
  %v2799 = vadd.f32 %v2798, %v2621
  %v2800 = vadd.f32 %v2799, %v2622
  %v2801 = vadd.f32 %v2800, %v2623
  %v2802 = vadd.f32 %v2801, %v2624
  %v2803 = vadd.f32 %v2802, %v2625
  %v2804 = vadd.f32 %v2803, %v2626
  %2805 = vadd.xlane.f32.xlu0 %v2804
  %v2806 = vpop.xlane.xlu0 %2805
  %v2827 = vlaneseq
  %v2828 = vand.u32 %v2827, 127
  %v2829 = vlaneseq
  %v2830 = vshrl.u32 %v2829, 7
  %v2831 = vsub.s32 %v2828, %v2830
  %v2832 = vrot.slane %v2635, %v2831
  %v2833 = vlaneseq
  %v2834 = vshrl.u32 %v2833, 7
  %v2835 = vsub.s32 %v2828, %v2834
  %v2836 = vrot.slane %v2644, %v2835
  %v2837 = vlaneseq
  %v2838 = vshrl.u32 %v2837, 7
  %v2839 = vsub.s32 %v2828, %v2838
  %v2840 = vrot.slane %v2653, %v2839
  %v2841 = vlaneseq
  %v2842 = vshrl.u32 %v2841, 7
  %v2843 = vsub.s32 %v2828, %v2842
  %v2844 = vrot.slane %v2662, %v2843
  %v2845 = vlaneseq
  %v2846 = vshrl.u32 %v2845, 7
  %v2847 = vsub.s32 %v2828, %v2846
  %v2848 = vrot.slane %v2671, %v2847
  %v2849 = vlaneseq
  %v2850 = vshrl.u32 %v2849, 7
  %v2851 = vsub.s32 %v2828, %v2850
  %v2852 = vrot.slane %v2680, %v2851
  %v2853 = vlaneseq
  %v2854 = vshrl.u32 %v2853, 7
  %v2855 = vsub.s32 %v2828, %v2854
  %v2856 = vrot.slane %v2689, %v2855
  %v2857 = vlaneseq
  %v2858 = vshrl.u32 %v2857, 7
  %v2859 = vsub.s32 %v2828, %v2858
  %v2860 = vrot.slane %v2698, %v2859
  %v2861 = vlaneseq
  %v2862 = vshrl.u32 %v2861, 7
  %v2863 = vsub.s32 %v2828, %v2862
  %v2864 = vrot.slane %v2707, %v2863
  %v2865 = vlaneseq
  %v2866 = vshrl.u32 %v2865, 7
  %v2867 = vsub.s32 %v2828, %v2866
  %v2868 = vrot.slane %v2716, %v2867
  %v2869 = vlaneseq
  %v2870 = vshrl.u32 %v2869, 7
  %v2871 = vsub.s32 %v2828, %v2870
  %v2872 = vrot.slane %v2725, %v2871
  %v2873 = vlaneseq
  %v2874 = vshrl.u32 %v2873, 7
  %v2875 = vsub.s32 %v2828, %v2874
  %v2876 = vrot.slane %v2734, %v2875
  %v2877 = vlaneseq
  %v2878 = vshrl.u32 %v2877, 7
  %v2879 = vsub.s32 %v2828, %v2878
  %v2880 = vrot.slane %v2743, %v2879
  %v2881 = vlaneseq
  %v2882 = vshrl.u32 %v2881, 7
  %v2883 = vsub.s32 %v2828, %v2882
  %v2884 = vrot.slane %v2752, %v2883
  %v2885 = vlaneseq
  %v2886 = vshrl.u32 %v2885, 7
  %v2887 = vsub.s32 %v2828, %v2886
  %v2888 = vrot.slane %v2761, %v2887
  %v2889 = vlaneseq
  %v2890 = vshrl.u32 %v2889, 7
  %v2891 = vsub.s32 %v2828, %v2890
  %v2892 = vrot.slane %v2770, %v2891
  %v2893 = vlaneseq
  %v2894 = vshrl.u32 %v2893, 7
  %v2895 = vsub.s32 %v2828, %v2894
  %v2896 = vrot.slane %v2779, %v2895
  %v2897 = vlaneseq
  %v2898 = vshrl.u32 %v2897, 7
  %v2899 = vsub.s32 %v2828, %v2898
  %v2900 = vrot.slane %v2788, %v2899
  %v2901 = vlaneseq
  %v2902 = vshrl.u32 %v2901, 7
  %v2903 = vsub.s32 %v2828, %v2902
  %v2904 = vrot.slane %v2797, %v2903
  %v2905 = vlaneseq
  %v2906 = vshrl.u32 %v2905, 7
  %v2907 = vsub.s32 %v2828, %v2906
  %v2908 = vrot.slane %v2806, %v2907
  %vm2909 = vcmask 1041409
  %v2910 = vsel %vm2909, %v2836, %v2832
  %vm2911 = vcmask 1042434
  %v2912 = vsel %vm2911, %v2840, %v2910
  %vm2913 = vcmask 1043459
  %v2914 = vsel %vm2913, %v2844, %v2912
  %vm2915 = vcmask 1044484
  %v2916 = vsel %vm2915, %v2848, %v2914
  %v2917 = vsel %vm2909, %v2856, %v2852
  %v2918 = vsel %vm2911, %v2860, %v2917
  %v2919 = vsel %vm2913, %v2864, %v2918
  %v2920 = vsel %vm2915, %v2868, %v2919
  %v2921 = vsel %vm2909, %v2876, %v2872
  %v2922 = vsel %vm2911, %v2880, %v2921
  %v2923 = vsel %vm2913, %v2884, %v2922
  %v2924 = vsel %vm2915, %v2888, %v2923
  %v2925 = vsel %vm2909, %v2896, %v2892
  %v2926 = vsel %vm2911, %v2900, %v2925
  %v2927 = vsel %vm2913, %v2904, %v2926
  %v2928 = vsel %vm2915, %v2908, %v2927
  %vm2933 = vcmask 61440
  %v2934 = vsel %vm2933, %v2916, -inf
  %2935 = vmax.xlane.f32.xlu0 %v2934
  %v2936 = vpop.xlane.xlu0 %2935
  %v2937 = vsel %vm2933, %v2920, -inf
  %2938 = vmax.xlane.f32.xlu0 %v2937
  %v2939 = vpop.xlane.xlu0 %2938
  %v2940 = vsel %vm2933, %v2924, -inf
  %2941 = vmax.xlane.f32.xlu0 %v2940
  %v2942 = vpop.xlane.xlu0 %2941
  %v2943 = vsel %vm2933, %v2928, -inf
  %2944 = vmax.xlane.f32.xlu0 %v2943
  %v2945 = vpop.xlane.xlu0 %2944
  %v2950 = vlaneseq
  %v2951 = vshrl.u32 %v2950, 7
  %v2952 = vsub.s32 0, %v2951
  %v2953 = vrot.slane %v2936, %v2952
  %v2954 = vlaneseq
  %v2955 = vshrl.u32 %v2954, 7
  %v2956 = vsub.s32 1, %v2955
  %v2957 = vrot.slane %v2936, %v2956
  %v2958 = vlaneseq
  %v2959 = vshrl.u32 %v2958, 7
  %v2960 = vsub.s32 2, %v2959
  %v2961 = vrot.slane %v2936, %v2960
  %v2962 = vlaneseq
  %v2963 = vshrl.u32 %v2962, 7
  %v2964 = vsub.s32 3, %v2963
  %v2965 = vrot.slane %v2936, %v2964
  %v2966 = vlaneseq
  %v2967 = vshrl.u32 %v2966, 7
  %v2968 = vsub.s32 4, %v2967
  %v2969 = vrot.slane %v2936, %v2968
  %v2970 = vlaneseq
  %v2971 = vshrl.u32 %v2970, 7
  %v2972 = vsub.s32 0, %v2971
  %v2973 = vrot.slane %v2939, %v2972
  %v2974 = vlaneseq
  %v2975 = vshrl.u32 %v2974, 7
  %v2976 = vsub.s32 1, %v2975
  %v2977 = vrot.slane %v2939, %v2976
  %v2978 = vlaneseq
  %v2979 = vshrl.u32 %v2978, 7
  %v2980 = vsub.s32 2, %v2979
  %v2981 = vrot.slane %v2939, %v2980
  %v2982 = vlaneseq
  %v2983 = vshrl.u32 %v2982, 7
  %v2984 = vsub.s32 3, %v2983
  %v2985 = vrot.slane %v2939, %v2984
  %v2986 = vlaneseq
  %v2987 = vshrl.u32 %v2986, 7
  %v2988 = vsub.s32 4, %v2987
  %v2989 = vrot.slane %v2939, %v2988
  %v2990 = vlaneseq
  %v2991 = vshrl.u32 %v2990, 7
  %v2992 = vsub.s32 0, %v2991
  %v2993 = vrot.slane %v2942, %v2992
  %v2994 = vlaneseq
  %v2995 = vshrl.u32 %v2994, 7
  %v2996 = vsub.s32 1, %v2995
  %v2997 = vrot.slane %v2942, %v2996
  %v2998 = vlaneseq
  %v2999 = vshrl.u32 %v2998, 7
  %v3000 = vsub.s32 2, %v2999
  %v3001 = vrot.slane %v2942, %v3000
  %v3002 = vlaneseq
  %v3003 = vshrl.u32 %v3002, 7
  %v3004 = vsub.s32 3, %v3003
  %v3005 = vrot.slane %v2942, %v3004
  %v3006 = vlaneseq
  %v3007 = vshrl.u32 %v3006, 7
  %v3008 = vsub.s32 4, %v3007
  %v3009 = vrot.slane %v2942, %v3008
  %v3010 = vlaneseq
  %v3011 = vshrl.u32 %v3010, 7
  %v3012 = vsub.s32 0, %v3011
  %v3013 = vrot.slane %v2945, %v3012
  %v3014 = vlaneseq
  %v3015 = vshrl.u32 %v3014, 7
  %v3016 = vsub.s32 1, %v3015
  %v3017 = vrot.slane %v2945, %v3016
  %v3018 = vlaneseq
  %v3019 = vshrl.u32 %v3018, 7
  %v3020 = vsub.s32 2, %v3019
  %v3021 = vrot.slane %v2945, %v3020
  %v3022 = vlaneseq
  %v3023 = vshrl.u32 %v3022, 7
  %v3024 = vsub.s32 3, %v3023
  %v3025 = vrot.slane %v2945, %v3024
  %v3026 = vlaneseq
  %v3027 = vshrl.u32 %v3026, 7
  %v3028 = vsub.s32 4, %v3027
  %v3029 = vrot.slane %v2945, %v3028
  %v3050 = vsub.f32 %v2635, %v2953
  %v3051 = vsub.f32 %v2644, %v2957
  %v3052 = vsub.f32 %v2653, %v2961
  %v3053 = vsub.f32 %v2662, %v2965
  %v3054 = vsub.f32 %v2671, %v2969
  %v3055 = vsub.f32 %v2680, %v2973
  %v3056 = vsub.f32 %v2689, %v2977
  %v3057 = vsub.f32 %v2698, %v2981
  %v3058 = vsub.f32 %v2707, %v2985
  %v3059 = vsub.f32 %v2716, %v2989
  %v3060 = vsub.f32 %v2725, %v2993
  %v3061 = vsub.f32 %v2734, %v2997
  %v3062 = vsub.f32 %v2743, %v3001
  %v3063 = vsub.f32 %v2752, %v3005
  %v3064 = vsub.f32 %v2761, %v3009
  %v3065 = vsub.f32 %v2770, %v3013
  %v3066 = vsub.f32 %v2779, %v3017
  %v3067 = vsub.f32 %v2788, %v3021
  %v3068 = vsub.f32 %v2797, %v3025
  %v3069 = vsub.f32 %v2806, %v3029
  %v3070 = vmul.f32 %v3050, 1.442695
  %v3071 = vpow.pop %v3070
  %v3072 = vmul.f32 %v3051, 1.442695
  %v3073 = vpow.pop %v3072
  %v3074 = vmul.f32 %v3052, 1.442695
  %v3075 = vpow.pop %v3074
  %v3076 = vmul.f32 %v3053, 1.442695
  %v3077 = vpow.pop %v3076
  %v3078 = vmul.f32 %v3054, 1.442695
  %v3079 = vpow.pop %v3078
  %v3080 = vmul.f32 %v3055, 1.442695
  %v3081 = vpow.pop %v3080
  %v3082 = vmul.f32 %v3056, 1.442695
  %v3083 = vpow.pop %v3082
  %v3084 = vmul.f32 %v3057, 1.442695
  %v3085 = vpow.pop %v3084
  %v3086 = vmul.f32 %v3058, 1.442695
  %v3087 = vpow.pop %v3086
  %v3088 = vmul.f32 %v3059, 1.442695
  %v3089 = vpow.pop %v3088
  %v3090 = vmul.f32 %v3060, 1.442695
  %v3091 = vpow.pop %v3090
  %v3092 = vmul.f32 %v3061, 1.442695
  %v3093 = vpow.pop %v3092
  %v3094 = vmul.f32 %v3062, 1.442695
  %v3095 = vpow.pop %v3094
  %v3096 = vmul.f32 %v3063, 1.442695
  %v3097 = vpow.pop %v3096
  %v3098 = vmul.f32 %v3064, 1.442695
  %v3099 = vpow.pop %v3098
  %v3100 = vmul.f32 %v3065, 1.442695
  %v3101 = vpow.pop %v3100
  %v3102 = vmul.f32 %v3066, 1.442695
  %v3103 = vpow.pop %v3102
  %v3104 = vmul.f32 %v3067, 1.442695
  %v3105 = vpow.pop %v3104
  %v3106 = vmul.f32 %v3068, 1.442695
  %v3107 = vpow.pop %v3106
  %v3108 = vmul.f32 %v3069, 1.442695
  %v3109 = vpow.pop %v3108
  %3130 = vset.pattern.permute.xlu0 0
  %3131 = vperm.xlu0 %3130, %v3071
  %v3132 = vpop.permute.xlu0 %3131
  %3133 = vset.pattern.permute.xlu0 0
  %3134 = vperm.xlu0 %3133, %v3073
  %v3135 = vpop.permute.xlu0 %3134
  %3136 = vset.pattern.permute.xlu0 0
  %3137 = vperm.xlu0 %3136, %v3075
  %v3138 = vpop.permute.xlu0 %3137
  %3139 = vset.pattern.permute.xlu0 0
  %3140 = vperm.xlu0 %3139, %v3077
  %v3141 = vpop.permute.xlu0 %3140
  %3142 = vset.pattern.permute.xlu0 0
  %3143 = vperm.xlu0 %3142, %v3079
  %v3144 = vpop.permute.xlu0 %3143
  %3145 = vset.pattern.permute.xlu0 0
  %3146 = vperm.xlu0 %3145, %v3081
  %v3147 = vpop.permute.xlu0 %3146
  %3148 = vset.pattern.permute.xlu0 0
  %3149 = vperm.xlu0 %3148, %v3083
  %v3150 = vpop.permute.xlu0 %3149
  %3151 = vset.pattern.permute.xlu0 0
  %3152 = vperm.xlu0 %3151, %v3085
  %v3153 = vpop.permute.xlu0 %3152
  %3154 = vset.pattern.permute.xlu0 0
  %3155 = vperm.xlu0 %3154, %v3087
  %v3156 = vpop.permute.xlu0 %3155
  %3157 = vset.pattern.permute.xlu0 0
  %3158 = vperm.xlu0 %3157, %v3089
  %v3159 = vpop.permute.xlu0 %3158
  %3160 = vset.pattern.permute.xlu0 0
  %3161 = vperm.xlu0 %3160, %v3091
  %v3162 = vpop.permute.xlu0 %3161
  %3163 = vset.pattern.permute.xlu0 0
  %3164 = vperm.xlu0 %3163, %v3093
  %v3165 = vpop.permute.xlu0 %3164
  %3166 = vset.pattern.permute.xlu0 0
  %3167 = vperm.xlu0 %3166, %v3095
  %v3168 = vpop.permute.xlu0 %3167
  %3169 = vset.pattern.permute.xlu0 0
  %3170 = vperm.xlu0 %3169, %v3097
  %v3171 = vpop.permute.xlu0 %3170
  %3172 = vset.pattern.permute.xlu0 0
  %3173 = vperm.xlu0 %3172, %v3099
  %v3174 = vpop.permute.xlu0 %3173
  %3175 = vset.pattern.permute.xlu0 0
  %3176 = vperm.xlu0 %3175, %v3101
  %v3177 = vpop.permute.xlu0 %3176
  %3178 = vset.pattern.permute.xlu0 0
  %3179 = vperm.xlu0 %3178, %v3103
  %v3180 = vpop.permute.xlu0 %3179
  %3181 = vset.pattern.permute.xlu0 0
  %3182 = vperm.xlu0 %3181, %v3105
  %v3183 = vpop.permute.xlu0 %3182
  %3184 = vset.pattern.permute.xlu0 0
  %3185 = vperm.xlu0 %3184, %v3107
  %v3186 = vpop.permute.xlu0 %3185
  %3187 = vset.pattern.permute.xlu0 0
  %3188 = vperm.xlu0 %3187, %v3109
  %v3189 = vpop.permute.xlu0 %3188
  %v3190 = vlaneseq
  %v3191 = vshrl.u32 %v3190, 7
  %v3192 = vsub.s32 %v2828, %v3191
  %v3193 = vrot.slane %v3132, %v3192
  %v3194 = vlaneseq
  %v3195 = vshrl.u32 %v3194, 7
  %v3196 = vsub.s32 %v2828, %v3195
  %v3197 = vrot.slane %v3135, %v3196
  %v3198 = vlaneseq
  %v3199 = vshrl.u32 %v3198, 7
  %v3200 = vsub.s32 %v2828, %v3199
  %v3201 = vrot.slane %v3138, %v3200
  %v3202 = vlaneseq
  %v3203 = vshrl.u32 %v3202, 7
  %v3204 = vsub.s32 %v2828, %v3203
  %v3205 = vrot.slane %v3141, %v3204
  %v3206 = vlaneseq
  %v3207 = vshrl.u32 %v3206, 7
  %v3208 = vsub.s32 %v2828, %v3207
  %v3209 = vrot.slane %v3144, %v3208
  %v3210 = vlaneseq
  %v3211 = vshrl.u32 %v3210, 7
  %v3212 = vsub.s32 %v2828, %v3211
  %v3213 = vrot.slane %v3147, %v3212
  %v3214 = vlaneseq
  %v3215 = vshrl.u32 %v3214, 7
  %v3216 = vsub.s32 %v2828, %v3215
  %v3217 = vrot.slane %v3150, %v3216
  %v3218 = vlaneseq
  %v3219 = vshrl.u32 %v3218, 7
  %v3220 = vsub.s32 %v2828, %v3219
  %v3221 = vrot.slane %v3153, %v3220
  %v3222 = vlaneseq
  %v3223 = vshrl.u32 %v3222, 7
  %v3224 = vsub.s32 %v2828, %v3223
  %v3225 = vrot.slane %v3156, %v3224
  %v3226 = vlaneseq
  %v3227 = vshrl.u32 %v3226, 7
  %v3228 = vsub.s32 %v2828, %v3227
  %v3229 = vrot.slane %v3159, %v3228
  %v3230 = vlaneseq
  %v3231 = vshrl.u32 %v3230, 7
  %v3232 = vsub.s32 %v2828, %v3231
  %v3233 = vrot.slane %v3162, %v3232
  %v3234 = vlaneseq
  %v3235 = vshrl.u32 %v3234, 7
  %v3236 = vsub.s32 %v2828, %v3235
  %v3237 = vrot.slane %v3165, %v3236
  %v3238 = vlaneseq
  %v3239 = vshrl.u32 %v3238, 7
  %v3240 = vsub.s32 %v2828, %v3239
  %v3241 = vrot.slane %v3168, %v3240
  %v3242 = vlaneseq
  %v3243 = vshrl.u32 %v3242, 7
  %v3244 = vsub.s32 %v2828, %v3243
  %v3245 = vrot.slane %v3171, %v3244
  %v3246 = vlaneseq
  %v3247 = vshrl.u32 %v3246, 7
  %v3248 = vsub.s32 %v2828, %v3247
  %v3249 = vrot.slane %v3174, %v3248
  %v3250 = vlaneseq
  %v3251 = vshrl.u32 %v3250, 7
  %v3252 = vsub.s32 %v2828, %v3251
  %v3253 = vrot.slane %v3177, %v3252
  %v3254 = vlaneseq
  %v3255 = vshrl.u32 %v3254, 7
  %v3256 = vsub.s32 %v2828, %v3255
  %v3257 = vrot.slane %v3180, %v3256
  %v3258 = vlaneseq
  %v3259 = vshrl.u32 %v3258, 7
  %v3260 = vsub.s32 %v2828, %v3259
  %v3261 = vrot.slane %v3183, %v3260
  %v3262 = vlaneseq
  %v3263 = vshrl.u32 %v3262, 7
  %v3264 = vsub.s32 %v2828, %v3263
  %v3265 = vrot.slane %v3186, %v3264
  %v3266 = vlaneseq
  %v3267 = vshrl.u32 %v3266, 7
  %v3268 = vsub.s32 %v2828, %v3267
  %v3269 = vrot.slane %v3189, %v3268
  %v3270 = vsel %vm2909, %v3197, %v3193
  %v3271 = vsel %vm2911, %v3201, %v3270
  %v3272 = vsel %vm2913, %v3205, %v3271
  %v3273 = vsel %vm2915, %v3209, %v3272
  %v3274 = vsel %vm2909, %v3217, %v3213
  %v3275 = vsel %vm2911, %v3221, %v3274
  %v3276 = vsel %vm2913, %v3225, %v3275
  %v3277 = vsel %vm2915, %v3229, %v3276
  %v3278 = vsel %vm2909, %v3237, %v3233
  %v3279 = vsel %vm2911, %v3241, %v3278
  %v3280 = vsel %vm2913, %v3245, %v3279
  %v3281 = vsel %vm2915, %v3249, %v3280
  %v3282 = vsel %vm2909, %v3257, %v3253
  %v3283 = vsel %vm2911, %v3261, %v3282
  %v3284 = vsel %vm2913, %v3265, %v3283
  %v3285 = vsel %vm2915, %v3269, %v3284
  %v3290 = vsel %vm2933, %v3273, 0.0
  %3291 = vadd.xlane.f32.xlu0 %v3290
  %v3292 = vpop.xlane.xlu0 %3291
  %v3293 = vsel %vm2933, %v3277, 0.0
  %3294 = vadd.xlane.f32.xlu0 %v3293
  %v3295 = vpop.xlane.xlu0 %3294
  %v3296 = vsel %vm2933, %v3281, 0.0
  %3297 = vadd.xlane.f32.xlu0 %v3296
  %v3298 = vpop.xlane.xlu0 %3297
  %v3299 = vsel %vm2933, %v3285, 0.0
  %3300 = vadd.xlane.f32.xlu0 %v3299
  %v3301 = vpop.xlane.xlu0 %3300
  %v3302 = vrcp.pop %v3292
  %v3303 = vrcp.pop %v3295
  %v3304 = vrcp.pop %v3298
  %v3305 = vrcp.pop %v3301
  %v3310 = vlaneseq
  %v3311 = vshrl.u32 %v3310, 7
  %v3312 = vsub.s32 0, %v3311
  %v3313 = vrot.slane %v3302, %v3312
  %v3314 = vlaneseq
  %v3315 = vshrl.u32 %v3314, 7
  %v3316 = vsub.s32 1, %v3315
  %v3317 = vrot.slane %v3302, %v3316
  %v3318 = vlaneseq
  %v3319 = vshrl.u32 %v3318, 7
  %v3320 = vsub.s32 2, %v3319
  %v3321 = vrot.slane %v3302, %v3320
  %v3322 = vlaneseq
  %v3323 = vshrl.u32 %v3322, 7
  %v3324 = vsub.s32 3, %v3323
  %v3325 = vrot.slane %v3302, %v3324
  %v3326 = vlaneseq
  %v3327 = vshrl.u32 %v3326, 7
  %v3328 = vsub.s32 4, %v3327
  %v3329 = vrot.slane %v3302, %v3328
  %v3330 = vlaneseq
  %v3331 = vshrl.u32 %v3330, 7
  %v3332 = vsub.s32 0, %v3331
  %v3333 = vrot.slane %v3303, %v3332
  %v3334 = vlaneseq
  %v3335 = vshrl.u32 %v3334, 7
  %v3336 = vsub.s32 1, %v3335
  %v3337 = vrot.slane %v3303, %v3336
  %v3338 = vlaneseq
  %v3339 = vshrl.u32 %v3338, 7
  %v3340 = vsub.s32 2, %v3339
  %v3341 = vrot.slane %v3303, %v3340
  %v3342 = vlaneseq
  %v3343 = vshrl.u32 %v3342, 7
  %v3344 = vsub.s32 3, %v3343
  %v3345 = vrot.slane %v3303, %v3344
  %v3346 = vlaneseq
  %v3347 = vshrl.u32 %v3346, 7
  %v3348 = vsub.s32 4, %v3347
  %v3349 = vrot.slane %v3303, %v3348
  %v3350 = vlaneseq
  %v3351 = vshrl.u32 %v3350, 7
  %v3352 = vsub.s32 0, %v3351
  %v3353 = vrot.slane %v3304, %v3352
  %v3354 = vlaneseq
  %v3355 = vshrl.u32 %v3354, 7
  %v3356 = vsub.s32 1, %v3355
  %v3357 = vrot.slane %v3304, %v3356
  %v3358 = vlaneseq
  %v3359 = vshrl.u32 %v3358, 7
  %v3360 = vsub.s32 2, %v3359
  %v3361 = vrot.slane %v3304, %v3360
  %v3362 = vlaneseq
  %v3363 = vshrl.u32 %v3362, 7
  %v3364 = vsub.s32 3, %v3363
  %v3365 = vrot.slane %v3304, %v3364
  %v3366 = vlaneseq
  %v3367 = vshrl.u32 %v3366, 7
  %v3368 = vsub.s32 4, %v3367
  %v3369 = vrot.slane %v3304, %v3368
  %v3370 = vlaneseq
  %v3371 = vshrl.u32 %v3370, 7
  %v3372 = vsub.s32 0, %v3371
  %v3373 = vrot.slane %v3305, %v3372
  %v3374 = vlaneseq
  %v3375 = vshrl.u32 %v3374, 7
  %v3376 = vsub.s32 1, %v3375
  %v3377 = vrot.slane %v3305, %v3376
  %v3378 = vlaneseq
  %v3379 = vshrl.u32 %v3378, 7
  %v3380 = vsub.s32 2, %v3379
  %v3381 = vrot.slane %v3305, %v3380
  %v3382 = vlaneseq
  %v3383 = vshrl.u32 %v3382, 7
  %v3384 = vsub.s32 3, %v3383
  %v3385 = vrot.slane %v3305, %v3384
  %v3386 = vlaneseq
  %v3387 = vshrl.u32 %v3386, 7
  %v3388 = vsub.s32 4, %v3387
  %v3389 = vrot.slane %v3305, %v3388
  %v3410 = vmul.f32 %v3071, %v3313
  %v3411 = vmul.f32 %v3073, %v3317
  %v3412 = vmul.f32 %v3075, %v3321
  %v3413 = vmul.f32 %v3077, %v3325
  %v3414 = vmul.f32 %v3079, %v3329
  %v3415 = vmul.f32 %v3081, %v3333
  %v3416 = vmul.f32 %v3083, %v3337
  %v3417 = vmul.f32 %v3085, %v3341
  %v3418 = vmul.f32 %v3087, %v3345
  %v3419 = vmul.f32 %v3089, %v3349
  %v3420 = vmul.f32 %v3091, %v3353
  %v3421 = vmul.f32 %v3093, %v3357
  %v3422 = vmul.f32 %v3095, %v3361
  %v3423 = vmul.f32 %v3097, %v3365
  %v3424 = vmul.f32 %v3099, %v3369
  %v3425 = vmul.f32 %v3101, %v3373
  %v3426 = vmul.f32 %v3103, %v3377
  %v3427 = vmul.f32 %v3105, %v3381
  %v3428 = vmul.f32 %v3107, %v3385
  %v3429 = vmul.f32 %v3109, %v3389
  %v3430 = vpack.c.bf16 %v3410, %v3410
  %v3431 = vpack.c.bf16 %v3411, %v3411
  %v3432 = vpack.c.bf16 %v3412, %v3412
  %v3433 = vpack.c.bf16 %v3413, %v3413
  %v3434 = vpack.c.bf16 %v3414, %v3414
  %v3435 = vpack.c.bf16 %v3415, %v3415
  %v3436 = vpack.c.bf16 %v3416, %v3416
  %v3437 = vpack.c.bf16 %v3417, %v3417
  %v3438 = vpack.c.bf16 %v3418, %v3418
  %v3439 = vpack.c.bf16 %v3419, %v3419
  %v3440 = vpack.c.bf16 %v3420, %v3420
  %v3441 = vpack.c.bf16 %v3421, %v3421
  %v3442 = vpack.c.bf16 %v3422, %v3422
  %v3443 = vpack.c.bf16 %v3423, %v3423
  %v3444 = vpack.c.bf16 %v3424, %v3424
  %v3445 = vpack.c.bf16 %v3425, %v3425
  %v3446 = vpack.c.bf16 %v3426, %v3426
  %v3447 = vpack.c.bf16 %v3427, %v3427
  %v3448 = vpack.c.bf16 %v3428, %v3428
  %v3449 = vpack.c.bf16 %v3429, %v3429
  %v3455 = vunpack.c.l.b16 %v3430
  %v3456 = vunpack.c.l.b16 %v3431
  %v3457 = vunpack.c.l.b16 %v3432
  %v3458 = vunpack.c.l.b16 %v3433
  %v3459 = vunpack.c.l.b16 %v3434
  %3460 = vset.pattern.permute.xlu0 0
  %3461 = vperm.xlu0 %3460, %v3455
  %v3462 = vpop.permute.xlu0 %3461
  %3463 = vset.pattern.permute.xlu0 0
  %3464 = vperm.xlu0 %3463, %v3456
  %v3465 = vpop.permute.xlu0 %3464
  %3466 = vset.pattern.permute.xlu0 0
  %3467 = vperm.xlu0 %3466, %v3457
  %v3468 = vpop.permute.xlu0 %3467
  %3469 = vset.pattern.permute.xlu0 0
  %3470 = vperm.xlu0 %3469, %v3458
  %v3471 = vpop.permute.xlu0 %3470
  %3472 = vset.pattern.permute.xlu0 0
  %3473 = vperm.xlu0 %3472, %v3459
  %v3474 = vpop.permute.xlu0 %3473
  %v3475 = vlaneseq
  %v3476 = vshrl.u32 %v3475, 7
  %v3477 = vsub.s32 %v2828, %v3476
  %v3478 = vrot.slane %v3462, %v3477
  %v3479 = vlaneseq
  %v3480 = vshrl.u32 %v3479, 7
  %v3481 = vsub.s32 %v2828, %v3480
  %v3482 = vrot.slane %v3465, %v3481
  %v3483 = vlaneseq
  %v3484 = vshrl.u32 %v3483, 7
  %v3485 = vsub.s32 %v2828, %v3484
  %v3486 = vrot.slane %v3468, %v3485
  %v3487 = vlaneseq
  %v3488 = vshrl.u32 %v3487, 7
  %v3489 = vsub.s32 %v2828, %v3488
  %v3490 = vrot.slane %v3471, %v3489
  %v3491 = vlaneseq
  %v3492 = vshrl.u32 %v3491, 7
  %v3493 = vsub.s32 %v2828, %v3492
  %v3494 = vrot.slane %v3474, %v3493
  %v3495 = vsel %vm2909, %v3482, %v3478
  %v3496 = vsel %vm2911, %v3486, %v3495
  %v3497 = vsel %vm2913, %v3490, %v3496
  %v3498 = vsel %vm2915, %v3494, %v3497
  %v3499 = vpack.c.b16 %v3498, %v3498
  %vm3500 = vcmask 64512
  %v3502 = vsel %vm3500, %v3499, 0
  %v3505 = vsel %vm465, %v48, 0
  %3507 = vmatprep.subr.bf16.mxu0 0
  %3508 = vmatpush1.bf16.msra.mxu0 0
  %3509 = vmatprep.subr.bf16.mxu0 0
  %3510 = vmatpush1.bf16.msra.mxu0 0
  %3511 = vmatprep.subr.bf16.mxu0 0
  %3512 = vmatpush1.bf16.msra.mxu0 0
  %3513 = vmatprep.subr.bf16.mxu0 0
  %3514 = vmatpush1.bf16.msra.mxu0 0
  %3515 = vmatprep.subr.bf16.mxu0 0
  %3516 = vmatpush1.bf16.msra.mxu0 0
  %3517 = vmatprep.subr.bf16.mxu0 0
  %3518 = vmatpush1.bf16.msra.mxu0 0
  %3519 = vmatprep.subr.bf16.mxu0 0
  %3520 = vmatpush1.bf16.msra.mxu0 0
  %3521 = vmatprep.subr.bf16.mxu0 0
  %3522 = vmatpush1.bf16.msra.mxu0 %v3505
  %3523 = vmatprep.subr.bf16.mxu0 0
  %3524 = vmatpush2.bf16.msra.mxu0 0
  %3525 = vmatprep.subr.bf16.mxu0 0
  %3526 = vmatpush2.bf16.msra.mxu0 0
  %3527 = vmatprep.subr.bf16.mxu0 0
  %3528 = vmatpush2.bf16.msra.mxu0 0
  %3529 = vmatprep.subr.bf16.mxu0 0
  %3530 = vmatpush2.bf16.msra.mxu0 0
  %3531 = vmatprep.subr.bf16.mxu0 0
  %3532 = vmatpush2.bf16.msra.mxu0 0
  %3533 = vmatprep.subr.bf16.mxu0 0
  %3534 = vmatpush2.bf16.msra.mxu0 0
  %3535 = vmatprep.subr.bf16.mxu0 0
  %3536 = vmatpush2.bf16.msra.mxu0 0
  %3537 = vmatprep.subr.bf16.mxu0 0
  %3538 = vmatpush2.bf16.msra.mxu0 0
  %3539 = vmatprep.mubr.bf16.mxu0 0
  %3540 = vmatmul.mubr.bf16.gmra.mxu0 %v3502
  %v3541 = vpop.f32.mrf.mxu0
  %v3542 = vadd.f32 0.0, %v3541
  %v3543 = vpop.f32.mrf.mxu0
  %v3544 = vpop.f32.mrf.mxu0
  %v3545 = vpop.f32.mrf.mxu0
  %3546 = vdwg.mxu0
  %v3552 = vunpack.c.l.b16 %v3435
  %v3553 = vunpack.c.l.b16 %v3436
  %v3554 = vunpack.c.l.b16 %v3437
  %v3555 = vunpack.c.l.b16 %v3438
  %v3556 = vunpack.c.l.b16 %v3439
  %3557 = vset.pattern.permute.xlu0 0
  %3558 = vperm.xlu0 %3557, %v3552
  %v3559 = vpop.permute.xlu0 %3558
  %3560 = vset.pattern.permute.xlu0 0
  %3561 = vperm.xlu0 %3560, %v3553
  %v3562 = vpop.permute.xlu0 %3561
  %3563 = vset.pattern.permute.xlu0 0
  %3564 = vperm.xlu0 %3563, %v3554
  %v3565 = vpop.permute.xlu0 %3564
  %3566 = vset.pattern.permute.xlu0 0
  %3567 = vperm.xlu0 %3566, %v3555
  %v3568 = vpop.permute.xlu0 %3567
  %3569 = vset.pattern.permute.xlu0 0
  %3570 = vperm.xlu0 %3569, %v3556
  %v3571 = vpop.permute.xlu0 %3570
  %v3572 = vlaneseq
  %v3573 = vshrl.u32 %v3572, 7
  %v3574 = vsub.s32 %v2828, %v3573
  %v3575 = vrot.slane %v3559, %v3574
  %v3576 = vlaneseq
  %v3577 = vshrl.u32 %v3576, 7
  %v3578 = vsub.s32 %v2828, %v3577
  %v3579 = vrot.slane %v3562, %v3578
  %v3580 = vlaneseq
  %v3581 = vshrl.u32 %v3580, 7
  %v3582 = vsub.s32 %v2828, %v3581
  %v3583 = vrot.slane %v3565, %v3582
  %v3584 = vlaneseq
  %v3585 = vshrl.u32 %v3584, 7
  %v3586 = vsub.s32 %v2828, %v3585
  %v3587 = vrot.slane %v3568, %v3586
  %v3588 = vlaneseq
  %v3589 = vshrl.u32 %v3588, 7
  %v3590 = vsub.s32 %v2828, %v3589
  %v3591 = vrot.slane %v3571, %v3590
  %v3592 = vsel %vm2909, %v3579, %v3575
  %v3593 = vsel %vm2911, %v3583, %v3592
  %v3594 = vsel %vm2913, %v3587, %v3593
  %v3595 = vsel %vm2915, %v3591, %v3594
  %v3596 = vpack.c.b16 %v3595, %v3595
  %v3598 = vsel %vm3500, %v3596, 0
  %v3601 = vsel %vm465, %v49, 0
  %3603 = vmatprep.subr.bf16.mxu0 0
  %3604 = vmatpush1.bf16.msra.mxu0 0
  %3605 = vmatprep.subr.bf16.mxu0 0
  %3606 = vmatpush1.bf16.msra.mxu0 0
  %3607 = vmatprep.subr.bf16.mxu0 0
  %3608 = vmatpush1.bf16.msra.mxu0 0
  %3609 = vmatprep.subr.bf16.mxu0 0
  %3610 = vmatpush1.bf16.msra.mxu0 0
  %3611 = vmatprep.subr.bf16.mxu0 0
  %3612 = vmatpush1.bf16.msra.mxu0 0
  %3613 = vmatprep.subr.bf16.mxu0 0
  %3614 = vmatpush1.bf16.msra.mxu0 0
  %3615 = vmatprep.subr.bf16.mxu0 0
  %3616 = vmatpush1.bf16.msra.mxu0 0
  %3617 = vmatprep.subr.bf16.mxu0 0
  %3618 = vmatpush1.bf16.msra.mxu0 %v3601
  %3619 = vmatprep.subr.bf16.mxu0 0
  %3620 = vmatpush2.bf16.msra.mxu0 0
  %3621 = vmatprep.subr.bf16.mxu0 0
  %3622 = vmatpush2.bf16.msra.mxu0 0
  %3623 = vmatprep.subr.bf16.mxu0 0
  %3624 = vmatpush2.bf16.msra.mxu0 0
  %3625 = vmatprep.subr.bf16.mxu0 0
  %3626 = vmatpush2.bf16.msra.mxu0 0
  %3627 = vmatprep.subr.bf16.mxu0 0
  %3628 = vmatpush2.bf16.msra.mxu0 0
  %3629 = vmatprep.subr.bf16.mxu0 0
  %3630 = vmatpush2.bf16.msra.mxu0 0
  %3631 = vmatprep.subr.bf16.mxu0 0
  %3632 = vmatpush2.bf16.msra.mxu0 0
  %3633 = vmatprep.subr.bf16.mxu0 0
  %3634 = vmatpush2.bf16.msra.mxu0 0
  %3635 = vmatprep.mubr.bf16.mxu0 0
  %3636 = vmatmul.mubr.bf16.gmra.mxu0 %v3598
  %v3637 = vpop.f32.mrf.mxu0
  %v3638 = vadd.f32 0.0, %v3637
  %v3639 = vpop.f32.mrf.mxu0
  %v3640 = vpop.f32.mrf.mxu0
  %v3641 = vpop.f32.mrf.mxu0
  %3642 = vdwg.mxu0
  %v3648 = vunpack.c.l.b16 %v3440
  %v3649 = vunpack.c.l.b16 %v3441
  %v3650 = vunpack.c.l.b16 %v3442
  %v3651 = vunpack.c.l.b16 %v3443
  %v3652 = vunpack.c.l.b16 %v3444
  %3653 = vset.pattern.permute.xlu0 0
  %3654 = vperm.xlu0 %3653, %v3648
  %v3655 = vpop.permute.xlu0 %3654
  %3656 = vset.pattern.permute.xlu0 0
  %3657 = vperm.xlu0 %3656, %v3649
  %v3658 = vpop.permute.xlu0 %3657
  %3659 = vset.pattern.permute.xlu0 0
  %3660 = vperm.xlu0 %3659, %v3650
  %v3661 = vpop.permute.xlu0 %3660
  %3662 = vset.pattern.permute.xlu0 0
  %3663 = vperm.xlu0 %3662, %v3651
  %v3664 = vpop.permute.xlu0 %3663
  %3665 = vset.pattern.permute.xlu0 0
  %3666 = vperm.xlu0 %3665, %v3652
  %v3667 = vpop.permute.xlu0 %3666
  %v3668 = vlaneseq
  %v3669 = vshrl.u32 %v3668, 7
  %v3670 = vsub.s32 %v2828, %v3669
  %v3671 = vrot.slane %v3655, %v3670
  %v3672 = vlaneseq
  %v3673 = vshrl.u32 %v3672, 7
  %v3674 = vsub.s32 %v2828, %v3673
  %v3675 = vrot.slane %v3658, %v3674
  %v3676 = vlaneseq
  %v3677 = vshrl.u32 %v3676, 7
  %v3678 = vsub.s32 %v2828, %v3677
  %v3679 = vrot.slane %v3661, %v3678
  %v3680 = vlaneseq
  %v3681 = vshrl.u32 %v3680, 7
  %v3682 = vsub.s32 %v2828, %v3681
  %v3683 = vrot.slane %v3664, %v3682
  %v3684 = vlaneseq
  %v3685 = vshrl.u32 %v3684, 7
  %v3686 = vsub.s32 %v2828, %v3685
  %v3687 = vrot.slane %v3667, %v3686
  %v3688 = vsel %vm2909, %v3675, %v3671
  %v3689 = vsel %vm2911, %v3679, %v3688
  %v3690 = vsel %vm2913, %v3683, %v3689
  %v3691 = vsel %vm2915, %v3687, %v3690
  %v3692 = vpack.c.b16 %v3691, %v3691
  %v3694 = vsel %vm3500, %v3692, 0
  %v3697 = vsel %vm465, %v50, 0
  %3699 = vmatprep.subr.bf16.mxu0 0
  %3700 = vmatpush1.bf16.msra.mxu0 0
  %3701 = vmatprep.subr.bf16.mxu0 0
  %3702 = vmatpush1.bf16.msra.mxu0 0
  %3703 = vmatprep.subr.bf16.mxu0 0
  %3704 = vmatpush1.bf16.msra.mxu0 0
  %3705 = vmatprep.subr.bf16.mxu0 0
  %3706 = vmatpush1.bf16.msra.mxu0 0
  %3707 = vmatprep.subr.bf16.mxu0 0
  %3708 = vmatpush1.bf16.msra.mxu0 0
  %3709 = vmatprep.subr.bf16.mxu0 0
  %3710 = vmatpush1.bf16.msra.mxu0 0
  %3711 = vmatprep.subr.bf16.mxu0 0
  %3712 = vmatpush1.bf16.msra.mxu0 0
  %3713 = vmatprep.subr.bf16.mxu0 0
  %3714 = vmatpush1.bf16.msra.mxu0 %v3697
  %3715 = vmatprep.subr.bf16.mxu0 0
  %3716 = vmatpush2.bf16.msra.mxu0 0
  %3717 = vmatprep.subr.bf16.mxu0 0
  %3718 = vmatpush2.bf16.msra.mxu0 0
  %3719 = vmatprep.subr.bf16.mxu0 0
  %3720 = vmatpush2.bf16.msra.mxu0 0
  %3721 = vmatprep.subr.bf16.mxu0 0
  %3722 = vmatpush2.bf16.msra.mxu0 0
  %3723 = vmatprep.subr.bf16.mxu0 0
  %3724 = vmatpush2.bf16.msra.mxu0 0
  %3725 = vmatprep.subr.bf16.mxu0 0
  %3726 = vmatpush2.bf16.msra.mxu0 0
  %3727 = vmatprep.subr.bf16.mxu0 0
  %3728 = vmatpush2.bf16.msra.mxu0 0
  %3729 = vmatprep.subr.bf16.mxu0 0
  %3730 = vmatpush2.bf16.msra.mxu0 0
  %3731 = vmatprep.mubr.bf16.mxu0 0
  %3732 = vmatmul.mubr.bf16.gmra.mxu0 %v3694
  %v3733 = vpop.f32.mrf.mxu0
  %v3734 = vadd.f32 0.0, %v3733
  %v3735 = vpop.f32.mrf.mxu0
  %v3736 = vpop.f32.mrf.mxu0
  %v3737 = vpop.f32.mrf.mxu0
  %3738 = vdwg.mxu0
  %v3744 = vunpack.c.l.b16 %v3445
  %v3745 = vunpack.c.l.b16 %v3446
  %v3746 = vunpack.c.l.b16 %v3447
  %v3747 = vunpack.c.l.b16 %v3448
  %v3748 = vunpack.c.l.b16 %v3449
  %3749 = vset.pattern.permute.xlu0 0
  %3750 = vperm.xlu0 %3749, %v3744
  %v3751 = vpop.permute.xlu0 %3750
  %3752 = vset.pattern.permute.xlu0 0
  %3753 = vperm.xlu0 %3752, %v3745
  %v3754 = vpop.permute.xlu0 %3753
  %3755 = vset.pattern.permute.xlu0 0
  %3756 = vperm.xlu0 %3755, %v3746
  %v3757 = vpop.permute.xlu0 %3756
  %3758 = vset.pattern.permute.xlu0 0
  %3759 = vperm.xlu0 %3758, %v3747
  %v3760 = vpop.permute.xlu0 %3759
  %3761 = vset.pattern.permute.xlu0 0
  %3762 = vperm.xlu0 %3761, %v3748
  %v3763 = vpop.permute.xlu0 %3762
  %v3764 = vlaneseq
  %v3765 = vshrl.u32 %v3764, 7
  %v3766 = vsub.s32 %v2828, %v3765
  %v3767 = vrot.slane %v3751, %v3766
  %v3768 = vlaneseq
  %v3769 = vshrl.u32 %v3768, 7
  %v3770 = vsub.s32 %v2828, %v3769
  %v3771 = vrot.slane %v3754, %v3770
  %v3772 = vlaneseq
  %v3773 = vshrl.u32 %v3772, 7
  %v3774 = vsub.s32 %v2828, %v3773
  %v3775 = vrot.slane %v3757, %v3774
  %v3776 = vlaneseq
  %v3777 = vshrl.u32 %v3776, 7
  %v3778 = vsub.s32 %v2828, %v3777
  %v3779 = vrot.slane %v3760, %v3778
  %v3780 = vlaneseq
  %v3781 = vshrl.u32 %v3780, 7
  %v3782 = vsub.s32 %v2828, %v3781
  %v3783 = vrot.slane %v3763, %v3782
  %v3784 = vsel %vm2909, %v3771, %v3767
  %v3785 = vsel %vm2911, %v3775, %v3784
  %v3786 = vsel %vm2913, %v3779, %v3785
  %v3787 = vsel %vm2915, %v3783, %v3786
  %v3788 = vpack.c.b16 %v3787, %v3787
  %v3790 = vsel %vm3500, %v3788, 0
  %v3793 = vsel %vm465, %v51, 0
  %3795 = vmatprep.subr.bf16.mxu0 0
  %3796 = vmatpush1.bf16.msra.mxu0 0
  %3797 = vmatprep.subr.bf16.mxu0 0
  %3798 = vmatpush1.bf16.msra.mxu0 0
  %3799 = vmatprep.subr.bf16.mxu0 0
  %3800 = vmatpush1.bf16.msra.mxu0 0
  %3801 = vmatprep.subr.bf16.mxu0 0
  %3802 = vmatpush1.bf16.msra.mxu0 0
  %3803 = vmatprep.subr.bf16.mxu0 0
  %3804 = vmatpush1.bf16.msra.mxu0 0
  %3805 = vmatprep.subr.bf16.mxu0 0
  %3806 = vmatpush1.bf16.msra.mxu0 0
  %3807 = vmatprep.subr.bf16.mxu0 0
  %3808 = vmatpush1.bf16.msra.mxu0 0
  %3809 = vmatprep.subr.bf16.mxu0 0
  %3810 = vmatpush1.bf16.msra.mxu0 %v3793
  %3811 = vmatprep.subr.bf16.mxu0 0
  %3812 = vmatpush2.bf16.msra.mxu0 0
  %3813 = vmatprep.subr.bf16.mxu0 0
  %3814 = vmatpush2.bf16.msra.mxu0 0
  %3815 = vmatprep.subr.bf16.mxu0 0
  %3816 = vmatpush2.bf16.msra.mxu0 0
  %3817 = vmatprep.subr.bf16.mxu0 0
  %3818 = vmatpush2.bf16.msra.mxu0 0
  %3819 = vmatprep.subr.bf16.mxu0 0
  %3820 = vmatpush2.bf16.msra.mxu0 0
  %3821 = vmatprep.subr.bf16.mxu0 0
  %3822 = vmatpush2.bf16.msra.mxu0 0
  %3823 = vmatprep.subr.bf16.mxu0 0
  %3824 = vmatpush2.bf16.msra.mxu0 0
  %3825 = vmatprep.subr.bf16.mxu0 0
  %3826 = vmatpush2.bf16.msra.mxu0 0
  %3827 = vmatprep.mubr.bf16.mxu0 0
  %3828 = vmatmul.mubr.bf16.gmra.mxu0 %v3790
  %v3829 = vpop.f32.mrf.mxu0
  %v3830 = vadd.f32 0.0, %v3829
  %v3831 = vpop.f32.mrf.mxu0
  %v3832 = vpop.f32.mrf.mxu0
  %v3833 = vpop.f32.mrf.mxu0
  %3834 = vdwg.mxu0
  %v3835 = vld [vmem:[%s11] sm:$0xf]
  %v3836 = vld [vmem:[%s11 + $0x4] sm:$0xf]
  %v3837 = vld [vmem:[%s11 + $0x8] sm:$0xf]
  %v3838 = vld [vmem:[%s11 + $0xc] sm:$0xf]
  %v3843 = vcombine.high %v3542, %v3542
  %v3845 = vunpack.c.l.s4 1966171168
  %v3846 = vunpack.c.0.s8 %v3845
  %v3847 = vlaneseq
  %v3848 = vshrl.u32 %v3847, 7
  %v3849 = vsub.s32 %v3846, %v3848
  %v3850 = vrot.slane %v3542, %v3849
  %v3852 = vunpack.c.l.s4 1966171168
  %v3853 = vunpack.c.0.s8 %v3852
  %v3854 = vlaneseq
  %v3855 = vshrl.u32 %v3854, 7
  %v3856 = vsub.s32 %v3853, %v3855
  %v3857 = vrot.slane %v3843, %v3856
  %v3858 = vcombine.high %v3850, %v3850
  %v3860 = vunpack.c.l.s4 1966171168
  %v3861 = vunpack.c.0.s8 %v3860
  %v3862 = vlaneseq
  %v3863 = vshrl.u32 %v3862, 7
  %v3864 = vsub.s32 %v3861, %v3863
  %v3865 = vrot.slane %v3850, %v3864
  %v3867 = vunpack.c.l.s4 1966171168
  %v3868 = vunpack.c.0.s8 %v3867
  %v3869 = vlaneseq
  %v3870 = vshrl.u32 %v3869, 7
  %v3871 = vsub.s32 %v3868, %v3870
  %v3872 = vrot.slane %v3857, %v3871
  %v3874 = vunpack.c.l.s4 1966171168
  %v3875 = vunpack.c.0.s8 %v3874
  %v3876 = vlaneseq
  %v3877 = vshrl.u32 %v3876, 7
  %v3878 = vsub.s32 %v3875, %v3877
  %v3879 = vrot.slane %v3858, %v3878
  %v3880 = vcombine.high %v3865, %v3865
  %v3881 = vcombine.high %v3879, %v3879
  %v3882 = vcombine.high %v3638, %v3638
  %v3884 = vunpack.c.l.s4 1966171168
  %v3885 = vunpack.c.0.s8 %v3884
  %v3886 = vlaneseq
  %v3887 = vshrl.u32 %v3886, 7
  %v3888 = vsub.s32 %v3885, %v3887
  %v3889 = vrot.slane %v3638, %v3888
  %v3891 = vunpack.c.l.s4 1966171168
  %v3892 = vunpack.c.0.s8 %v3891
  %v3893 = vlaneseq
  %v3894 = vshrl.u32 %v3893, 7
  %v3895 = vsub.s32 %v3892, %v3894
  %v3896 = vrot.slane %v3882, %v3895
  %v3897 = vcombine.high %v3889, %v3889
  %v3899 = vunpack.c.l.s4 1966171168
  %v3900 = vunpack.c.0.s8 %v3899
  %v3901 = vlaneseq
  %v3902 = vshrl.u32 %v3901, 7
  %v3903 = vsub.s32 %v3900, %v3902
  %v3904 = vrot.slane %v3889, %v3903
  %v3906 = vunpack.c.l.s4 1966171168
  %v3907 = vunpack.c.0.s8 %v3906
  %v3908 = vlaneseq
  %v3909 = vshrl.u32 %v3908, 7
  %v3910 = vsub.s32 %v3907, %v3909
  %v3911 = vrot.slane %v3896, %v3910
  %v3913 = vunpack.c.l.s4 1966171168
  %v3914 = vunpack.c.0.s8 %v3913
  %v3915 = vlaneseq
  %v3916 = vshrl.u32 %v3915, 7
  %v3917 = vsub.s32 %v3914, %v3916
  %v3918 = vrot.slane %v3897, %v3917
  %v3919 = vcombine.high %v3904, %v3904
  %v3920 = vcombine.high %v3918, %v3918
  %v3921 = vcombine.high %v3734, %v3734
  %v3923 = vunpack.c.l.s4 1966171168
  %v3924 = vunpack.c.0.s8 %v3923
  %v3925 = vlaneseq
  %v3926 = vshrl.u32 %v3925, 7
  %v3927 = vsub.s32 %v3924, %v3926
  %v3928 = vrot.slane %v3734, %v3927
  %v3930 = vunpack.c.l.s4 1966171168
  %v3931 = vunpack.c.0.s8 %v3930
  %v3932 = vlaneseq
  %v3933 = vshrl.u32 %v3932, 7
  %v3934 = vsub.s32 %v3931, %v3933
  %v3935 = vrot.slane %v3921, %v3934
  %v3936 = vcombine.high %v3928, %v3928
  %v3938 = vunpack.c.l.s4 1966171168
  %v3939 = vunpack.c.0.s8 %v3938
  %v3940 = vlaneseq
  %v3941 = vshrl.u32 %v3940, 7
  %v3942 = vsub.s32 %v3939, %v3941
  %v3943 = vrot.slane %v3928, %v3942
  %v3945 = vunpack.c.l.s4 1966171168
  %v3946 = vunpack.c.0.s8 %v3945
  %v3947 = vlaneseq
  %v3948 = vshrl.u32 %v3947, 7
  %v3949 = vsub.s32 %v3946, %v3948
  %v3950 = vrot.slane %v3935, %v3949
  %v3952 = vunpack.c.l.s4 1966171168
  %v3953 = vunpack.c.0.s8 %v3952
  %v3954 = vlaneseq
  %v3955 = vshrl.u32 %v3954, 7
  %v3956 = vsub.s32 %v3953, %v3955
  %v3957 = vrot.slane %v3936, %v3956
  %v3958 = vcombine.high %v3943, %v3943
  %v3959 = vcombine.high %v3957, %v3957
  %v3960 = vcombine.high %v3830, %v3830
  %v3962 = vunpack.c.l.s4 1966171168
  %v3963 = vunpack.c.0.s8 %v3962
  %v3964 = vlaneseq
  %v3965 = vshrl.u32 %v3964, 7
  %v3966 = vsub.s32 %v3963, %v3965
  %v3967 = vrot.slane %v3830, %v3966
  %v3969 = vunpack.c.l.s4 1966171168
  %v3970 = vunpack.c.0.s8 %v3969
  %v3971 = vlaneseq
  %v3972 = vshrl.u32 %v3971, 7
  %v3973 = vsub.s32 %v3970, %v3972
  %v3974 = vrot.slane %v3960, %v3973
  %v3975 = vcombine.high %v3967, %v3967
  %v3977 = vunpack.c.l.s4 1966171168
  %v3978 = vunpack.c.0.s8 %v3977
  %v3979 = vlaneseq
  %v3980 = vshrl.u32 %v3979, 7
  %v3981 = vsub.s32 %v3978, %v3980
  %v3982 = vrot.slane %v3967, %v3981
  %v3984 = vunpack.c.l.s4 1966171168
  %v3985 = vunpack.c.0.s8 %v3984
  %v3986 = vlaneseq
  %v3987 = vshrl.u32 %v3986, 7
  %v3988 = vsub.s32 %v3985, %v3987
  %v3989 = vrot.slane %v3974, %v3988
  %v3991 = vunpack.c.l.s4 1966171168
  %v3992 = vunpack.c.0.s8 %v3991
  %v3993 = vlaneseq
  %v3994 = vshrl.u32 %v3993, 7
  %v3995 = vsub.s32 %v3992, %v3994
  %v3996 = vrot.slane %v3975, %v3995
  %v3997 = vcombine.high %v3982, %v3982
  %v3998 = vcombine.high %v3996, %v3996
  %v3999 = vcombine.low %v3865, %v3879
  %v4000 = vcombine.low %v3880, %v3881
  %v4001 = vcombine.low %v3872, %v3904
  %v4002 = vcombine.low %v3918, %v3919
  %v4004 = vunpack.c.l.s4 1966171168
  %v4005 = vunpack.c.0.s8 %v4004
  %v4006 = vlaneseq
  %v4007 = vshrl.u32 %v4006, 7
  %v4008 = vsub.s32 %v4005, %v4007
  %v4009 = vrot.slane %v3999, %v4008
  %v4011 = vunpack.c.l.s4 1966171168
  %v4012 = vunpack.c.0.s8 %v4011
  %v4013 = vlaneseq
  %v4014 = vshrl.u32 %v4013, 7
  %v4015 = vsub.s32 %v4012, %v4014
  %v4016 = vrot.slane %v4000, %v4015
  %v4018 = vunpack.c.l.s4 1966171168
  %v4019 = vunpack.c.0.s8 %v4018
  %v4020 = vlaneseq
  %v4021 = vshrl.u32 %v4020, 7
  %v4022 = vsub.s32 %v4019, %v4021
  %v4023 = vrot.slane %v4001, %v4022
  %v4025 = vunpack.c.l.s4 1966171168
  %v4026 = vunpack.c.0.s8 %v4025
  %v4027 = vlaneseq
  %v4028 = vshrl.u32 %v4027, 7
  %v4029 = vsub.s32 %v4026, %v4028
  %v4030 = vrot.slane %v4002, %v4029
  %v4031 = vcombine.low %v4009, %v4016
  %v4032 = vcombine.low %v4023, %v4030
  %v4034 = vunpack.c.l.s4 1966171168
  %v4035 = vunpack.c.0.s8 %v4034
  %v4036 = vlaneseq
  %v4037 = vshrl.u32 %v4036, 7
  %v4038 = vsub.s32 %v4035, %v4037
  %v4039 = vrot.slane %v4031, %v4038
  %v4041 = vunpack.c.l.s4 1966171168
  %v4042 = vunpack.c.0.s8 %v4041
  %v4043 = vlaneseq
  %v4044 = vshrl.u32 %v4043, 7
  %v4045 = vsub.s32 %v4042, %v4044
  %v4046 = vrot.slane %v4032, %v4045
  %v4047 = vcombine.low %v4039, %v4046
  %v4048 = vcombine.low %v3920, %v3911
  %v4049 = vcombine.low %v3943, %v3957
  %v4050 = vcombine.low %v3958, %v3959
  %v4051 = vcombine.low %v3950, %v3982
  %v4053 = vunpack.c.l.s4 1966171168
  %v4054 = vunpack.c.0.s8 %v4053
  %v4055 = vlaneseq
  %v4056 = vshrl.u32 %v4055, 7
  %v4057 = vsub.s32 %v4054, %v4056
  %v4058 = vrot.slane %v4048, %v4057
  %v4060 = vunpack.c.l.s4 1966171168
  %v4061 = vunpack.c.0.s8 %v4060
  %v4062 = vlaneseq
  %v4063 = vshrl.u32 %v4062, 7
  %v4064 = vsub.s32 %v4061, %v4063
  %v4065 = vrot.slane %v4049, %v4064
  %v4067 = vunpack.c.l.s4 1966171168
  %v4068 = vunpack.c.0.s8 %v4067
  %v4069 = vlaneseq
  %v4070 = vshrl.u32 %v4069, 7
  %v4071 = vsub.s32 %v4068, %v4070
  %v4072 = vrot.slane %v4050, %v4071
  %v4074 = vunpack.c.l.s4 1966171168
  %v4075 = vunpack.c.0.s8 %v4074
  %v4076 = vlaneseq
  %v4077 = vshrl.u32 %v4076, 7
  %v4078 = vsub.s32 %v4075, %v4077
  %v4079 = vrot.slane %v4051, %v4078
  %v4080 = vcombine.low %v4058, %v4065
  %v4081 = vcombine.low %v4072, %v4079
  %v4083 = vunpack.c.l.s4 1966171168
  %v4084 = vunpack.c.0.s8 %v4083
  %v4085 = vlaneseq
  %v4086 = vshrl.u32 %v4085, 7
  %v4087 = vsub.s32 %v4084, %v4086
  %v4088 = vrot.slane %v4080, %v4087
  %v4090 = vunpack.c.l.s4 1966171168
  %v4091 = vunpack.c.0.s8 %v4090
  %v4092 = vlaneseq
  %v4093 = vshrl.u32 %v4092, 7
  %v4094 = vsub.s32 %v4091, %v4093
  %v4095 = vrot.slane %v4081, %v4094
  %v4096 = vcombine.low %v4088, %v4095
  %v4097 = vcombine.low %v3996, %v3997
  %v4098 = vcombine.low %v3998, %v3989
  %v4100 = vunpack.c.l.s4 1966171168
  %v4101 = vunpack.c.0.s8 %v4100
  %v4102 = vlaneseq
  %v4103 = vshrl.u32 %v4102, 7
  %v4104 = vsub.s32 %v4101, %v4103
  %v4105 = vrot.slane %v4097, %v4104
  %v4107 = vunpack.c.l.s4 1966171168
  %v4108 = vunpack.c.0.s8 %v4107
  %v4109 = vlaneseq
  %v4110 = vshrl.u32 %v4109, 7
  %v4111 = vsub.s32 %v4108, %v4110
  %v4112 = vrot.slane %v4098, %v4111
  %v4113 = vcombine.low %v4105, %v4112
  %v4115 = vunpack.c.l.s4 1966171168
  %v4116 = vunpack.c.0.s8 %v4115
  %v4117 = vlaneseq
  %v4118 = vshrl.u32 %v4117, 7
  %v4119 = vsub.s32 %v4116, %v4118
  %v4120 = vrot.slane %v4113, %v4119
  %v4124 = vpack.c.bf16 %v4096, %v4047
  %v4125 = vpack.c.bf16 %v4120, %v4120
  %v4126 = vld [vmem:[%s12] sm:$0xf]
  %v4127 = vld [vmem:[%s12 + $0x4] sm:$0xf]
  %v4128 = vld [vmem:[%s12 + $0x8] sm:$0xf]
  %v4129 = vld [vmem:[%s12 + $0xc] sm:$0xf]
  %v4134 = vunpack.c.l.b16 %v4126
  %v4135 = vunpack.c.l.b16 %v4127
  %v4136 = vunpack.c.l.b16 %v4128
  %v4137 = vunpack.c.l.b16 %v4129
  %v4138 = vpack.c.b16 %v4135, %v4134
  %v4139 = vpack.c.b16 %v4137, %v4136
  %v4143 = vsel %vm200, %v4124, 0
  %v4146 = vsel %vm200, %v4125, 0
  %4148 = vmatprep.subr.bf16.mxu0 0
  %4149 = vmatpush1.bf16.msra.mxu0 0
  %4150 = vmatprep.subr.bf16.mxu0 0
  %4151 = vmatpush1.bf16.msra.mxu0 0
  %4152 = vmatprep.subr.bf16.mxu0 0
  %4153 = vmatpush1.bf16.msra.mxu0 0
  %4154 = vmatprep.subr.bf16.mxu0 0
  %4155 = vmatpush1.bf16.msra.mxu0 0
  %4156 = vmatprep.subr.bf16.mxu0 0
  %4157 = vmatpush1.bf16.msra.mxu0 0
  %4158 = vmatprep.subr.bf16.mxu0 0
  %4159 = vmatpush1.bf16.msra.mxu0 0
  %4160 = vmatprep.subr.bf16.mxu0 0
  %4161 = vmatpush1.bf16.msra.mxu0 %v4139
  %4162 = vmatprep.subr.bf16.mxu0 0
  %4163 = vmatpush1.bf16.msra.mxu0 %v4138
  %4164 = vmatprep.subr.bf16.mxu0 0
  %4165 = vmatpush2.bf16.msra.mxu0 0
  %4166 = vmatprep.subr.bf16.mxu0 0
  %4167 = vmatpush2.bf16.msra.mxu0 0
  %4168 = vmatprep.subr.bf16.mxu0 0
  %4169 = vmatpush2.bf16.msra.mxu0 0
  %4170 = vmatprep.subr.bf16.mxu0 0
  %4171 = vmatpush2.bf16.msra.mxu0 0
  %4172 = vmatprep.subr.bf16.mxu0 0
  %4173 = vmatpush2.bf16.msra.mxu0 0
  %4174 = vmatprep.subr.bf16.mxu0 0
  %4175 = vmatpush2.bf16.msra.mxu0 0
  %4176 = vmatprep.subr.bf16.mxu0 0
  %4177 = vmatpush2.bf16.msra.mxu0 0
  %4178 = vmatprep.subr.bf16.mxu0 0
  %4179 = vmatpush2.bf16.msra.mxu0 0
  %4180 = vmatprep.mubr.bf16.mxu0 0
  %4181 = vmatmul.mubr.bf16.gmra.mxu0 %v4143
  %v4182 = vpop.f32.mrf.mxu0
  %v4183 = vadd.f32 0.0, %v4182
  %v4184 = vpop.f32.mrf.mxu0
  %v4185 = vpop.f32.mrf.mxu0
  %v4186 = vadd.f32 0.0, %v4185
  %v4187 = vpop.f32.mrf.mxu0
  %4188 = vmatprep.mubr.bf16.mxu0 0
  %4189 = vmatmul.mubr.bf16.gmra.mxu0 %v4146
  %v4190 = vpop.f32.mrf.mxu0
  %v4191 = vadd.f32 0.0, %v4190
  %v4192 = vpop.f32.mrf.mxu0
  %v4193 = vpop.f32.mrf.mxu0
  %v4194 = vpop.f32.mrf.mxu0
  %4195 = vdwg.mxu0
  %v4200 = vunpack.c.l.b16 %v3835
  %v4201 = vunpack.c.l.b16 %v3836
  %v4202 = vunpack.c.l.b16 %v3837
  %v4203 = vunpack.c.l.b16 %v3838
  %v4204 = vpack.c.b16 %v4201, %v4200
  %v4205 = vpack.c.b16 %v4203, %v4202
  %4208 = vmatprep.subr.bf16.mxu0 0
  %4209 = vmatpush1.bf16.msra.mxu0 0
  %4210 = vmatprep.subr.bf16.mxu0 0
  %4211 = vmatpush1.bf16.msra.mxu0 0
  %4212 = vmatprep.subr.bf16.mxu0 0
  %4213 = vmatpush1.bf16.msra.mxu0 0
  %4214 = vmatprep.subr.bf16.mxu0 0
  %4215 = vmatpush1.bf16.msra.mxu0 0
  %4216 = vmatprep.subr.bf16.mxu0 0
  %4217 = vmatpush1.bf16.msra.mxu0 0
  %4218 = vmatprep.subr.bf16.mxu0 0
  %4219 = vmatpush1.bf16.msra.mxu0 0
  %4220 = vmatprep.subr.bf16.mxu0 0
  %4221 = vmatpush1.bf16.msra.mxu0 %v4205
  %4222 = vmatprep.subr.bf16.mxu0 0
  %4223 = vmatpush1.bf16.msra.mxu0 %v4204
  %4224 = vmatprep.subr.bf16.mxu0 0
  %4225 = vmatpush2.bf16.msra.mxu0 0
  %4226 = vmatprep.subr.bf16.mxu0 0
  %4227 = vmatpush2.bf16.msra.mxu0 0
  %4228 = vmatprep.subr.bf16.mxu0 0
  %4229 = vmatpush2.bf16.msra.mxu0 0
  %4230 = vmatprep.subr.bf16.mxu0 0
  %4231 = vmatpush2.bf16.msra.mxu0 0
  %4232 = vmatprep.subr.bf16.mxu0 0
  %4233 = vmatpush2.bf16.msra.mxu0 0
  %4234 = vmatprep.subr.bf16.mxu0 0
  %4235 = vmatpush2.bf16.msra.mxu0 0
  %4236 = vmatprep.subr.bf16.mxu0 0
  %4237 = vmatpush2.bf16.msra.mxu0 0
  %4238 = vmatprep.subr.bf16.mxu0 0
  %4239 = vmatpush2.bf16.msra.mxu0 0
  %4240 = vmatprep.mubr.bf16.mxu0 0
  %4241 = vmatmul.mubr.bf16.gmra.mxu0 %v732
  %v4242 = vpop.f32.mrf.mxu0
  %v4243 = vadd.f32 %v4183, %v4242
  %v4244 = vpop.f32.mrf.mxu0
  %v4245 = vpop.f32.mrf.mxu0
  %v4246 = vadd.f32 %v4186, %v4245
  %v4247 = vpop.f32.mrf.mxu0
  %4248 = vmatprep.mubr.bf16.mxu0 0
  %4249 = vmatmul.mubr.bf16.gmra.mxu0 %v735
  %v4250 = vpop.f32.mrf.mxu0
  %v4251 = vadd.f32 %v4191, %v4250
  %v4252 = vpop.f32.mrf.mxu0
  %v4253 = vpop.f32.mrf.mxu0
  %v4254 = vpop.f32.mrf.mxu0
  %4255 = vdwg.mxu0
  %v4256 = vld [vmem:[%s13] sm:$0x1]
  %v4258 = vlaneseq
  %v4259 = vshrl.u32 %v4258, 7
  %v4260 = vsub.s32 0, %v4259
  %v4261 = vrot.slane %v4256, %v4260
  %v4263 = vadd.f32 %v4243, %v4261
  %v4264 = vadd.f32 %v4246, %v4261
  %v4265 = vadd.f32 %v4251, %v4261
  %4269 = vrot.lane.b32.xlu0 %v588, 16
  %v4270 = vpop.permute.xlu0 %4269
  %4271 = vrot.lane.b32.xlu0 %v589, 16
  %v4272 = vpop.permute.xlu0 %4271
  %4273 = vrot.lane.b32.xlu0 %v590, 16
  %v4274 = vpop.permute.xlu0 %4273
  %vm4278 = vcmask 130048
  %v4279 = vsel %vm4278, %v4263, %v4270
  %v4280 = vsel %vm4278, %v4264, %v4272
  %v4281 = vsel %vm4278, %v4265, %v4274
  %vm4282 = vcmask 392192
  %v4283 = vsel %vm4282, %v4279, 0.0
  %v4284 = vsel %vm4282, %v4280, 0.0
  %v4285 = vsel %vm4282, %v4281, 0.0
  %4286 = vst [vmem:[%s14] sm:$0xff] %v4283
  %4287 = vst [vmem:[%s14 + $0x8] sm:$0xff] %v4284
  %4288 = vst [vmem:[%s14 + $0x10] sm:$0xf] %v4285
  // Predicated region
  $region58: #{temporal_attention_forward.1} parent=0 // pred_check
    _
  $region59: #{temporal_attention_forward.1} parent=0 // pred_check_branch
    %4290 = sbr.rel (0) target = $region61
  $region60: #{temporal_attention_forward.1} parent=0 // pred_region
    _
  $region61: #{temporal_attention_forward.1} parent=0 // pred_fallthru
    _
  // Predicated region
  $region62: #{temporal_attention_forward.1} parent=0 // pred_check
    _
  $region63: #{temporal_attention_forward.1} parent=0 // pred_check_branch
    %4292 = sbr.rel (0) target = $region65
  $region64: #{temporal_attention_forward.1} parent=0 // pred_region
    _
  $region65: #{temporal_attention_forward.1} parent=0 // pred_fallthru
    _

</llo_original>
